<compile_context>
chip_gen: v7x
topology: tpu7x:2x2x1
jax: 0.10.0
libtpu: 0.0.40
codegen_flags: <defaults>
</compile_context>

<pallas_src>
import functools

import jax
import jax.numpy as jnp
from jax.experimental import pallas as pl
from jax.experimental.pallas import tpu as pltpu

_LN_EPS = 1e-5
_HEADNORM_EPS = 1e-5
_CELL_EPS = 1e-6
_WEIGHTS_PER_BLOCK = 10


def _vmem_limit_bytes():
    try:
        cap = pltpu.get_tpu_info().vmem_capacity_bytes
        return min(int(cap * 0.75), 100 * 1024 * 1024)
    except Exception:
        return 32 * 1024 * 1024


def _layernorm(x, w, eps=_LN_EPS):
    mu = jnp.mean(x, axis=-1, keepdims=True)
    var = jnp.mean((x - mu) ** 2, axis=-1, keepdims=True)
    return (x - mu) * jax.lax.rsqrt(var + eps) * w


def _silu(x):
    return x * jax.nn.sigmoid(x)


# ---------------------------------------------------------------------------
# Fully fused kernel: [mLSTM block] x2 -> post-LayerNorm -> final Linear.
# One grid step == one batch row.
# ---------------------------------------------------------------------------
def _fused_kernel(x_ref, *refs, num_heads):
    o_ref = refs[-1]
    wrefs = refs[:-1]
    n_blocks = (len(wrefs) - 3) // _WEIGHTS_PER_BLOCK
    S = x_ref.shape[1]
    NH = num_heads

    x = x_ref[0]                                            # (S, D) f32

    # ---- constants shared by both blocks -----------------------------------
    row1 = jax.lax.broadcasted_iota(jnp.int32, (S, 1), 0)   # sublane index
    ri = jax.lax.broadcasted_iota(jnp.int32, (S, S), 0)
    ci = jax.lax.broadcasted_iota(jnp.int32, (S, S), 1)
    causal = ri >= ci
    ones_col = jnp.ones((S, 1), jnp.float32)

    def mlstm_block(x, ln_w, up_w, conv_w, conv_b, cproj_w, xproj_w, gate_b,
                    outnorm_w, skip_w, down_w):
        inner = down_w.shape[0]
        DH = inner // NH
        K = conv_w.shape[0]

        # ---- LayerNorm (weight-only) + proj_up (bf16 MXU, f32 acc) ---------
        xn = _layernorm(x, ln_w)
        xi = jnp.dot(xn.astype(jnp.bfloat16), up_w,
                     preferred_element_type=jnp.float32)    # (S, 2*inner)
        x_m = xi[:, :inner]
        z = xi[:, inner:]

        # ---- causal depthwise conv (K taps, sublane rolls) + SiLU ----------
        conv = x_m * conv_w[K - 1:K, :]                     # tap at shift 0
        for j in range(K - 1):
            s = K - 1 - j
            shifted = jnp.where(row1 >= s, pltpu.roll(x_m, shift=s, axis=0), 0.0)
            conv = conv + shifted * conv_w[j:j + 1, :]
        conv_act = _silu(conv + conv_b)                     # (S, inner)

        # ---- fused projections: q | k*(1/sqrt(DH)) | gates(conv) from conv,
        # ----                    v | gates(x)        from x_m ---------------
        cp = jnp.dot(conv_act.astype(jnp.bfloat16), cproj_w,
                     preferred_element_type=jnp.float32)    # (S, 2*inner+2NH)
        xp = jnp.dot(x_m.astype(jnp.bfloat16), xproj_w,
                     preferred_element_type=jnp.float32)    # (S, inner+2NH)
        q = cp[:, :inner]
        k = cp[:, inner:2 * inner]                          # already / sqrt(DH)
        v = xp[:, :inner]
        gates = cp[:, 2 * inner:] + xp[:, inner:] + gate_b  # (S, 2*NH) f32
        ig_all = gates[:, :NH]
        fg_all = gates[:, NH:]

        # ---- inclusive cumsum of log-forget gates (Hillis-Steele, f32) -----
        csum = jax.nn.log_sigmoid(fg_all)                   # (S, NH)
        shift = 1
        while shift < S:
            csum = csum + jnp.where(row1 >= shift,
                                    pltpu.roll(csum, shift=shift, axis=0), 0.0)
            shift *= 2

        # hoisted row-form gates (2 small transposes instead of 2*NH reshapes)
        csum_T = csum.T                                     # (NH, S)
        ig_T = ig_all.T                                     # (NH, S)

        # ---- stabilized parallel mLSTM cell, heads as column slices --------
        heads = []
        for h in range(NH):
            lo = h * DH
            qh = q[:, lo:lo + DH].astype(jnp.bfloat16)
            kh = k[:, lo:lo + DH].astype(jnp.bfloat16)
            vh = v[:, lo:lo + DH]

            lfm = jnp.where(causal, csum[:, h:h + 1] - csum_T[h:h + 1, :],
                            -jnp.inf)
            log_D = lfm + ig_T[h:h + 1, :]                  # (S, S) f32
            max_log_D = jnp.max(log_D, axis=-1, keepdims=True)
            Dm = jnp.exp(log_D - max_log_D)

            qkT = jax.lax.dot_general(qh, kh, (((1,), (1,)), ((), ())),
                                      preferred_element_type=jnp.float32)
            C = qkT * Dm                                    # (S, S) f32

            # ones column folded into V -> row-sum comes out of the MXU
            vh_ext = jnp.concatenate([vh, ones_col], axis=1).astype(jnp.bfloat16)
            pv = jnp.dot(C.astype(jnp.bfloat16), vh_ext,
                         preferred_element_type=jnp.float32)  # (S, DH+1)
            row_sum = pv[:, DH:DH + 1]
            normalizer = jnp.maximum(jnp.abs(row_sum), jnp.exp(-max_log_D))
            r = pl.reciprocal(normalizer + _CELL_EPS, approx=True)
            hh = pv[:, :DH] * r                             # (S, DH)

            # MultiHeadLayerNorm: group-norm per head over DH
            hm = jnp.mean(hh, axis=-1, keepdims=True)
            hv = jnp.mean((hh - hm) ** 2, axis=-1, keepdims=True)
            heads.append((hh - hm) * jax.lax.rsqrt(hv + _HEADNORM_EPS))

        hn_all = jnp.concatenate(heads, axis=-1)            # (S, inner)

        # ---- outnorm weight, learnable skip, silu(z) gating, proj_down -----
        h_state = (hn_all * outnorm_w + skip_w * conv_act) * _silu(z)
        y = jnp.dot(h_state.astype(jnp.bfloat16), down_w,
                    preferred_element_type=jnp.float32)     # (S, D)
        return x + y                                        # residual (dropout=id)

    for blk in range(n_blocks):
        w = [wrefs[blk * _WEIGHTS_PER_BLOCK + i][...]
             for i in range(_WEIGHTS_PER_BLOCK)]
        x = mlstm_block(x, *w)

    # ---- post-blocks LayerNorm + final Linear -------------------------------
    post_w, final_w, final_b = wrefs[-3], wrefs[-2], wrefs[-1]
    xn = _layernorm(x, post_w[...])
    y = jnp.dot(xn.astype(jnp.bfloat16), final_w[...],
                preferred_element_type=jnp.float32) + final_b[...]
    o_ref[0] = y.astype(o_ref.dtype)


_BLOCK_KEYS = ("ln_w", "up_w", "conv_w", "conv_b", "cproj_w", "xproj_w",
               "gate_b", "outnorm_w", "skip_w", "down_w")


def double_xlstm_down(x, params, *, num_heads):
    B, S, D = x.shape
    F = params["final_w"].shape[1]

    flat = []
    for blk in params["blocks"]:
        flat.extend(blk[k] for k in _BLOCK_KEYS)
    flat += [params["post_norm_w"], params["final_w"], params["final_b"]]

    def w_spec(a):                       # all packed weights are 2-D, full-block
        return pl.BlockSpec(a.shape, lambda b: (0, 0))

    kernel = functools.partial(_fused_kernel, num_heads=num_heads)
    return pl.pallas_call(
        kernel,
        out_shape=jax.ShapeDtypeStruct((B, S, F), jnp.float32),
        grid=(B,),
        in_specs=[pl.BlockSpec((1, S, D), lambda b: (b, 0, 0))]
                 + [w_spec(a) for a in flat],
        out_specs=pl.BlockSpec((1, S, F), lambda b: (b, 0, 0)),
        compiler_params=pltpu.CompilerParams(
            dimension_semantics=("parallel",),
            vmem_limit_bytes=_vmem_limit_bytes()),
    )(x, *flat)


# ---------------------------------------------------------------------------
# Deterministic parameter initialization + packing into the fused-kernel layout
# ---------------------------------------------------------------------------
def block_diag_weight(key, dim, blocksize, scale):
    nb = dim // blocksize
    blocks = jax.random.normal(key, (nb, blocksize, blocksize), jnp.float32) * scale
    w = jnp.zeros((dim, dim), jnp.float32)
    for i in range(nb):
        w = w.at[i * blocksize:(i + 1) * blocksize,
                 i * blocksize:(i + 1) * blocksize].set(blocks[i])
    return w


def init_params(key, emb_size, final_size, num_heads=4, proj_factor=2.0,
                conv_kernel=4, qkv_blocksize=4, num_blocks=2):
    inner = int(proj_factor * emb_size)
    keys = iter(jax.random.split(key, 128))

    def nrm(shape, scale=0.02):
        return jax.random.normal(next(keys), shape, jnp.float32) * scale

    blocks = []
    for _ in range(num_blocks):
        blocks.append(dict(
            ln_w=jnp.ones((emb_size,), jnp.float32),
            proj_up_w=nrm((emb_size, 2 * inner)),
            conv_w=nrm((inner, conv_kernel), 0.1),
            conv_b=jnp.zeros((inner,), jnp.float32),
            q_w=block_diag_weight(next(keys), inner, qkv_blocksize, 0.05),
            k_w=block_diag_weight(next(keys), inner, qkv_blocksize, 0.05),
            v_w=block_diag_weight(next(keys), inner, qkv_blocksize, 0.05),
            ig_w=nrm((3 * inner, num_heads), 0.01),
            ig_b=nrm((num_heads,), 0.1),
            fg_w=jnp.zeros((3 * inner, num_heads), jnp.float32),
            fg_b=jnp.linspace(3.0, 6.0, num_heads, dtype=jnp.float32),
            outnorm_w=jnp.ones((inner,), jnp.float32),
            learnable_skip=jnp.ones((inner,), jnp.float32),
            proj_down_w=nrm((inner, emb_size)),
        ))
    return dict(
        blocks=blocks,
        post_norm_w=jnp.ones((emb_size,), jnp.float32),
        final_w=nrm((emb_size, final_size)),
        final_b=jnp.zeros((final_size,), jnp.float32),
    )


def pack_block_params(p, num_heads):
    """Pack raw block params into the fused-kernel layout.

    Folds (in f32, cast to bf16 once):
      * the i/f gate projections into the conv-side and x-side matmuls,
      * 1/sqrt(DH) into the k columns.
    """
    inner = p["v_w"].shape[0]
    DH = inner // num_heads
    inv_sqrt_dh = 1.0 / (DH ** 0.5)

    gate_w = jnp.concatenate([p["ig_w"], p["fg_w"]], axis=1)     # (3*inner, 2NH)
    gq = gate_w[:inner]
    gk = gate_w[inner:2 * inner]
    gv = gate_w[2 * inner:]

    cproj = jnp.concatenate(
        [p["q_w"], p["k_w"] * inv_sqrt_dh, p["q_w"] @ gq + p["k_w"] @ gk],
        axis=1)                                                  # (inner, 2*inner+2NH)
    xproj = jnp.concatenate([p["v_w"], p["v_w"] @ gv], axis=1)   # (inner, inner+2NH)

    return dict(
        ln_w=p["ln_w"].reshape(1, -1),
        up_w=p["proj_up_w"].astype(jnp.bfloat16),
        conv_w=p["conv_w"].T,                                    # (K, inner) f32
        conv_b=p["conv_b"].reshape(1, -1),
        cproj_w=cproj.astype(jnp.bfloat16),
        xproj_w=xproj.astype(jnp.bfloat16),
        gate_b=jnp.concatenate([p["ig_b"], p["fg_b"]]).reshape(1, -1),
        outnorm_w=p["outnorm_w"].reshape(1, -1),
        skip_w=p["learnable_skip"].reshape(1, -1),
        down_w=p["proj_down_w"].astype(jnp.bfloat16),
    )


def pack_params(raw, num_heads):
    return dict(
        blocks=[pack_block_params(b, num_heads) for b in raw["blocks"]],
        post_norm_w=raw["post_norm_w"].reshape(1, -1),
        final_w=raw["final_w"].astype(jnp.bfloat16),
        final_b=raw["final_b"].reshape(1, -1),
    )


# ---------------------------------------------------------------------------
if __name__ == "__main__":
    B, S, D = 2, 8, 32          # batch, seq, emb_size
    FINAL = 16                  # final_size
    NUM_HEADS = 4

    key = jax.random.PRNGKey(0)
    k_params, k_x = jax.random.split(key)
    raw_params = init_params(k_params, D, FINAL, num_heads=NUM_HEADS)
    params = pack_params(raw_params, NUM_HEADS)
    x = jax.random.normal(k_x, (B, S, D), jnp.float32)

    fwd = jax.jit(functools.partial(double_xlstm_down, num_heads=NUM_HEADS))
    out = jax.block_until_ready(fwd(x, params))
    assert out.shape == (B, S, FINAL), out.shape
    assert bool(jnp.all(jnp.isfinite(out)))
    print("KERNEL_OK")
</pallas_src>

<mosaic_0001>
module attributes {stable_mosaic.version = 11 : i64} {
  func.func @_fused_kernel(%arg0: i32, %arg1: memref<1x8x32xf32, #tpu.memory_space<vmem>>, %arg2: memref<1x32xf32, #tpu.memory_space<vmem>>, %arg3: memref<32x128xbf16, #tpu.memory_space<vmem>>, %arg4: memref<4x64xf32, #tpu.memory_space<vmem>>, %arg5: memref<1x64xf32, #tpu.memory_space<vmem>>, %arg6: memref<64x136xbf16, #tpu.memory_space<vmem>>, %arg7: memref<64x72xbf16, #tpu.memory_space<vmem>>, %arg8: memref<1x8xf32, #tpu.memory_space<vmem>>, %arg9: memref<1x64xf32, #tpu.memory_space<vmem>>, %arg10: memref<1x64xf32, #tpu.memory_space<vmem>>, %arg11: memref<64x32xbf16, #tpu.memory_space<vmem>>, %arg12: memref<1x32xf32, #tpu.memory_space<vmem>>, %arg13: memref<32x128xbf16, #tpu.memory_space<vmem>>, %arg14: memref<4x64xf32, #tpu.memory_space<vmem>>, %arg15: memref<1x64xf32, #tpu.memory_space<vmem>>, %arg16: memref<64x136xbf16, #tpu.memory_space<vmem>>, %arg17: memref<64x72xbf16, #tpu.memory_space<vmem>>, %arg18: memref<1x8xf32, #tpu.memory_space<vmem>>, %arg19: memref<1x64xf32, #tpu.memory_space<vmem>>, %arg20: memref<1x64xf32, #tpu.memory_space<vmem>>, %arg21: memref<64x32xbf16, #tpu.memory_space<vmem>>, %arg22: memref<1x32xf32, #tpu.memory_space<vmem>>, %arg23: memref<32x16xbf16, #tpu.memory_space<vmem>>, %arg24: memref<1x16xf32, #tpu.memory_space<vmem>>, %arg25: memref<1x8x16xf32, #tpu.memory_space<vmem>>) attributes {dimension_semantics = [#tpu.dimension_semantics<parallel>], iteration_bounds = array<i64: 2>, scalar_prefetch = 0 : i64, scratch_operands = 0 : i64, tpu.core_type = #tpu.core_type<tc>, window_params = [{transform_indices = @transform_0, window_bounds = array<i64: 1, 8, 32>}, {pipeline_mode = #tpu.pipeline_mode<synchronous>, transform_indices = @transform_1, window_bounds = array<i64: 1, 32>}, {pipeline_mode = #tpu.pipeline_mode<synchronous>, transform_indices = @transform_2, window_bounds = array<i64: 32, 128>}, {pipeline_mode = #tpu.pipeline_mode<synchronous>, transform_indices = @transform_3, window_bounds = array<i64: 4, 64>}, {pipeline_mode = #tpu.pipeline_mode<synchronous>, transform_indices = @transform_4, window_bounds = array<i64: 1, 64>}, {pipeline_mode = #tpu.pipeline_mode<synchronous>, transform_indices = @transform_5, window_bounds = array<i64: 64, 136>}, {pipeline_mode = #tpu.pipeline_mode<synchronous>, transform_indices = @transform_6, window_bounds = array<i64: 64, 72>}, {pipeline_mode = #tpu.pipeline_mode<synchronous>, transform_indices = @transform_7, window_bounds = array<i64: 1, 8>}, {pipeline_mode = #tpu.pipeline_mode<synchronous>, transform_indices = @transform_8, window_bounds = array<i64: 1, 64>}, {pipeline_mode = #tpu.pipeline_mode<synchronous>, transform_indices = @transform_9, window_bounds = array<i64: 1, 64>}, {pipeline_mode = #tpu.pipeline_mode<synchronous>, transform_indices = @transform_10, window_bounds = array<i64: 64, 32>}, {pipeline_mode = #tpu.pipeline_mode<synchronous>, transform_indices = @transform_11, window_bounds = array<i64: 1, 32>}, {pipeline_mode = #tpu.pipeline_mode<synchronous>, transform_indices = @transform_12, window_bounds = array<i64: 32, 128>}, {pipeline_mode = #tpu.pipeline_mode<synchronous>, transform_indices = @transform_13, window_bounds = array<i64: 4, 64>}, {pipeline_mode = #tpu.pipeline_mode<synchronous>, transform_indices = @transform_14, window_bounds = array<i64: 1, 64>}, {pipeline_mode = #tpu.pipeline_mode<synchronous>, transform_indices = @transform_15, window_bounds = array<i64: 64, 136>}, {pipeline_mode = #tpu.pipeline_mode<synchronous>, transform_indices = @transform_16, window_bounds = array<i64: 64, 72>}, {pipeline_mode = #tpu.pipeline_mode<synchronous>, transform_indices = @transform_17, window_bounds = array<i64: 1, 8>}, {pipeline_mode = #tpu.pipeline_mode<synchronous>, transform_indices = @transform_18, window_bounds = array<i64: 1, 64>}, {pipeline_mode = #tpu.pipeline_mode<synchronous>, transform_indices = @transform_19, window_bounds = array<i64: 1, 64>}, {pipeline_mode = #tpu.pipeline_mode<synchronous>, transform_indices = @transform_20, window_bounds = array<i64: 64, 32>}, {pipeline_mode = #tpu.pipeline_mode<synchronous>, transform_indices = @transform_21, window_bounds = array<i64: 1, 32>}, {pipeline_mode = #tpu.pipeline_mode<synchronous>, transform_indices = @transform_22, window_bounds = array<i64: 32, 16>}, {pipeline_mode = #tpu.pipeline_mode<synchronous>, transform_indices = @transform_23, window_bounds = array<i64: 1, 16>}, {transform_indices = @transform_24, window_bounds = array<i64: 1, 8, 16>}]} {
    %c0 = arith.constant 0 : index
    %c0_0 = arith.constant 0 : index
    %c0_1 = arith.constant 0 : index
    %0 = vector.load %arg1[%c0, %c0_0, %c0_1] : memref<1x8x32xf32, #tpu.memory_space<vmem>>, vector<1x8x32xf32>
    %1 = vector.shape_cast %0 : vector<1x8x32xf32> to vector<8x32xf32>
    %2 = tpu.iota {dimensions = array<i32: 0>} : vector<8x1xi32>
    %3 = tpu.iota {dimensions = array<i32: 0>} : vector<8x8xi32>
    %4 = tpu.iota {dimensions = array<i32: 1>} : vector<8x8xi32>
    %5 = arith.cmpi sge, %3, %4 : vector<8x8xi32>
    %cst = arith.constant 1.000000e+00 : f32
    %6 = vector.broadcast %cst : f32 to vector<8x1xf32>
    %c0_2 = arith.constant 0 : index
    %c0_3 = arith.constant 0 : index
    %7 = vector.load %arg2[%c0_2, %c0_3] : memref<1x32xf32, #tpu.memory_space<vmem>>, vector<1x32xf32>
    %c0_4 = arith.constant 0 : index
    %c0_5 = arith.constant 0 : index
    %8 = vector.load %arg3[%c0_4, %c0_5] : memref<32x128xbf16, #tpu.memory_space<vmem>>, vector<32x128xbf16>
    %c0_6 = arith.constant 0 : index
    %c0_7 = arith.constant 0 : index
    %9 = vector.load %arg4[%c0_6, %c0_7] : memref<4x64xf32, #tpu.memory_space<vmem>>, vector<4x64xf32>
    %c0_8 = arith.constant 0 : index
    %c0_9 = arith.constant 0 : index
    %10 = vector.load %arg5[%c0_8, %c0_9] : memref<1x64xf32, #tpu.memory_space<vmem>>, vector<1x64xf32>
    %c0_10 = arith.constant 0 : index
    %c0_11 = arith.constant 0 : index
    %11 = vector.load %arg6[%c0_10, %c0_11] : memref<64x136xbf16, #tpu.memory_space<vmem>>, vector<64x136xbf16>
    %c0_12 = arith.constant 0 : index
    %c0_13 = arith.constant 0 : index
    %12 = vector.load %arg7[%c0_12, %c0_13] : memref<64x72xbf16, #tpu.memory_space<vmem>>, vector<64x72xbf16>
    %c0_14 = arith.constant 0 : index
    %c0_15 = arith.constant 0 : index
    %13 = vector.load %arg8[%c0_14, %c0_15] : memref<1x8xf32, #tpu.memory_space<vmem>>, vector<1x8xf32>
    %c0_16 = arith.constant 0 : index
    %c0_17 = arith.constant 0 : index
    %14 = vector.load %arg9[%c0_16, %c0_17] : memref<1x64xf32, #tpu.memory_space<vmem>>, vector<1x64xf32>
    %c0_18 = arith.constant 0 : index
    %c0_19 = arith.constant 0 : index
    %15 = vector.load %arg10[%c0_18, %c0_19] : memref<1x64xf32, #tpu.memory_space<vmem>>, vector<1x64xf32>
    %c0_20 = arith.constant 0 : index
    %c0_21 = arith.constant 0 : index
    %16 = vector.load %arg11[%c0_20, %c0_21] : memref<64x32xbf16, #tpu.memory_space<vmem>>, vector<64x32xbf16>
    %cst_22 = arith.constant dense<0.000000e+00> : vector<8xf32>
    %17 = vector.multi_reduction <add>, %1, %cst_22 [1] : vector<8x32xf32> to vector<8xf32>
    %18 = vector.shape_cast %17 : vector<8xf32> to vector<8x1xf32>
    %cst_23 = arith.constant 3.200000e+01 : f32
    %19 = vector.broadcast %cst_23 : f32 to vector<8x1xf32>
    %20 = arith.divf %18, %19 : vector<8x1xf32>
    %21 = vector.broadcast %20 : vector<8x1xf32> to vector<8x32xf32>
    %22 = arith.subf %1, %21 : vector<8x32xf32>
    %23 = arith.mulf %22, %22 : vector<8x32xf32>
    %cst_24 = arith.constant dense<0.000000e+00> : vector<8xf32>
    %24 = vector.multi_reduction <add>, %23, %cst_24 [1] : vector<8x32xf32> to vector<8xf32>
    %25 = vector.shape_cast %24 : vector<8xf32> to vector<8x1xf32>
    %cst_25 = arith.constant 3.200000e+01 : f32
    %26 = vector.broadcast %cst_25 : f32 to vector<8x1xf32>
    %27 = arith.divf %25, %26 : vector<8x1xf32>
    %28 = vector.broadcast %20 : vector<8x1xf32> to vector<8x32xf32>
    %29 = arith.subf %1, %28 : vector<8x32xf32>
    %cst_26 = arith.constant 9.99999974E-6 : f32
    %30 = vector.broadcast %cst_26 : f32 to vector<8x1xf32>
    %31 = arith.addf %27, %30 : vector<8x1xf32>
    %32 = math.rsqrt %31 : vector<8x1xf32>
    %33 = vector.broadcast %32 : vector<8x1xf32> to vector<8x32xf32>
    %34 = arith.mulf %29, %33 : vector<8x32xf32>
    %35 = vector.broadcast %7 : vector<1x32xf32> to vector<8x32xf32>
    %36 = arith.mulf %34, %35 : vector<8x32xf32>
    %37 = arith.truncf %36 : vector<8x32xf32> to vector<8x32xbf16>
    %cst_27 = arith.constant dense<0.000000e+00> : vector<8x128xf32>
    %38 = tpu.matmul %37, %8, %cst_27 {dimension_numbers = #tpu.dot_dimension_numbers<[1], [0], [0], [1], [0, 0, 1, 1], [], []>} : vector<8x32xbf16>, vector<32x128xbf16>, vector<8x128xf32> -> vector<8x128xf32>
    %39 = vector.extract_strided_slice %38 {offsets = [0, 0], sizes = [8, 64], strides = [1, 1]} : vector<8x128xf32> to vector<8x64xf32>
    %40 = vector.extract_strided_slice %38 {offsets = [0, 64], sizes = [8, 64], strides = [1, 1]} : vector<8x128xf32> to vector<8x64xf32>
    %41 = vector.extract_strided_slice %9 {offsets = [3, 0], sizes = [1, 64], strides = [1, 1]} : vector<4x64xf32> to vector<1x64xf32>
    %42 = vector.broadcast %41 : vector<1x64xf32> to vector<8x64xf32>
    %43 = arith.mulf %39, %42 : vector<8x64xf32>
    %c3_i32 = arith.constant 3 : i32
    %44 = vector.broadcast %c3_i32 : i32 to vector<8x1xi32>
    %45 = arith.cmpi sge, %2, %44 : vector<8x1xi32>
    %c3_i32_28 = arith.constant 3 : i32
    %46 = tpu.dynamic_rotate %39 by %c3_i32_28 dim 0 : vector<8x64xf32>, i32 -> vector<8x64xf32>
    %cst_29 = arith.constant 0.000000e+00 : f32
    %47 = vector.shape_cast %45 : vector<8x1xi1> to vector<8x1xi1>
    %48 = vector.broadcast %47 : vector<8x1xi1> to vector<8x64xi1>
    %49 = vector.broadcast %cst_29 : f32 to vector<8x64xf32>
    %50 = arith.select %48, %46, %49 : vector<8x64xi1>, vector<8x64xf32>
    %51 = vector.extract_strided_slice %9 {offsets = [0, 0], sizes = [1, 64], strides = [1, 1]} : vector<4x64xf32> to vector<1x64xf32>
    %52 = vector.broadcast %51 : vector<1x64xf32> to vector<8x64xf32>
    %53 = arith.mulf %50, %52 : vector<8x64xf32>
    %54 = arith.addf %43, %53 : vector<8x64xf32>
    %c2_i32 = arith.constant 2 : i32
    %55 = vector.broadcast %c2_i32 : i32 to vector<8x1xi32>
    %56 = arith.cmpi sge, %2, %55 : vector<8x1xi32>
    %c2_i32_30 = arith.constant 2 : i32
    %57 = tpu.dynamic_rotate %39 by %c2_i32_30 dim 0 : vector<8x64xf32>, i32 -> vector<8x64xf32>
    %cst_31 = arith.constant 0.000000e+00 : f32
    %58 = vector.shape_cast %56 : vector<8x1xi1> to vector<8x1xi1>
    %59 = vector.broadcast %58 : vector<8x1xi1> to vector<8x64xi1>
    %60 = vector.broadcast %cst_31 : f32 to vector<8x64xf32>
    %61 = arith.select %59, %57, %60 : vector<8x64xi1>, vector<8x64xf32>
    %62 = vector.extract_strided_slice %9 {offsets = [1, 0], sizes = [1, 64], strides = [1, 1]} : vector<4x64xf32> to vector<1x64xf32>
    %63 = vector.broadcast %62 : vector<1x64xf32> to vector<8x64xf32>
    %64 = arith.mulf %61, %63 : vector<8x64xf32>
    %65 = arith.addf %54, %64 : vector<8x64xf32>
    %c1_i32 = arith.constant 1 : i32
    %66 = vector.broadcast %c1_i32 : i32 to vector<8x1xi32>
    %67 = arith.cmpi sge, %2, %66 : vector<8x1xi32>
    %c1_i32_32 = arith.constant 1 : i32
    %68 = tpu.dynamic_rotate %39 by %c1_i32_32 dim 0 : vector<8x64xf32>, i32 -> vector<8x64xf32>
    %cst_33 = arith.constant 0.000000e+00 : f32
    %69 = vector.shape_cast %67 : vector<8x1xi1> to vector<8x1xi1>
    %70 = vector.broadcast %69 : vector<8x1xi1> to vector<8x64xi1>
    %71 = vector.broadcast %cst_33 : f32 to vector<8x64xf32>
    %72 = arith.select %70, %68, %71 : vector<8x64xi1>, vector<8x64xf32>
    %73 = vector.extract_strided_slice %9 {offsets = [2, 0], sizes = [1, 64], strides = [1, 1]} : vector<4x64xf32> to vector<1x64xf32>
    %74 = vector.broadcast %73 : vector<1x64xf32> to vector<8x64xf32>
    %75 = arith.mulf %72, %74 : vector<8x64xf32>
    %76 = arith.addf %65, %75 : vector<8x64xf32>
    %77 = vector.broadcast %10 : vector<1x64xf32> to vector<8x64xf32>
    %78 = arith.addf %76, %77 : vector<8x64xf32>
    %79 = arith.negf %78 : vector<8x64xf32>
    %80 = math.exp %79 : vector<8x64xf32>
    %cst_34 = arith.constant 1.000000e+00 : f32
    %81 = vector.broadcast %cst_34 : f32 to vector<8x64xf32>
    %82 = arith.addf %81, %80 : vector<8x64xf32>
    %83 = arith.divf %81, %82 : vector<8x64xf32>
    %84 = arith.mulf %78, %83 : vector<8x64xf32>
    %85 = arith.truncf %84 : vector<8x64xf32> to vector<8x64xbf16>
    %cst_35 = arith.constant dense<0.000000e+00> : vector<8x136xf32>
    %86 = tpu.matmul %85, %11, %cst_35 {dimension_numbers = #tpu.dot_dimension_numbers<[1], [0], [0], [1], [0, 0, 1, 1], [], []>} : vector<8x64xbf16>, vector<64x136xbf16>, vector<8x136xf32> -> vector<8x136xf32>
    %87 = arith.truncf %39 : vector<8x64xf32> to vector<8x64xbf16>
    %cst_36 = arith.constant dense<0.000000e+00> : vector<8x72xf32>
    %88 = tpu.matmul %87, %12, %cst_36 {dimension_numbers = #tpu.dot_dimension_numbers<[1], [0], [0], [1], [0, 0, 1, 1], [], []>} : vector<8x64xbf16>, vector<64x72xbf16>, vector<8x72xf32> -> vector<8x72xf32>
    %89 = vector.extract_strided_slice %86 {offsets = [0, 0], sizes = [8, 64], strides = [1, 1]} : vector<8x136xf32> to vector<8x64xf32>
    %90 = vector.extract_strided_slice %86 {offsets = [0, 64], sizes = [8, 64], strides = [1, 1]} : vector<8x136xf32> to vector<8x64xf32>
    %91 = vector.extract_strided_slice %88 {offsets = [0, 0], sizes = [8, 64], strides = [1, 1]} : vector<8x72xf32> to vector<8x64xf32>
    %92 = vector.extract_strided_slice %86 {offsets = [0, 128], sizes = [8, 8], strides = [1, 1]} : vector<8x136xf32> to vector<8x8xf32>
    %93 = vector.extract_strided_slice %88 {offsets = [0, 64], sizes = [8, 8], strides = [1, 1]} : vector<8x72xf32> to vector<8x8xf32>
    %94 = arith.addf %92, %93 : vector<8x8xf32>
    %95 = vector.broadcast %13 : vector<1x8xf32> to vector<8x8xf32>
    %96 = arith.addf %94, %95 : vector<8x8xf32>
    %97 = vector.extract_strided_slice %96 {offsets = [0, 0], sizes = [8, 4], strides = [1, 1]} : vector<8x8xf32> to vector<8x4xf32>
    %98 = vector.extract_strided_slice %96 {offsets = [0, 4], sizes = [8, 4], strides = [1, 1]} : vector<8x8xf32> to vector<8x4xf32>
    %cst_37 = arith.constant 0.000000e+00 : f32
    %99 = vector.broadcast %cst_37 : f32 to vector<8x4xf32>
    %100 = arith.subf %99, %98 : vector<8x4xf32>
    %cst_38 = arith.constant 0.000000e+00 : f32
    %101 = vector.broadcast %cst_38 : f32 to vector<8x4xf32>
    %102 = arith.maximumf %100, %101 : vector<8x4xf32>
    %103 = vector.broadcast %cst_38 : f32 to vector<8x4xf32>
    %104 = arith.subf %100, %103 : vector<8x4xf32>
    %105 = arith.cmpf one, %104, %104 : vector<8x4xf32>
    %106 = vector.broadcast %cst_38 : f32 to vector<8x4xf32>
    %107 = arith.addf %100, %106 : vector<8x4xf32>
    %108 = math.absf %104 : vector<8x4xf32>
    %cst_39 = arith.constant 0.000000e+00 : f32
    %109 = vector.broadcast %cst_39 : f32 to vector<8x4xf32>
    %110 = arith.subf %109, %108 : vector<8x4xf32>
    %111 = math.exp %110 : vector<8x4xf32>
    %112 = math.log1p %111 : vector<8x4xf32>
    %113 = arith.addf %102, %112 : vector<8x4xf32>
    %114 = arith.select %105, %107, %113 : vector<8x4xi1>, vector<8x4xf32>
    %cst_40 = arith.constant 0.000000e+00 : f32
    %115 = vector.broadcast %cst_40 : f32 to vector<8x4xf32>
    %116 = arith.subf %115, %114 : vector<8x4xf32>
    %c1_i32_41 = arith.constant 1 : i32
    %117 = vector.broadcast %c1_i32_41 : i32 to vector<8x1xi32>
    %118 = arith.cmpi sge, %2, %117 : vector<8x1xi32>
    %c1_i32_42 = arith.constant 1 : i32
    %119 = tpu.dynamic_rotate %116 by %c1_i32_42 dim 0 : vector<8x4xf32>, i32 -> vector<8x4xf32>
    %cst_43 = arith.constant 0.000000e+00 : f32
    %120 = vector.shape_cast %118 : vector<8x1xi1> to vector<8x1xi1>
    %121 = vector.broadcast %120 : vector<8x1xi1> to vector<8x4xi1>
    %122 = vector.broadcast %cst_43 : f32 to vector<8x4xf32>
    %123 = arith.select %121, %119, %122 : vector<8x4xi1>, vector<8x4xf32>
    %124 = arith.addf %116, %123 : vector<8x4xf32>
    %c2_i32_44 = arith.constant 2 : i32
    %125 = vector.broadcast %c2_i32_44 : i32 to vector<8x1xi32>
    %126 = arith.cmpi sge, %2, %125 : vector<8x1xi32>
    %c2_i32_45 = arith.constant 2 : i32
    %127 = tpu.dynamic_rotate %124 by %c2_i32_45 dim 0 : vector<8x4xf32>, i32 -> vector<8x4xf32>
    %cst_46 = arith.constant 0.000000e+00 : f32
    %128 = vector.shape_cast %126 : vector<8x1xi1> to vector<8x1xi1>
    %129 = vector.broadcast %128 : vector<8x1xi1> to vector<8x4xi1>
    %130 = vector.broadcast %cst_46 : f32 to vector<8x4xf32>
    %131 = arith.select %129, %127, %130 : vector<8x4xi1>, vector<8x4xf32>
    %132 = arith.addf %124, %131 : vector<8x4xf32>
    %c4_i32 = arith.constant 4 : i32
    %133 = vector.broadcast %c4_i32 : i32 to vector<8x1xi32>
    %134 = arith.cmpi sge, %2, %133 : vector<8x1xi32>
    %c4_i32_47 = arith.constant 4 : i32
    %135 = tpu.dynamic_rotate %132 by %c4_i32_47 dim 0 : vector<8x4xf32>, i32 -> vector<8x4xf32>
    %cst_48 = arith.constant 0.000000e+00 : f32
    %136 = vector.shape_cast %134 : vector<8x1xi1> to vector<8x1xi1>
    %137 = vector.broadcast %136 : vector<8x1xi1> to vector<8x4xi1>
    %138 = vector.broadcast %cst_48 : f32 to vector<8x4xf32>
    %139 = arith.select %137, %135, %138 : vector<8x4xi1>, vector<8x4xf32>
    %140 = arith.addf %132, %139 : vector<8x4xf32>
    %141 = tpu.transpose %140, [1, 0] : vector<8x4xf32> -> vector<4x8xf32>
    %142 = tpu.transpose %97, [1, 0] : vector<8x4xf32> -> vector<4x8xf32>
    %143 = vector.extract_strided_slice %89 {offsets = [0, 0], sizes = [8, 16], strides = [1, 1]} : vector<8x64xf32> to vector<8x16xf32>
    %144 = arith.truncf %143 : vector<8x16xf32> to vector<8x16xbf16>
    %145 = vector.extract_strided_slice %90 {offsets = [0, 0], sizes = [8, 16], strides = [1, 1]} : vector<8x64xf32> to vector<8x16xf32>
    %146 = arith.truncf %145 : vector<8x16xf32> to vector<8x16xbf16>
    %147 = vector.extract_strided_slice %91 {offsets = [0, 0], sizes = [8, 16], strides = [1, 1]} : vector<8x64xf32> to vector<8x16xf32>
    %148 = vector.extract_strided_slice %140 {offsets = [0, 0], sizes = [8, 1], strides = [1, 1]} : vector<8x4xf32> to vector<8x1xf32>
    %149 = vector.extract_strided_slice %141 {offsets = [0, 0], sizes = [1, 8], strides = [1, 1]} : vector<4x8xf32> to vector<1x8xf32>
    %150 = vector.broadcast %148 : vector<8x1xf32> to vector<8x8xf32>
    %151 = vector.broadcast %149 : vector<1x8xf32> to vector<8x8xf32>
    %152 = arith.subf %150, %151 : vector<8x8xf32>
    %cst_49 = arith.constant 0xFF800000 : f32
    %153 = vector.broadcast %cst_49 : f32 to vector<8x8xf32>
    %154 = arith.select %5, %152, %153 : vector<8x8xi1>, vector<8x8xf32>
    %155 = vector.extract_strided_slice %142 {offsets = [0, 0], sizes = [1, 8], strides = [1, 1]} : vector<4x8xf32> to vector<1x8xf32>
    %156 = vector.broadcast %155 : vector<1x8xf32> to vector<8x8xf32>
    %157 = arith.addf %154, %156 : vector<8x8xf32>
    %cst_50 = arith.constant dense<0xFF800000> : vector<8xf32>
    %158 = vector.multi_reduction <maximumf>, %157, %cst_50 [1] : vector<8x8xf32> to vector<8xf32>
    %159 = vector.shape_cast %158 : vector<8xf32> to vector<8x1xf32>
    %160 = vector.broadcast %159 : vector<8x1xf32> to vector<8x8xf32>
    %161 = arith.subf %157, %160 : vector<8x8xf32>
    %162 = math.exp %161 : vector<8x8xf32>
    %cst_51 = arith.constant dense<0.000000e+00> : vector<8x8xf32>
    %163 = tpu.matmul %144, %146, %cst_51 {dimension_numbers = #tpu.dot_dimension_numbers<[1], [1], [0], [0], [0, 0, 1, 0], [], []>} : vector<8x16xbf16>, vector<8x16xbf16>, vector<8x8xf32> -> vector<8x8xf32>
    %164 = arith.mulf %163, %162 : vector<8x8xf32>
    %165 = tpu.concatenate %147, %6 in 1 : vector<8x16xf32>, vector<8x1xf32> -> vector<8x17xf32>
    %166 = arith.truncf %165 : vector<8x17xf32> to vector<8x17xbf16>
    %167 = arith.truncf %164 : vector<8x8xf32> to vector<8x8xbf16>
    %cst_52 = arith.constant dense<0.000000e+00> : vector<8x17xf32>
    %168 = tpu.matmul %167, %166, %cst_52 {dimension_numbers = #tpu.dot_dimension_numbers<[1], [0], [0], [1], [0, 0, 1, 1], [], []>} : vector<8x8xbf16>, vector<8x17xbf16>, vector<8x17xf32> -> vector<8x17xf32>
    %169 = vector.extract_strided_slice %168 {offsets = [0, 16], sizes = [8, 1], strides = [1, 1]} : vector<8x17xf32> to vector<8x1xf32>
    %170 = math.absf %169 : vector<8x1xf32>
    %cst_53 = arith.constant 0.000000e+00 : f32
    %171 = vector.broadcast %cst_53 : f32 to vector<8x1xf32>
    %172 = arith.subf %171, %159 : vector<8x1xf32>
    %173 = math.exp %172 : vector<8x1xf32>
    %174 = arith.maximumf %170, %173 : vector<8x1xf32>
    %cst_54 = arith.constant 9.99999997E-7 : f32
    %175 = vector.broadcast %cst_54 : f32 to vector<8x1xf32>
    %176 = arith.addf %174, %175 : vector<8x1xf32>
    %177 = tpu.reciprocal %176 {approx = true} : vector<8x1xf32> -> vector<8x1xf32>
    %178 = vector.extract_strided_slice %168 {offsets = [0, 0], sizes = [8, 16], strides = [1, 1]} : vector<8x17xf32> to vector<8x16xf32>
    %179 = vector.broadcast %177 : vector<8x1xf32> to vector<8x16xf32>
    %180 = arith.mulf %178, %179 : vector<8x16xf32>
    %cst_55 = arith.constant dense<0.000000e+00> : vector<8xf32>
    %181 = vector.multi_reduction <add>, %180, %cst_55 [1] : vector<8x16xf32> to vector<8xf32>
    %182 = vector.shape_cast %181 : vector<8xf32> to vector<8x1xf32>
    %cst_56 = arith.constant 1.600000e+01 : f32
    %183 = vector.broadcast %cst_56 : f32 to vector<8x1xf32>
    %184 = arith.divf %182, %183 : vector<8x1xf32>
    %185 = vector.broadcast %184 : vector<8x1xf32> to vector<8x16xf32>
    %186 = arith.subf %180, %185 : vector<8x16xf32>
    %187 = arith.mulf %186, %186 : vector<8x16xf32>
    %cst_57 = arith.constant dense<0.000000e+00> : vector<8xf32>
    %188 = vector.multi_reduction <add>, %187, %cst_57 [1] : vector<8x16xf32> to vector<8xf32>
    %189 = vector.shape_cast %188 : vector<8xf32> to vector<8x1xf32>
    %cst_58 = arith.constant 1.600000e+01 : f32
    %190 = vector.broadcast %cst_58 : f32 to vector<8x1xf32>
    %191 = arith.divf %189, %190 : vector<8x1xf32>
    %192 = vector.broadcast %184 : vector<8x1xf32> to vector<8x16xf32>
    %193 = arith.subf %180, %192 : vector<8x16xf32>
    %cst_59 = arith.constant 9.99999974E-6 : f32
    %194 = vector.broadcast %cst_59 : f32 to vector<8x1xf32>
    %195 = arith.addf %191, %194 : vector<8x1xf32>
    %196 = math.rsqrt %195 : vector<8x1xf32>
    %197 = vector.broadcast %196 : vector<8x1xf32> to vector<8x16xf32>
    %198 = arith.mulf %193, %197 : vector<8x16xf32>
    %199 = vector.extract_strided_slice %89 {offsets = [0, 16], sizes = [8, 16], strides = [1, 1]} : vector<8x64xf32> to vector<8x16xf32>
    %200 = arith.truncf %199 : vector<8x16xf32> to vector<8x16xbf16>
    %201 = vector.extract_strided_slice %90 {offsets = [0, 16], sizes = [8, 16], strides = [1, 1]} : vector<8x64xf32> to vector<8x16xf32>
    %202 = arith.truncf %201 : vector<8x16xf32> to vector<8x16xbf16>
    %203 = vector.extract_strided_slice %91 {offsets = [0, 16], sizes = [8, 16], strides = [1, 1]} : vector<8x64xf32> to vector<8x16xf32>
    %204 = vector.extract_strided_slice %140 {offsets = [0, 1], sizes = [8, 1], strides = [1, 1]} : vector<8x4xf32> to vector<8x1xf32>
    %205 = vector.extract_strided_slice %141 {offsets = [1, 0], sizes = [1, 8], strides = [1, 1]} : vector<4x8xf32> to vector<1x8xf32>
    %206 = vector.broadcast %204 : vector<8x1xf32> to vector<8x8xf32>
    %207 = vector.broadcast %205 : vector<1x8xf32> to vector<8x8xf32>
    %208 = arith.subf %206, %207 : vector<8x8xf32>
    %cst_60 = arith.constant 0xFF800000 : f32
    %209 = vector.broadcast %cst_60 : f32 to vector<8x8xf32>
    %210 = arith.select %5, %208, %209 : vector<8x8xi1>, vector<8x8xf32>
    %211 = vector.extract_strided_slice %142 {offsets = [1, 0], sizes = [1, 8], strides = [1, 1]} : vector<4x8xf32> to vector<1x8xf32>
    %212 = vector.broadcast %211 : vector<1x8xf32> to vector<8x8xf32>
    %213 = arith.addf %210, %212 : vector<8x8xf32>
    %cst_61 = arith.constant dense<0xFF800000> : vector<8xf32>
    %214 = vector.multi_reduction <maximumf>, %213, %cst_61 [1] : vector<8x8xf32> to vector<8xf32>
    %215 = vector.shape_cast %214 : vector<8xf32> to vector<8x1xf32>
    %216 = vector.broadcast %215 : vector<8x1xf32> to vector<8x8xf32>
    %217 = arith.subf %213, %216 : vector<8x8xf32>
    %218 = math.exp %217 : vector<8x8xf32>
    %cst_62 = arith.constant dense<0.000000e+00> : vector<8x8xf32>
    %219 = tpu.matmul %200, %202, %cst_62 {dimension_numbers = #tpu.dot_dimension_numbers<[1], [1], [0], [0], [0, 0, 1, 0], [], []>} : vector<8x16xbf16>, vector<8x16xbf16>, vector<8x8xf32> -> vector<8x8xf32>
    %220 = arith.mulf %219, %218 : vector<8x8xf32>
    %221 = tpu.concatenate %203, %6 in 1 : vector<8x16xf32>, vector<8x1xf32> -> vector<8x17xf32>
    %222 = arith.truncf %221 : vector<8x17xf32> to vector<8x17xbf16>
    %223 = arith.truncf %220 : vector<8x8xf32> to vector<8x8xbf16>
    %cst_63 = arith.constant dense<0.000000e+00> : vector<8x17xf32>
    %224 = tpu.matmul %223, %222, %cst_63 {dimension_numbers = #tpu.dot_dimension_numbers<[1], [0], [0], [1], [0, 0, 1, 1], [], []>} : vector<8x8xbf16>, vector<8x17xbf16>, vector<8x17xf32> -> vector<8x17xf32>
    %225 = vector.extract_strided_slice %224 {offsets = [0, 16], sizes = [8, 1], strides = [1, 1]} : vector<8x17xf32> to vector<8x1xf32>
    %226 = math.absf %225 : vector<8x1xf32>
    %cst_64 = arith.constant 0.000000e+00 : f32
    %227 = vector.broadcast %cst_64 : f32 to vector<8x1xf32>
    %228 = arith.subf %227, %215 : vector<8x1xf32>
    %229 = math.exp %228 : vector<8x1xf32>
    %230 = arith.maximumf %226, %229 : vector<8x1xf32>
    %cst_65 = arith.constant 9.99999997E-7 : f32
    %231 = vector.broadcast %cst_65 : f32 to vector<8x1xf32>
    %232 = arith.addf %230, %231 : vector<8x1xf32>
    %233 = tpu.reciprocal %232 {approx = true} : vector<8x1xf32> -> vector<8x1xf32>
    %234 = vector.extract_strided_slice %224 {offsets = [0, 0], sizes = [8, 16], strides = [1, 1]} : vector<8x17xf32> to vector<8x16xf32>
    %235 = vector.broadcast %233 : vector<8x1xf32> to vector<8x16xf32>
    %236 = arith.mulf %234, %235 : vector<8x16xf32>
    %cst_66 = arith.constant dense<0.000000e+00> : vector<8xf32>
    %237 = vector.multi_reduction <add>, %236, %cst_66 [1] : vector<8x16xf32> to vector<8xf32>
    %238 = vector.shape_cast %237 : vector<8xf32> to vector<8x1xf32>
    %cst_67 = arith.constant 1.600000e+01 : f32
    %239 = vector.broadcast %cst_67 : f32 to vector<8x1xf32>
    %240 = arith.divf %238, %239 : vector<8x1xf32>
    %241 = vector.broadcast %240 : vector<8x1xf32> to vector<8x16xf32>
    %242 = arith.subf %236, %241 : vector<8x16xf32>
    %243 = arith.mulf %242, %242 : vector<8x16xf32>
    %cst_68 = arith.constant dense<0.000000e+00> : vector<8xf32>
    %244 = vector.multi_reduction <add>, %243, %cst_68 [1] : vector<8x16xf32> to vector<8xf32>
    %245 = vector.shape_cast %244 : vector<8xf32> to vector<8x1xf32>
    %cst_69 = arith.constant 1.600000e+01 : f32
    %246 = vector.broadcast %cst_69 : f32 to vector<8x1xf32>
    %247 = arith.divf %245, %246 : vector<8x1xf32>
    %248 = vector.broadcast %240 : vector<8x1xf32> to vector<8x16xf32>
    %249 = arith.subf %236, %248 : vector<8x16xf32>
    %cst_70 = arith.constant 9.99999974E-6 : f32
    %250 = vector.broadcast %cst_70 : f32 to vector<8x1xf32>
    %251 = arith.addf %247, %250 : vector<8x1xf32>
    %252 = math.rsqrt %251 : vector<8x1xf32>
    %253 = vector.broadcast %252 : vector<8x1xf32> to vector<8x16xf32>
    %254 = arith.mulf %249, %253 : vector<8x16xf32>
    %255 = vector.extract_strided_slice %89 {offsets = [0, 32], sizes = [8, 16], strides = [1, 1]} : vector<8x64xf32> to vector<8x16xf32>
    %256 = arith.truncf %255 : vector<8x16xf32> to vector<8x16xbf16>
    %257 = vector.extract_strided_slice %90 {offsets = [0, 32], sizes = [8, 16], strides = [1, 1]} : vector<8x64xf32> to vector<8x16xf32>
    %258 = arith.truncf %257 : vector<8x16xf32> to vector<8x16xbf16>
    %259 = vector.extract_strided_slice %91 {offsets = [0, 32], sizes = [8, 16], strides = [1, 1]} : vector<8x64xf32> to vector<8x16xf32>
    %260 = vector.extract_strided_slice %140 {offsets = [0, 2], sizes = [8, 1], strides = [1, 1]} : vector<8x4xf32> to vector<8x1xf32>
    %261 = vector.extract_strided_slice %141 {offsets = [2, 0], sizes = [1, 8], strides = [1, 1]} : vector<4x8xf32> to vector<1x8xf32>
    %262 = vector.broadcast %260 : vector<8x1xf32> to vector<8x8xf32>
    %263 = vector.broadcast %261 : vector<1x8xf32> to vector<8x8xf32>
    %264 = arith.subf %262, %263 : vector<8x8xf32>
    %cst_71 = arith.constant 0xFF800000 : f32
    %265 = vector.broadcast %cst_71 : f32 to vector<8x8xf32>
    %266 = arith.select %5, %264, %265 : vector<8x8xi1>, vector<8x8xf32>
    %267 = vector.extract_strided_slice %142 {offsets = [2, 0], sizes = [1, 8], strides = [1, 1]} : vector<4x8xf32> to vector<1x8xf32>
    %268 = vector.broadcast %267 : vector<1x8xf32> to vector<8x8xf32>
    %269 = arith.addf %266, %268 : vector<8x8xf32>
    %cst_72 = arith.constant dense<0xFF800000> : vector<8xf32>
    %270 = vector.multi_reduction <maximumf>, %269, %cst_72 [1] : vector<8x8xf32> to vector<8xf32>
    %271 = vector.shape_cast %270 : vector<8xf32> to vector<8x1xf32>
    %272 = vector.broadcast %271 : vector<8x1xf32> to vector<8x8xf32>
    %273 = arith.subf %269, %272 : vector<8x8xf32>
    %274 = math.exp %273 : vector<8x8xf32>
    %cst_73 = arith.constant dense<0.000000e+00> : vector<8x8xf32>
    %275 = tpu.matmul %256, %258, %cst_73 {dimension_numbers = #tpu.dot_dimension_numbers<[1], [1], [0], [0], [0, 0, 1, 0], [], []>} : vector<8x16xbf16>, vector<8x16xbf16>, vector<8x8xf32> -> vector<8x8xf32>
    %276 = arith.mulf %275, %274 : vector<8x8xf32>
    %277 = tpu.concatenate %259, %6 in 1 : vector<8x16xf32>, vector<8x1xf32> -> vector<8x17xf32>
    %278 = arith.truncf %277 : vector<8x17xf32> to vector<8x17xbf16>
    %279 = arith.truncf %276 : vector<8x8xf32> to vector<8x8xbf16>
    %cst_74 = arith.constant dense<0.000000e+00> : vector<8x17xf32>
    %280 = tpu.matmul %279, %278, %cst_74 {dimension_numbers = #tpu.dot_dimension_numbers<[1], [0], [0], [1], [0, 0, 1, 1], [], []>} : vector<8x8xbf16>, vector<8x17xbf16>, vector<8x17xf32> -> vector<8x17xf32>
    %281 = vector.extract_strided_slice %280 {offsets = [0, 16], sizes = [8, 1], strides = [1, 1]} : vector<8x17xf32> to vector<8x1xf32>
    %282 = math.absf %281 : vector<8x1xf32>
    %cst_75 = arith.constant 0.000000e+00 : f32
    %283 = vector.broadcast %cst_75 : f32 to vector<8x1xf32>
    %284 = arith.subf %283, %271 : vector<8x1xf32>
    %285 = math.exp %284 : vector<8x1xf32>
    %286 = arith.maximumf %282, %285 : vector<8x1xf32>
    %cst_76 = arith.constant 9.99999997E-7 : f32
    %287 = vector.broadcast %cst_76 : f32 to vector<8x1xf32>
    %288 = arith.addf %286, %287 : vector<8x1xf32>
    %289 = tpu.reciprocal %288 {approx = true} : vector<8x1xf32> -> vector<8x1xf32>
    %290 = vector.extract_strided_slice %280 {offsets = [0, 0], sizes = [8, 16], strides = [1, 1]} : vector<8x17xf32> to vector<8x16xf32>
    %291 = vector.broadcast %289 : vector<8x1xf32> to vector<8x16xf32>
    %292 = arith.mulf %290, %291 : vector<8x16xf32>
    %cst_77 = arith.constant dense<0.000000e+00> : vector<8xf32>
    %293 = vector.multi_reduction <add>, %292, %cst_77 [1] : vector<8x16xf32> to vector<8xf32>
    %294 = vector.shape_cast %293 : vector<8xf32> to vector<8x1xf32>
    %cst_78 = arith.constant 1.600000e+01 : f32
    %295 = vector.broadcast %cst_78 : f32 to vector<8x1xf32>
    %296 = arith.divf %294, %295 : vector<8x1xf32>
    %297 = vector.broadcast %296 : vector<8x1xf32> to vector<8x16xf32>
    %298 = arith.subf %292, %297 : vector<8x16xf32>
    %299 = arith.mulf %298, %298 : vector<8x16xf32>
    %cst_79 = arith.constant dense<0.000000e+00> : vector<8xf32>
    %300 = vector.multi_reduction <add>, %299, %cst_79 [1] : vector<8x16xf32> to vector<8xf32>
    %301 = vector.shape_cast %300 : vector<8xf32> to vector<8x1xf32>
    %cst_80 = arith.constant 1.600000e+01 : f32
    %302 = vector.broadcast %cst_80 : f32 to vector<8x1xf32>
    %303 = arith.divf %301, %302 : vector<8x1xf32>
    %304 = vector.broadcast %296 : vector<8x1xf32> to vector<8x16xf32>
    %305 = arith.subf %292, %304 : vector<8x16xf32>
    %cst_81 = arith.constant 9.99999974E-6 : f32
    %306 = vector.broadcast %cst_81 : f32 to vector<8x1xf32>
    %307 = arith.addf %303, %306 : vector<8x1xf32>
    %308 = math.rsqrt %307 : vector<8x1xf32>
    %309 = vector.broadcast %308 : vector<8x1xf32> to vector<8x16xf32>
    %310 = arith.mulf %305, %309 : vector<8x16xf32>
    %311 = vector.extract_strided_slice %89 {offsets = [0, 48], sizes = [8, 16], strides = [1, 1]} : vector<8x64xf32> to vector<8x16xf32>
    %312 = arith.truncf %311 : vector<8x16xf32> to vector<8x16xbf16>
    %313 = vector.extract_strided_slice %90 {offsets = [0, 48], sizes = [8, 16], strides = [1, 1]} : vector<8x64xf32> to vector<8x16xf32>
    %314 = arith.truncf %313 : vector<8x16xf32> to vector<8x16xbf16>
    %315 = vector.extract_strided_slice %91 {offsets = [0, 48], sizes = [8, 16], strides = [1, 1]} : vector<8x64xf32> to vector<8x16xf32>
    %316 = vector.extract_strided_slice %140 {offsets = [0, 3], sizes = [8, 1], strides = [1, 1]} : vector<8x4xf32> to vector<8x1xf32>
    %317 = vector.extract_strided_slice %141 {offsets = [3, 0], sizes = [1, 8], strides = [1, 1]} : vector<4x8xf32> to vector<1x8xf32>
    %318 = vector.broadcast %316 : vector<8x1xf32> to vector<8x8xf32>
    %319 = vector.broadcast %317 : vector<1x8xf32> to vector<8x8xf32>
    %320 = arith.subf %318, %319 : vector<8x8xf32>
    %cst_82 = arith.constant 0xFF800000 : f32
    %321 = vector.broadcast %cst_82 : f32 to vector<8x8xf32>
    %322 = arith.select %5, %320, %321 : vector<8x8xi1>, vector<8x8xf32>
    %323 = vector.extract_strided_slice %142 {offsets = [3, 0], sizes = [1, 8], strides = [1, 1]} : vector<4x8xf32> to vector<1x8xf32>
    %324 = vector.broadcast %323 : vector<1x8xf32> to vector<8x8xf32>
    %325 = arith.addf %322, %324 : vector<8x8xf32>
    %cst_83 = arith.constant dense<0xFF800000> : vector<8xf32>
    %326 = vector.multi_reduction <maximumf>, %325, %cst_83 [1] : vector<8x8xf32> to vector<8xf32>
    %327 = vector.shape_cast %326 : vector<8xf32> to vector<8x1xf32>
    %328 = vector.broadcast %327 : vector<8x1xf32> to vector<8x8xf32>
    %329 = arith.subf %325, %328 : vector<8x8xf32>
    %330 = math.exp %329 : vector<8x8xf32>
    %cst_84 = arith.constant dense<0.000000e+00> : vector<8x8xf32>
    %331 = tpu.matmul %312, %314, %cst_84 {dimension_numbers = #tpu.dot_dimension_numbers<[1], [1], [0], [0], [0, 0, 1, 0], [], []>} : vector<8x16xbf16>, vector<8x16xbf16>, vector<8x8xf32> -> vector<8x8xf32>
    %332 = arith.mulf %331, %330 : vector<8x8xf32>
    %333 = tpu.concatenate %315, %6 in 1 : vector<8x16xf32>, vector<8x1xf32> -> vector<8x17xf32>
    %334 = arith.truncf %333 : vector<8x17xf32> to vector<8x17xbf16>
    %335 = arith.truncf %332 : vector<8x8xf32> to vector<8x8xbf16>
    %cst_85 = arith.constant dense<0.000000e+00> : vector<8x17xf32>
    %336 = tpu.matmul %335, %334, %cst_85 {dimension_numbers = #tpu.dot_dimension_numbers<[1], [0], [0], [1], [0, 0, 1, 1], [], []>} : vector<8x8xbf16>, vector<8x17xbf16>, vector<8x17xf32> -> vector<8x17xf32>
    %337 = vector.extract_strided_slice %336 {offsets = [0, 16], sizes = [8, 1], strides = [1, 1]} : vector<8x17xf32> to vector<8x1xf32>
    %338 = math.absf %337 : vector<8x1xf32>
    %cst_86 = arith.constant 0.000000e+00 : f32
    %339 = vector.broadcast %cst_86 : f32 to vector<8x1xf32>
    %340 = arith.subf %339, %327 : vector<8x1xf32>
    %341 = math.exp %340 : vector<8x1xf32>
    %342 = arith.maximumf %338, %341 : vector<8x1xf32>
    %cst_87 = arith.constant 9.99999997E-7 : f32
    %343 = vector.broadcast %cst_87 : f32 to vector<8x1xf32>
    %344 = arith.addf %342, %343 : vector<8x1xf32>
    %345 = tpu.reciprocal %344 {approx = true} : vector<8x1xf32> -> vector<8x1xf32>
    %346 = vector.extract_strided_slice %336 {offsets = [0, 0], sizes = [8, 16], strides = [1, 1]} : vector<8x17xf32> to vector<8x16xf32>
    %347 = vector.broadcast %345 : vector<8x1xf32> to vector<8x16xf32>
    %348 = arith.mulf %346, %347 : vector<8x16xf32>
    %cst_88 = arith.constant dense<0.000000e+00> : vector<8xf32>
    %349 = vector.multi_reduction <add>, %348, %cst_88 [1] : vector<8x16xf32> to vector<8xf32>
    %350 = vector.shape_cast %349 : vector<8xf32> to vector<8x1xf32>
    %cst_89 = arith.constant 1.600000e+01 : f32
    %351 = vector.broadcast %cst_89 : f32 to vector<8x1xf32>
    %352 = arith.divf %350, %351 : vector<8x1xf32>
    %353 = vector.broadcast %352 : vector<8x1xf32> to vector<8x16xf32>
    %354 = arith.subf %348, %353 : vector<8x16xf32>
    %355 = arith.mulf %354, %354 : vector<8x16xf32>
    %cst_90 = arith.constant dense<0.000000e+00> : vector<8xf32>
    %356 = vector.multi_reduction <add>, %355, %cst_90 [1] : vector<8x16xf32> to vector<8xf32>
    %357 = vector.shape_cast %356 : vector<8xf32> to vector<8x1xf32>
    %cst_91 = arith.constant 1.600000e+01 : f32
    %358 = vector.broadcast %cst_91 : f32 to vector<8x1xf32>
    %359 = arith.divf %357, %358 : vector<8x1xf32>
    %360 = vector.broadcast %352 : vector<8x1xf32> to vector<8x16xf32>
    %361 = arith.subf %348, %360 : vector<8x16xf32>
    %cst_92 = arith.constant 9.99999974E-6 : f32
    %362 = vector.broadcast %cst_92 : f32 to vector<8x1xf32>
    %363 = arith.addf %359, %362 : vector<8x1xf32>
    %364 = math.rsqrt %363 : vector<8x1xf32>
    %365 = vector.broadcast %364 : vector<8x1xf32> to vector<8x16xf32>
    %366 = arith.mulf %361, %365 : vector<8x16xf32>
    %367 = tpu.concatenate %198, %254, %310, %366 in 1 : vector<8x16xf32>, vector<8x16xf32>, vector<8x16xf32>, vector<8x16xf32> -> vector<8x64xf32>
    %368 = vector.broadcast %14 : vector<1x64xf32> to vector<8x64xf32>
    %369 = arith.mulf %367, %368 : vector<8x64xf32>
    %370 = vector.broadcast %15 : vector<1x64xf32> to vector<8x64xf32>
    %371 = arith.mulf %370, %84 : vector<8x64xf32>
    %372 = arith.addf %369, %371 : vector<8x64xf32>
    %373 = arith.negf %40 : vector<8x64xf32>
    %374 = math.exp %373 : vector<8x64xf32>
    %cst_93 = arith.constant 1.000000e+00 : f32
    %375 = vector.broadcast %cst_93 : f32 to vector<8x64xf32>
    %376 = arith.addf %375, %374 : vector<8x64xf32>
    %377 = arith.divf %375, %376 : vector<8x64xf32>
    %378 = arith.mulf %40, %377 : vector<8x64xf32>
    %379 = arith.mulf %372, %378 : vector<8x64xf32>
    %380 = arith.truncf %379 : vector<8x64xf32> to vector<8x64xbf16>
    %cst_94 = arith.constant dense<0.000000e+00> : vector<8x32xf32>
    %381 = tpu.matmul %380, %16, %cst_94 {dimension_numbers = #tpu.dot_dimension_numbers<[1], [0], [0], [1], [0, 0, 1, 1], [], []>} : vector<8x64xbf16>, vector<64x32xbf16>, vector<8x32xf32> -> vector<8x32xf32>
    %382 = arith.addf %1, %381 : vector<8x32xf32>
    %c0_95 = arith.constant 0 : index
    %c0_96 = arith.constant 0 : index
    %383 = vector.load %arg12[%c0_95, %c0_96] : memref<1x32xf32, #tpu.memory_space<vmem>>, vector<1x32xf32>
    %c0_97 = arith.constant 0 : index
    %c0_98 = arith.constant 0 : index
    %384 = vector.load %arg13[%c0_97, %c0_98] : memref<32x128xbf16, #tpu.memory_space<vmem>>, vector<32x128xbf16>
    %c0_99 = arith.constant 0 : index
    %c0_100 = arith.constant 0 : index
    %385 = vector.load %arg14[%c0_99, %c0_100] : memref<4x64xf32, #tpu.memory_space<vmem>>, vector<4x64xf32>
    %c0_101 = arith.constant 0 : index
    %c0_102 = arith.constant 0 : index
    %386 = vector.load %arg15[%c0_101, %c0_102] : memref<1x64xf32, #tpu.memory_space<vmem>>, vector<1x64xf32>
    %c0_103 = arith.constant 0 : index
    %c0_104 = arith.constant 0 : index
    %387 = vector.load %arg16[%c0_103, %c0_104] : memref<64x136xbf16, #tpu.memory_space<vmem>>, vector<64x136xbf16>
    %c0_105 = arith.constant 0 : index
    %c0_106 = arith.constant 0 : index
    %388 = vector.load %arg17[%c0_105, %c0_106] : memref<64x72xbf16, #tpu.memory_space<vmem>>, vector<64x72xbf16>
    %c0_107 = arith.constant 0 : index
    %c0_108 = arith.constant 0 : index
    %389 = vector.load %arg18[%c0_107, %c0_108] : memref<1x8xf32, #tpu.memory_space<vmem>>, vector<1x8xf32>
    %c0_109 = arith.constant 0 : index
    %c0_110 = arith.constant 0 : index
    %390 = vector.load %arg19[%c0_109, %c0_110] : memref<1x64xf32, #tpu.memory_space<vmem>>, vector<1x64xf32>
    %c0_111 = arith.constant 0 : index
    %c0_112 = arith.constant 0 : index
    %391 = vector.load %arg20[%c0_111, %c0_112] : memref<1x64xf32, #tpu.memory_space<vmem>>, vector<1x64xf32>
    %c0_113 = arith.constant 0 : index
    %c0_114 = arith.constant 0 : index
    %392 = vector.load %arg21[%c0_113, %c0_114] : memref<64x32xbf16, #tpu.memory_space<vmem>>, vector<64x32xbf16>
    %cst_115 = arith.constant dense<0.000000e+00> : vector<8xf32>
    %393 = vector.multi_reduction <add>, %382, %cst_115 [1] : vector<8x32xf32> to vector<8xf32>
    %394 = vector.shape_cast %393 : vector<8xf32> to vector<8x1xf32>
    %cst_116 = arith.constant 3.200000e+01 : f32
    %395 = vector.broadcast %cst_116 : f32 to vector<8x1xf32>
    %396 = arith.divf %394, %395 : vector<8x1xf32>
    %397 = vector.broadcast %396 : vector<8x1xf32> to vector<8x32xf32>
    %398 = arith.subf %382, %397 : vector<8x32xf32>
    %399 = arith.mulf %398, %398 : vector<8x32xf32>
    %cst_117 = arith.constant dense<0.000000e+00> : vector<8xf32>
    %400 = vector.multi_reduction <add>, %399, %cst_117 [1] : vector<8x32xf32> to vector<8xf32>
    %401 = vector.shape_cast %400 : vector<8xf32> to vector<8x1xf32>
    %cst_118 = arith.constant 3.200000e+01 : f32
    %402 = vector.broadcast %cst_118 : f32 to vector<8x1xf32>
    %403 = arith.divf %401, %402 : vector<8x1xf32>
    %404 = vector.broadcast %396 : vector<8x1xf32> to vector<8x32xf32>
    %405 = arith.subf %382, %404 : vector<8x32xf32>
    %cst_119 = arith.constant 9.99999974E-6 : f32
    %406 = vector.broadcast %cst_119 : f32 to vector<8x1xf32>
    %407 = arith.addf %403, %406 : vector<8x1xf32>
    %408 = math.rsqrt %407 : vector<8x1xf32>
    %409 = vector.broadcast %408 : vector<8x1xf32> to vector<8x32xf32>
    %410 = arith.mulf %405, %409 : vector<8x32xf32>
    %411 = vector.broadcast %383 : vector<1x32xf32> to vector<8x32xf32>
    %412 = arith.mulf %410, %411 : vector<8x32xf32>
    %413 = arith.truncf %412 : vector<8x32xf32> to vector<8x32xbf16>
    %cst_120 = arith.constant dense<0.000000e+00> : vector<8x128xf32>
    %414 = tpu.matmul %413, %384, %cst_120 {dimension_numbers = #tpu.dot_dimension_numbers<[1], [0], [0], [1], [0, 0, 1, 1], [], []>} : vector<8x32xbf16>, vector<32x128xbf16>, vector<8x128xf32> -> vector<8x128xf32>
    %415 = vector.extract_strided_slice %414 {offsets = [0, 0], sizes = [8, 64], strides = [1, 1]} : vector<8x128xf32> to vector<8x64xf32>
    %416 = vector.extract_strided_slice %414 {offsets = [0, 64], sizes = [8, 64], strides = [1, 1]} : vector<8x128xf32> to vector<8x64xf32>
    %417 = vector.extract_strided_slice %385 {offsets = [3, 0], sizes = [1, 64], strides = [1, 1]} : vector<4x64xf32> to vector<1x64xf32>
    %418 = vector.broadcast %417 : vector<1x64xf32> to vector<8x64xf32>
    %419 = arith.mulf %415, %418 : vector<8x64xf32>
    %c3_i32_121 = arith.constant 3 : i32
    %420 = vector.broadcast %c3_i32_121 : i32 to vector<8x1xi32>
    %421 = arith.cmpi sge, %2, %420 : vector<8x1xi32>
    %c3_i32_122 = arith.constant 3 : i32
    %422 = tpu.dynamic_rotate %415 by %c3_i32_122 dim 0 : vector<8x64xf32>, i32 -> vector<8x64xf32>
    %cst_123 = arith.constant 0.000000e+00 : f32
    %423 = vector.shape_cast %421 : vector<8x1xi1> to vector<8x1xi1>
    %424 = vector.broadcast %423 : vector<8x1xi1> to vector<8x64xi1>
    %425 = vector.broadcast %cst_123 : f32 to vector<8x64xf32>
    %426 = arith.select %424, %422, %425 : vector<8x64xi1>, vector<8x64xf32>
    %427 = vector.extract_strided_slice %385 {offsets = [0, 0], sizes = [1, 64], strides = [1, 1]} : vector<4x64xf32> to vector<1x64xf32>
    %428 = vector.broadcast %427 : vector<1x64xf32> to vector<8x64xf32>
    %429 = arith.mulf %426, %428 : vector<8x64xf32>
    %430 = arith.addf %419, %429 : vector<8x64xf32>
    %c2_i32_124 = arith.constant 2 : i32
    %431 = vector.broadcast %c2_i32_124 : i32 to vector<8x1xi32>
    %432 = arith.cmpi sge, %2, %431 : vector<8x1xi32>
    %c2_i32_125 = arith.constant 2 : i32
    %433 = tpu.dynamic_rotate %415 by %c2_i32_125 dim 0 : vector<8x64xf32>, i32 -> vector<8x64xf32>
    %cst_126 = arith.constant 0.000000e+00 : f32
    %434 = vector.shape_cast %432 : vector<8x1xi1> to vector<8x1xi1>
    %435 = vector.broadcast %434 : vector<8x1xi1> to vector<8x64xi1>
    %436 = vector.broadcast %cst_126 : f32 to vector<8x64xf32>
    %437 = arith.select %435, %433, %436 : vector<8x64xi1>, vector<8x64xf32>
    %438 = vector.extract_strided_slice %385 {offsets = [1, 0], sizes = [1, 64], strides = [1, 1]} : vector<4x64xf32> to vector<1x64xf32>
    %439 = vector.broadcast %438 : vector<1x64xf32> to vector<8x64xf32>
    %440 = arith.mulf %437, %439 : vector<8x64xf32>
    %441 = arith.addf %430, %440 : vector<8x64xf32>
    %c1_i32_127 = arith.constant 1 : i32
    %442 = vector.broadcast %c1_i32_127 : i32 to vector<8x1xi32>
    %443 = arith.cmpi sge, %2, %442 : vector<8x1xi32>
    %c1_i32_128 = arith.constant 1 : i32
    %444 = tpu.dynamic_rotate %415 by %c1_i32_128 dim 0 : vector<8x64xf32>, i32 -> vector<8x64xf32>
    %cst_129 = arith.constant 0.000000e+00 : f32
    %445 = vector.shape_cast %443 : vector<8x1xi1> to vector<8x1xi1>
    %446 = vector.broadcast %445 : vector<8x1xi1> to vector<8x64xi1>
    %447 = vector.broadcast %cst_129 : f32 to vector<8x64xf32>
    %448 = arith.select %446, %444, %447 : vector<8x64xi1>, vector<8x64xf32>
    %449 = vector.extract_strided_slice %385 {offsets = [2, 0], sizes = [1, 64], strides = [1, 1]} : vector<4x64xf32> to vector<1x64xf32>
    %450 = vector.broadcast %449 : vector<1x64xf32> to vector<8x64xf32>
    %451 = arith.mulf %448, %450 : vector<8x64xf32>
    %452 = arith.addf %441, %451 : vector<8x64xf32>
    %453 = vector.broadcast %386 : vector<1x64xf32> to vector<8x64xf32>
    %454 = arith.addf %452, %453 : vector<8x64xf32>
    %455 = arith.negf %454 : vector<8x64xf32>
    %456 = math.exp %455 : vector<8x64xf32>
    %cst_130 = arith.constant 1.000000e+00 : f32
    %457 = vector.broadcast %cst_130 : f32 to vector<8x64xf32>
    %458 = arith.addf %457, %456 : vector<8x64xf32>
    %459 = arith.divf %457, %458 : vector<8x64xf32>
    %460 = arith.mulf %454, %459 : vector<8x64xf32>
    %461 = arith.truncf %460 : vector<8x64xf32> to vector<8x64xbf16>
    %cst_131 = arith.constant dense<0.000000e+00> : vector<8x136xf32>
    %462 = tpu.matmul %461, %387, %cst_131 {dimension_numbers = #tpu.dot_dimension_numbers<[1], [0], [0], [1], [0, 0, 1, 1], [], []>} : vector<8x64xbf16>, vector<64x136xbf16>, vector<8x136xf32> -> vector<8x136xf32>
    %463 = arith.truncf %415 : vector<8x64xf32> to vector<8x64xbf16>
    %cst_132 = arith.constant dense<0.000000e+00> : vector<8x72xf32>
    %464 = tpu.matmul %463, %388, %cst_132 {dimension_numbers = #tpu.dot_dimension_numbers<[1], [0], [0], [1], [0, 0, 1, 1], [], []>} : vector<8x64xbf16>, vector<64x72xbf16>, vector<8x72xf32> -> vector<8x72xf32>
    %465 = vector.extract_strided_slice %462 {offsets = [0, 0], sizes = [8, 64], strides = [1, 1]} : vector<8x136xf32> to vector<8x64xf32>
    %466 = vector.extract_strided_slice %462 {offsets = [0, 64], sizes = [8, 64], strides = [1, 1]} : vector<8x136xf32> to vector<8x64xf32>
    %467 = vector.extract_strided_slice %464 {offsets = [0, 0], sizes = [8, 64], strides = [1, 1]} : vector<8x72xf32> to vector<8x64xf32>
    %468 = vector.extract_strided_slice %462 {offsets = [0, 128], sizes = [8, 8], strides = [1, 1]} : vector<8x136xf32> to vector<8x8xf32>
    %469 = vector.extract_strided_slice %464 {offsets = [0, 64], sizes = [8, 8], strides = [1, 1]} : vector<8x72xf32> to vector<8x8xf32>
    %470 = arith.addf %468, %469 : vector<8x8xf32>
    %471 = vector.broadcast %389 : vector<1x8xf32> to vector<8x8xf32>
    %472 = arith.addf %470, %471 : vector<8x8xf32>
    %473 = vector.extract_strided_slice %472 {offsets = [0, 0], sizes = [8, 4], strides = [1, 1]} : vector<8x8xf32> to vector<8x4xf32>
    %474 = vector.extract_strided_slice %472 {offsets = [0, 4], sizes = [8, 4], strides = [1, 1]} : vector<8x8xf32> to vector<8x4xf32>
    %cst_133 = arith.constant 0.000000e+00 : f32
    %475 = vector.broadcast %cst_133 : f32 to vector<8x4xf32>
    %476 = arith.subf %475, %474 : vector<8x4xf32>
    %cst_134 = arith.constant 0.000000e+00 : f32
    %477 = vector.broadcast %cst_134 : f32 to vector<8x4xf32>
    %478 = arith.maximumf %476, %477 : vector<8x4xf32>
    %479 = vector.broadcast %cst_134 : f32 to vector<8x4xf32>
    %480 = arith.subf %476, %479 : vector<8x4xf32>
    %481 = arith.cmpf one, %480, %480 : vector<8x4xf32>
    %482 = vector.broadcast %cst_134 : f32 to vector<8x4xf32>
    %483 = arith.addf %476, %482 : vector<8x4xf32>
    %484 = math.absf %480 : vector<8x4xf32>
    %cst_135 = arith.constant 0.000000e+00 : f32
    %485 = vector.broadcast %cst_135 : f32 to vector<8x4xf32>
    %486 = arith.subf %485, %484 : vector<8x4xf32>
    %487 = math.exp %486 : vector<8x4xf32>
    %488 = math.log1p %487 : vector<8x4xf32>
    %489 = arith.addf %478, %488 : vector<8x4xf32>
    %490 = arith.select %481, %483, %489 : vector<8x4xi1>, vector<8x4xf32>
    %cst_136 = arith.constant 0.000000e+00 : f32
    %491 = vector.broadcast %cst_136 : f32 to vector<8x4xf32>
    %492 = arith.subf %491, %490 : vector<8x4xf32>
    %c1_i32_137 = arith.constant 1 : i32
    %493 = vector.broadcast %c1_i32_137 : i32 to vector<8x1xi32>
    %494 = arith.cmpi sge, %2, %493 : vector<8x1xi32>
    %c1_i32_138 = arith.constant 1 : i32
    %495 = tpu.dynamic_rotate %492 by %c1_i32_138 dim 0 : vector<8x4xf32>, i32 -> vector<8x4xf32>
    %cst_139 = arith.constant 0.000000e+00 : f32
    %496 = vector.shape_cast %494 : vector<8x1xi1> to vector<8x1xi1>
    %497 = vector.broadcast %496 : vector<8x1xi1> to vector<8x4xi1>
    %498 = vector.broadcast %cst_139 : f32 to vector<8x4xf32>
    %499 = arith.select %497, %495, %498 : vector<8x4xi1>, vector<8x4xf32>
    %500 = arith.addf %492, %499 : vector<8x4xf32>
    %c2_i32_140 = arith.constant 2 : i32
    %501 = vector.broadcast %c2_i32_140 : i32 to vector<8x1xi32>
    %502 = arith.cmpi sge, %2, %501 : vector<8x1xi32>
    %c2_i32_141 = arith.constant 2 : i32
    %503 = tpu.dynamic_rotate %500 by %c2_i32_141 dim 0 : vector<8x4xf32>, i32 -> vector<8x4xf32>
    %cst_142 = arith.constant 0.000000e+00 : f32
    %504 = vector.shape_cast %502 : vector<8x1xi1> to vector<8x1xi1>
    %505 = vector.broadcast %504 : vector<8x1xi1> to vector<8x4xi1>
    %506 = vector.broadcast %cst_142 : f32 to vector<8x4xf32>
    %507 = arith.select %505, %503, %506 : vector<8x4xi1>, vector<8x4xf32>
    %508 = arith.addf %500, %507 : vector<8x4xf32>
    %c4_i32_143 = arith.constant 4 : i32
    %509 = vector.broadcast %c4_i32_143 : i32 to vector<8x1xi32>
    %510 = arith.cmpi sge, %2, %509 : vector<8x1xi32>
    %c4_i32_144 = arith.constant 4 : i32
    %511 = tpu.dynamic_rotate %508 by %c4_i32_144 dim 0 : vector<8x4xf32>, i32 -> vector<8x4xf32>
    %cst_145 = arith.constant 0.000000e+00 : f32
    %512 = vector.shape_cast %510 : vector<8x1xi1> to vector<8x1xi1>
    %513 = vector.broadcast %512 : vector<8x1xi1> to vector<8x4xi1>
    %514 = vector.broadcast %cst_145 : f32 to vector<8x4xf32>
    %515 = arith.select %513, %511, %514 : vector<8x4xi1>, vector<8x4xf32>
    %516 = arith.addf %508, %515 : vector<8x4xf32>
    %517 = tpu.transpose %516, [1, 0] : vector<8x4xf32> -> vector<4x8xf32>
    %518 = tpu.transpose %473, [1, 0] : vector<8x4xf32> -> vector<4x8xf32>
    %519 = vector.extract_strided_slice %465 {offsets = [0, 0], sizes = [8, 16], strides = [1, 1]} : vector<8x64xf32> to vector<8x16xf32>
    %520 = arith.truncf %519 : vector<8x16xf32> to vector<8x16xbf16>
    %521 = vector.extract_strided_slice %466 {offsets = [0, 0], sizes = [8, 16], strides = [1, 1]} : vector<8x64xf32> to vector<8x16xf32>
    %522 = arith.truncf %521 : vector<8x16xf32> to vector<8x16xbf16>
    %523 = vector.extract_strided_slice %467 {offsets = [0, 0], sizes = [8, 16], strides = [1, 1]} : vector<8x64xf32> to vector<8x16xf32>
    %524 = vector.extract_strided_slice %516 {offsets = [0, 0], sizes = [8, 1], strides = [1, 1]} : vector<8x4xf32> to vector<8x1xf32>
    %525 = vector.extract_strided_slice %517 {offsets = [0, 0], sizes = [1, 8], strides = [1, 1]} : vector<4x8xf32> to vector<1x8xf32>
    %526 = vector.broadcast %524 : vector<8x1xf32> to vector<8x8xf32>
    %527 = vector.broadcast %525 : vector<1x8xf32> to vector<8x8xf32>
    %528 = arith.subf %526, %527 : vector<8x8xf32>
    %cst_146 = arith.constant 0xFF800000 : f32
    %529 = vector.broadcast %cst_146 : f32 to vector<8x8xf32>
    %530 = arith.select %5, %528, %529 : vector<8x8xi1>, vector<8x8xf32>
    %531 = vector.extract_strided_slice %518 {offsets = [0, 0], sizes = [1, 8], strides = [1, 1]} : vector<4x8xf32> to vector<1x8xf32>
    %532 = vector.broadcast %531 : vector<1x8xf32> to vector<8x8xf32>
    %533 = arith.addf %530, %532 : vector<8x8xf32>
    %cst_147 = arith.constant dense<0xFF800000> : vector<8xf32>
    %534 = vector.multi_reduction <maximumf>, %533, %cst_147 [1] : vector<8x8xf32> to vector<8xf32>
    %535 = vector.shape_cast %534 : vector<8xf32> to vector<8x1xf32>
    %536 = vector.broadcast %535 : vector<8x1xf32> to vector<8x8xf32>
    %537 = arith.subf %533, %536 : vector<8x8xf32>
    %538 = math.exp %537 : vector<8x8xf32>
    %cst_148 = arith.constant dense<0.000000e+00> : vector<8x8xf32>
    %539 = tpu.matmul %520, %522, %cst_148 {dimension_numbers = #tpu.dot_dimension_numbers<[1], [1], [0], [0], [0, 0, 1, 0], [], []>} : vector<8x16xbf16>, vector<8x16xbf16>, vector<8x8xf32> -> vector<8x8xf32>
    %540 = arith.mulf %539, %538 : vector<8x8xf32>
    %541 = tpu.concatenate %523, %6 in 1 : vector<8x16xf32>, vector<8x1xf32> -> vector<8x17xf32>
    %542 = arith.truncf %541 : vector<8x17xf32> to vector<8x17xbf16>
    %543 = arith.truncf %540 : vector<8x8xf32> to vector<8x8xbf16>
    %cst_149 = arith.constant dense<0.000000e+00> : vector<8x17xf32>
    %544 = tpu.matmul %543, %542, %cst_149 {dimension_numbers = #tpu.dot_dimension_numbers<[1], [0], [0], [1], [0, 0, 1, 1], [], []>} : vector<8x8xbf16>, vector<8x17xbf16>, vector<8x17xf32> -> vector<8x17xf32>
    %545 = vector.extract_strided_slice %544 {offsets = [0, 16], sizes = [8, 1], strides = [1, 1]} : vector<8x17xf32> to vector<8x1xf32>
    %546 = math.absf %545 : vector<8x1xf32>
    %cst_150 = arith.constant 0.000000e+00 : f32
    %547 = vector.broadcast %cst_150 : f32 to vector<8x1xf32>
    %548 = arith.subf %547, %535 : vector<8x1xf32>
    %549 = math.exp %548 : vector<8x1xf32>
    %550 = arith.maximumf %546, %549 : vector<8x1xf32>
    %cst_151 = arith.constant 9.99999997E-7 : f32
    %551 = vector.broadcast %cst_151 : f32 to vector<8x1xf32>
    %552 = arith.addf %550, %551 : vector<8x1xf32>
    %553 = tpu.reciprocal %552 {approx = true} : vector<8x1xf32> -> vector<8x1xf32>
    %554 = vector.extract_strided_slice %544 {offsets = [0, 0], sizes = [8, 16], strides = [1, 1]} : vector<8x17xf32> to vector<8x16xf32>
    %555 = vector.broadcast %553 : vector<8x1xf32> to vector<8x16xf32>
    %556 = arith.mulf %554, %555 : vector<8x16xf32>
    %cst_152 = arith.constant dense<0.000000e+00> : vector<8xf32>
    %557 = vector.multi_reduction <add>, %556, %cst_152 [1] : vector<8x16xf32> to vector<8xf32>
    %558 = vector.shape_cast %557 : vector<8xf32> to vector<8x1xf32>
    %cst_153 = arith.constant 1.600000e+01 : f32
    %559 = vector.broadcast %cst_153 : f32 to vector<8x1xf32>
    %560 = arith.divf %558, %559 : vector<8x1xf32>
    %561 = vector.broadcast %560 : vector<8x1xf32> to vector<8x16xf32>
    %562 = arith.subf %556, %561 : vector<8x16xf32>
    %563 = arith.mulf %562, %562 : vector<8x16xf32>
    %cst_154 = arith.constant dense<0.000000e+00> : vector<8xf32>
    %564 = vector.multi_reduction <add>, %563, %cst_154 [1] : vector<8x16xf32> to vector<8xf32>
    %565 = vector.shape_cast %564 : vector<8xf32> to vector<8x1xf32>
    %cst_155 = arith.constant 1.600000e+01 : f32
    %566 = vector.broadcast %cst_155 : f32 to vector<8x1xf32>
    %567 = arith.divf %565, %566 : vector<8x1xf32>
    %568 = vector.broadcast %560 : vector<8x1xf32> to vector<8x16xf32>
    %569 = arith.subf %556, %568 : vector<8x16xf32>
    %cst_156 = arith.constant 9.99999974E-6 : f32
    %570 = vector.broadcast %cst_156 : f32 to vector<8x1xf32>
    %571 = arith.addf %567, %570 : vector<8x1xf32>
    %572 = math.rsqrt %571 : vector<8x1xf32>
    %573 = vector.broadcast %572 : vector<8x1xf32> to vector<8x16xf32>
    %574 = arith.mulf %569, %573 : vector<8x16xf32>
    %575 = vector.extract_strided_slice %465 {offsets = [0, 16], sizes = [8, 16], strides = [1, 1]} : vector<8x64xf32> to vector<8x16xf32>
    %576 = arith.truncf %575 : vector<8x16xf32> to vector<8x16xbf16>
    %577 = vector.extract_strided_slice %466 {offsets = [0, 16], sizes = [8, 16], strides = [1, 1]} : vector<8x64xf32> to vector<8x16xf32>
    %578 = arith.truncf %577 : vector<8x16xf32> to vector<8x16xbf16>
    %579 = vector.extract_strided_slice %467 {offsets = [0, 16], sizes = [8, 16], strides = [1, 1]} : vector<8x64xf32> to vector<8x16xf32>
    %580 = vector.extract_strided_slice %516 {offsets = [0, 1], sizes = [8, 1], strides = [1, 1]} : vector<8x4xf32> to vector<8x1xf32>
    %581 = vector.extract_strided_slice %517 {offsets = [1, 0], sizes = [1, 8], strides = [1, 1]} : vector<4x8xf32> to vector<1x8xf32>
    %582 = vector.broadcast %580 : vector<8x1xf32> to vector<8x8xf32>
    %583 = vector.broadcast %581 : vector<1x8xf32> to vector<8x8xf32>
    %584 = arith.subf %582, %583 : vector<8x8xf32>
    %cst_157 = arith.constant 0xFF800000 : f32
    %585 = vector.broadcast %cst_157 : f32 to vector<8x8xf32>
    %586 = arith.select %5, %584, %585 : vector<8x8xi1>, vector<8x8xf32>
    %587 = vector.extract_strided_slice %518 {offsets = [1, 0], sizes = [1, 8], strides = [1, 1]} : vector<4x8xf32> to vector<1x8xf32>
    %588 = vector.broadcast %587 : vector<1x8xf32> to vector<8x8xf32>
    %589 = arith.addf %586, %588 : vector<8x8xf32>
    %cst_158 = arith.constant dense<0xFF800000> : vector<8xf32>
    %590 = vector.multi_reduction <maximumf>, %589, %cst_158 [1] : vector<8x8xf32> to vector<8xf32>
    %591 = vector.shape_cast %590 : vector<8xf32> to vector<8x1xf32>
    %592 = vector.broadcast %591 : vector<8x1xf32> to vector<8x8xf32>
    %593 = arith.subf %589, %592 : vector<8x8xf32>
    %594 = math.exp %593 : vector<8x8xf32>
    %cst_159 = arith.constant dense<0.000000e+00> : vector<8x8xf32>
    %595 = tpu.matmul %576, %578, %cst_159 {dimension_numbers = #tpu.dot_dimension_numbers<[1], [1], [0], [0], [0, 0, 1, 0], [], []>} : vector<8x16xbf16>, vector<8x16xbf16>, vector<8x8xf32> -> vector<8x8xf32>
    %596 = arith.mulf %595, %594 : vector<8x8xf32>
    %597 = tpu.concatenate %579, %6 in 1 : vector<8x16xf32>, vector<8x1xf32> -> vector<8x17xf32>
    %598 = arith.truncf %597 : vector<8x17xf32> to vector<8x17xbf16>
    %599 = arith.truncf %596 : vector<8x8xf32> to vector<8x8xbf16>
    %cst_160 = arith.constant dense<0.000000e+00> : vector<8x17xf32>
    %600 = tpu.matmul %599, %598, %cst_160 {dimension_numbers = #tpu.dot_dimension_numbers<[1], [0], [0], [1], [0, 0, 1, 1], [], []>} : vector<8x8xbf16>, vector<8x17xbf16>, vector<8x17xf32> -> vector<8x17xf32>
    %601 = vector.extract_strided_slice %600 {offsets = [0, 16], sizes = [8, 1], strides = [1, 1]} : vector<8x17xf32> to vector<8x1xf32>
    %602 = math.absf %601 : vector<8x1xf32>
    %cst_161 = arith.constant 0.000000e+00 : f32
    %603 = vector.broadcast %cst_161 : f32 to vector<8x1xf32>
    %604 = arith.subf %603, %591 : vector<8x1xf32>
    %605 = math.exp %604 : vector<8x1xf32>
    %606 = arith.maximumf %602, %605 : vector<8x1xf32>
    %cst_162 = arith.constant 9.99999997E-7 : f32
    %607 = vector.broadcast %cst_162 : f32 to vector<8x1xf32>
    %608 = arith.addf %606, %607 : vector<8x1xf32>
    %609 = tpu.reciprocal %608 {approx = true} : vector<8x1xf32> -> vector<8x1xf32>
    %610 = vector.extract_strided_slice %600 {offsets = [0, 0], sizes = [8, 16], strides = [1, 1]} : vector<8x17xf32> to vector<8x16xf32>
    %611 = vector.broadcast %609 : vector<8x1xf32> to vector<8x16xf32>
    %612 = arith.mulf %610, %611 : vector<8x16xf32>
    %cst_163 = arith.constant dense<0.000000e+00> : vector<8xf32>
    %613 = vector.multi_reduction <add>, %612, %cst_163 [1] : vector<8x16xf32> to vector<8xf32>
    %614 = vector.shape_cast %613 : vector<8xf32> to vector<8x1xf32>
    %cst_164 = arith.constant 1.600000e+01 : f32
    %615 = vector.broadcast %cst_164 : f32 to vector<8x1xf32>
    %616 = arith.divf %614, %615 : vector<8x1xf32>
    %617 = vector.broadcast %616 : vector<8x1xf32> to vector<8x16xf32>
    %618 = arith.subf %612, %617 : vector<8x16xf32>
    %619 = arith.mulf %618, %618 : vector<8x16xf32>
    %cst_165 = arith.constant dense<0.000000e+00> : vector<8xf32>
    %620 = vector.multi_reduction <add>, %619, %cst_165 [1] : vector<8x16xf32> to vector<8xf32>
    %621 = vector.shape_cast %620 : vector<8xf32> to vector<8x1xf32>
    %cst_166 = arith.constant 1.600000e+01 : f32
    %622 = vector.broadcast %cst_166 : f32 to vector<8x1xf32>
    %623 = arith.divf %621, %622 : vector<8x1xf32>
    %624 = vector.broadcast %616 : vector<8x1xf32> to vector<8x16xf32>
    %625 = arith.subf %612, %624 : vector<8x16xf32>
    %cst_167 = arith.constant 9.99999974E-6 : f32
    %626 = vector.broadcast %cst_167 : f32 to vector<8x1xf32>
    %627 = arith.addf %623, %626 : vector<8x1xf32>
    %628 = math.rsqrt %627 : vector<8x1xf32>
    %629 = vector.broadcast %628 : vector<8x1xf32> to vector<8x16xf32>
    %630 = arith.mulf %625, %629 : vector<8x16xf32>
    %631 = vector.extract_strided_slice %465 {offsets = [0, 32], sizes = [8, 16], strides = [1, 1]} : vector<8x64xf32> to vector<8x16xf32>
    %632 = arith.truncf %631 : vector<8x16xf32> to vector<8x16xbf16>
    %633 = vector.extract_strided_slice %466 {offsets = [0, 32], sizes = [8, 16], strides = [1, 1]} : vector<8x64xf32> to vector<8x16xf32>
    %634 = arith.truncf %633 : vector<8x16xf32> to vector<8x16xbf16>
    %635 = vector.extract_strided_slice %467 {offsets = [0, 32], sizes = [8, 16], strides = [1, 1]} : vector<8x64xf32> to vector<8x16xf32>
    %636 = vector.extract_strided_slice %516 {offsets = [0, 2], sizes = [8, 1], strides = [1, 1]} : vector<8x4xf32> to vector<8x1xf32>
    %637 = vector.extract_strided_slice %517 {offsets = [2, 0], sizes = [1, 8], strides = [1, 1]} : vector<4x8xf32> to vector<1x8xf32>
    %638 = vector.broadcast %636 : vector<8x1xf32> to vector<8x8xf32>
    %639 = vector.broadcast %637 : vector<1x8xf32> to vector<8x8xf32>
    %640 = arith.subf %638, %639 : vector<8x8xf32>
    %cst_168 = arith.constant 0xFF800000 : f32
    %641 = vector.broadcast %cst_168 : f32 to vector<8x8xf32>
    %642 = arith.select %5, %640, %641 : vector<8x8xi1>, vector<8x8xf32>
    %643 = vector.extract_strided_slice %518 {offsets = [2, 0], sizes = [1, 8], strides = [1, 1]} : vector<4x8xf32> to vector<1x8xf32>
    %644 = vector.broadcast %643 : vector<1x8xf32> to vector<8x8xf32>
    %645 = arith.addf %642, %644 : vector<8x8xf32>
    %cst_169 = arith.constant dense<0xFF800000> : vector<8xf32>
    %646 = vector.multi_reduction <maximumf>, %645, %cst_169 [1] : vector<8x8xf32> to vector<8xf32>
    %647 = vector.shape_cast %646 : vector<8xf32> to vector<8x1xf32>
    %648 = vector.broadcast %647 : vector<8x1xf32> to vector<8x8xf32>
    %649 = arith.subf %645, %648 : vector<8x8xf32>
    %650 = math.exp %649 : vector<8x8xf32>
    %cst_170 = arith.constant dense<0.000000e+00> : vector<8x8xf32>
    %651 = tpu.matmul %632, %634, %cst_170 {dimension_numbers = #tpu.dot_dimension_numbers<[1], [1], [0], [0], [0, 0, 1, 0], [], []>} : vector<8x16xbf16>, vector<8x16xbf16>, vector<8x8xf32> -> vector<8x8xf32>
    %652 = arith.mulf %651, %650 : vector<8x8xf32>
    %653 = tpu.concatenate %635, %6 in 1 : vector<8x16xf32>, vector<8x1xf32> -> vector<8x17xf32>
    %654 = arith.truncf %653 : vector<8x17xf32> to vector<8x17xbf16>
    %655 = arith.truncf %652 : vector<8x8xf32> to vector<8x8xbf16>
    %cst_171 = arith.constant dense<0.000000e+00> : vector<8x17xf32>
    %656 = tpu.matmul %655, %654, %cst_171 {dimension_numbers = #tpu.dot_dimension_numbers<[1], [0], [0], [1], [0, 0, 1, 1], [], []>} : vector<8x8xbf16>, vector<8x17xbf16>, vector<8x17xf32> -> vector<8x17xf32>
    %657 = vector.extract_strided_slice %656 {offsets = [0, 16], sizes = [8, 1], strides = [1, 1]} : vector<8x17xf32> to vector<8x1xf32>
    %658 = math.absf %657 : vector<8x1xf32>
    %cst_172 = arith.constant 0.000000e+00 : f32
    %659 = vector.broadcast %cst_172 : f32 to vector<8x1xf32>
    %660 = arith.subf %659, %647 : vector<8x1xf32>
    %661 = math.exp %660 : vector<8x1xf32>
    %662 = arith.maximumf %658, %661 : vector<8x1xf32>
    %cst_173 = arith.constant 9.99999997E-7 : f32
    %663 = vector.broadcast %cst_173 : f32 to vector<8x1xf32>
    %664 = arith.addf %662, %663 : vector<8x1xf32>
    %665 = tpu.reciprocal %664 {approx = true} : vector<8x1xf32> -> vector<8x1xf32>
    %666 = vector.extract_strided_slice %656 {offsets = [0, 0], sizes = [8, 16], strides = [1, 1]} : vector<8x17xf32> to vector<8x16xf32>
    %667 = vector.broadcast %665 : vector<8x1xf32> to vector<8x16xf32>
    %668 = arith.mulf %666, %667 : vector<8x16xf32>
    %cst_174 = arith.constant dense<0.000000e+00> : vector<8xf32>
    %669 = vector.multi_reduction <add>, %668, %cst_174 [1] : vector<8x16xf32> to vector<8xf32>
    %670 = vector.shape_cast %669 : vector<8xf32> to vector<8x1xf32>
    %cst_175 = arith.constant 1.600000e+01 : f32
    %671 = vector.broadcast %cst_175 : f32 to vector<8x1xf32>
    %672 = arith.divf %670, %671 : vector<8x1xf32>
    %673 = vector.broadcast %672 : vector<8x1xf32> to vector<8x16xf32>
    %674 = arith.subf %668, %673 : vector<8x16xf32>
    %675 = arith.mulf %674, %674 : vector<8x16xf32>
    %cst_176 = arith.constant dense<0.000000e+00> : vector<8xf32>
    %676 = vector.multi_reduction <add>, %675, %cst_176 [1] : vector<8x16xf32> to vector<8xf32>
    %677 = vector.shape_cast %676 : vector<8xf32> to vector<8x1xf32>
    %cst_177 = arith.constant 1.600000e+01 : f32
    %678 = vector.broadcast %cst_177 : f32 to vector<8x1xf32>
    %679 = arith.divf %677, %678 : vector<8x1xf32>
    %680 = vector.broadcast %672 : vector<8x1xf32> to vector<8x16xf32>
    %681 = arith.subf %668, %680 : vector<8x16xf32>
    %cst_178 = arith.constant 9.99999974E-6 : f32
    %682 = vector.broadcast %cst_178 : f32 to vector<8x1xf32>
    %683 = arith.addf %679, %682 : vector<8x1xf32>
    %684 = math.rsqrt %683 : vector<8x1xf32>
    %685 = vector.broadcast %684 : vector<8x1xf32> to vector<8x16xf32>
    %686 = arith.mulf %681, %685 : vector<8x16xf32>
    %687 = vector.extract_strided_slice %465 {offsets = [0, 48], sizes = [8, 16], strides = [1, 1]} : vector<8x64xf32> to vector<8x16xf32>
    %688 = arith.truncf %687 : vector<8x16xf32> to vector<8x16xbf16>
    %689 = vector.extract_strided_slice %466 {offsets = [0, 48], sizes = [8, 16], strides = [1, 1]} : vector<8x64xf32> to vector<8x16xf32>
    %690 = arith.truncf %689 : vector<8x16xf32> to vector<8x16xbf16>
    %691 = vector.extract_strided_slice %467 {offsets = [0, 48], sizes = [8, 16], strides = [1, 1]} : vector<8x64xf32> to vector<8x16xf32>
    %692 = vector.extract_strided_slice %516 {offsets = [0, 3], sizes = [8, 1], strides = [1, 1]} : vector<8x4xf32> to vector<8x1xf32>
    %693 = vector.extract_strided_slice %517 {offsets = [3, 0], sizes = [1, 8], strides = [1, 1]} : vector<4x8xf32> to vector<1x8xf32>
    %694 = vector.broadcast %692 : vector<8x1xf32> to vector<8x8xf32>
    %695 = vector.broadcast %693 : vector<1x8xf32> to vector<8x8xf32>
    %696 = arith.subf %694, %695 : vector<8x8xf32>
    %cst_179 = arith.constant 0xFF800000 : f32
    %697 = vector.broadcast %cst_179 : f32 to vector<8x8xf32>
    %698 = arith.select %5, %696, %697 : vector<8x8xi1>, vector<8x8xf32>
    %699 = vector.extract_strided_slice %518 {offsets = [3, 0], sizes = [1, 8], strides = [1, 1]} : vector<4x8xf32> to vector<1x8xf32>
    %700 = vector.broadcast %699 : vector<1x8xf32> to vector<8x8xf32>
    %701 = arith.addf %698, %700 : vector<8x8xf32>
    %cst_180 = arith.constant dense<0xFF800000> : vector<8xf32>
    %702 = vector.multi_reduction <maximumf>, %701, %cst_180 [1] : vector<8x8xf32> to vector<8xf32>
    %703 = vector.shape_cast %702 : vector<8xf32> to vector<8x1xf32>
    %704 = vector.broadcast %703 : vector<8x1xf32> to vector<8x8xf32>
    %705 = arith.subf %701, %704 : vector<8x8xf32>
    %706 = math.exp %705 : vector<8x8xf32>
    %cst_181 = arith.constant dense<0.000000e+00> : vector<8x8xf32>
    %707 = tpu.matmul %688, %690, %cst_181 {dimension_numbers = #tpu.dot_dimension_numbers<[1], [1], [0], [0], [0, 0, 1, 0], [], []>} : vector<8x16xbf16>, vector<8x16xbf16>, vector<8x8xf32> -> vector<8x8xf32>
    %708 = arith.mulf %707, %706 : vector<8x8xf32>
    %709 = tpu.concatenate %691, %6 in 1 : vector<8x16xf32>, vector<8x1xf32> -> vector<8x17xf32>
    %710 = arith.truncf %709 : vector<8x17xf32> to vector<8x17xbf16>
    %711 = arith.truncf %708 : vector<8x8xf32> to vector<8x8xbf16>
    %cst_182 = arith.constant dense<0.000000e+00> : vector<8x17xf32>
    %712 = tpu.matmul %711, %710, %cst_182 {dimension_numbers = #tpu.dot_dimension_numbers<[1], [0], [0], [1], [0, 0, 1, 1], [], []>} : vector<8x8xbf16>, vector<8x17xbf16>, vector<8x17xf32> -> vector<8x17xf32>
    %713 = vector.extract_strided_slice %712 {offsets = [0, 16], sizes = [8, 1], strides = [1, 1]} : vector<8x17xf32> to vector<8x1xf32>
    %714 = math.absf %713 : vector<8x1xf32>
    %cst_183 = arith.constant 0.000000e+00 : f32
    %715 = vector.broadcast %cst_183 : f32 to vector<8x1xf32>
    %716 = arith.subf %715, %703 : vector<8x1xf32>
    %717 = math.exp %716 : vector<8x1xf32>
    %718 = arith.maximumf %714, %717 : vector<8x1xf32>
    %cst_184 = arith.constant 9.99999997E-7 : f32
    %719 = vector.broadcast %cst_184 : f32 to vector<8x1xf32>
    %720 = arith.addf %718, %719 : vector<8x1xf32>
    %721 = tpu.reciprocal %720 {approx = true} : vector<8x1xf32> -> vector<8x1xf32>
    %722 = vector.extract_strided_slice %712 {offsets = [0, 0], sizes = [8, 16], strides = [1, 1]} : vector<8x17xf32> to vector<8x16xf32>
    %723 = vector.broadcast %721 : vector<8x1xf32> to vector<8x16xf32>
    %724 = arith.mulf %722, %723 : vector<8x16xf32>
    %cst_185 = arith.constant dense<0.000000e+00> : vector<8xf32>
    %725 = vector.multi_reduction <add>, %724, %cst_185 [1] : vector<8x16xf32> to vector<8xf32>
    %726 = vector.shape_cast %725 : vector<8xf32> to vector<8x1xf32>
    %cst_186 = arith.constant 1.600000e+01 : f32
    %727 = vector.broadcast %cst_186 : f32 to vector<8x1xf32>
    %728 = arith.divf %726, %727 : vector<8x1xf32>
    %729 = vector.broadcast %728 : vector<8x1xf32> to vector<8x16xf32>
    %730 = arith.subf %724, %729 : vector<8x16xf32>
    %731 = arith.mulf %730, %730 : vector<8x16xf32>
    %cst_187 = arith.constant dense<0.000000e+00> : vector<8xf32>
    %732 = vector.multi_reduction <add>, %731, %cst_187 [1] : vector<8x16xf32> to vector<8xf32>
    %733 = vector.shape_cast %732 : vector<8xf32> to vector<8x1xf32>
    %cst_188 = arith.constant 1.600000e+01 : f32
    %734 = vector.broadcast %cst_188 : f32 to vector<8x1xf32>
    %735 = arith.divf %733, %734 : vector<8x1xf32>
    %736 = vector.broadcast %728 : vector<8x1xf32> to vector<8x16xf32>
    %737 = arith.subf %724, %736 : vector<8x16xf32>
    %cst_189 = arith.constant 9.99999974E-6 : f32
    %738 = vector.broadcast %cst_189 : f32 to vector<8x1xf32>
    %739 = arith.addf %735, %738 : vector<8x1xf32>
    %740 = math.rsqrt %739 : vector<8x1xf32>
    %741 = vector.broadcast %740 : vector<8x1xf32> to vector<8x16xf32>
    %742 = arith.mulf %737, %741 : vector<8x16xf32>
    %743 = tpu.concatenate %574, %630, %686, %742 in 1 : vector<8x16xf32>, vector<8x16xf32>, vector<8x16xf32>, vector<8x16xf32> -> vector<8x64xf32>
    %744 = vector.broadcast %390 : vector<1x64xf32> to vector<8x64xf32>
    %745 = arith.mulf %743, %744 : vector<8x64xf32>
    %746 = vector.broadcast %391 : vector<1x64xf32> to vector<8x64xf32>
    %747 = arith.mulf %746, %460 : vector<8x64xf32>
    %748 = arith.addf %745, %747 : vector<8x64xf32>
    %749 = arith.negf %416 : vector<8x64xf32>
    %750 = math.exp %749 : vector<8x64xf32>
    %cst_190 = arith.constant 1.000000e+00 : f32
    %751 = vector.broadcast %cst_190 : f32 to vector<8x64xf32>
    %752 = arith.addf %751, %750 : vector<8x64xf32>
    %753 = arith.divf %751, %752 : vector<8x64xf32>
    %754 = arith.mulf %416, %753 : vector<8x64xf32>
    %755 = arith.mulf %748, %754 : vector<8x64xf32>
    %756 = arith.truncf %755 : vector<8x64xf32> to vector<8x64xbf16>
    %cst_191 = arith.constant dense<0.000000e+00> : vector<8x32xf32>
    %757 = tpu.matmul %756, %392, %cst_191 {dimension_numbers = #tpu.dot_dimension_numbers<[1], [0], [0], [1], [0, 0, 1, 1], [], []>} : vector<8x64xbf16>, vector<64x32xbf16>, vector<8x32xf32> -> vector<8x32xf32>
    %758 = arith.addf %382, %757 : vector<8x32xf32>
    %c0_192 = arith.constant 0 : index
    %c0_193 = arith.constant 0 : index
    %759 = vector.load %arg22[%c0_192, %c0_193] : memref<1x32xf32, #tpu.memory_space<vmem>>, vector<1x32xf32>
    %cst_194 = arith.constant dense<0.000000e+00> : vector<8xf32>
    %760 = vector.multi_reduction <add>, %758, %cst_194 [1] : vector<8x32xf32> to vector<8xf32>
    %761 = vector.shape_cast %760 : vector<8xf32> to vector<8x1xf32>
    %cst_195 = arith.constant 3.200000e+01 : f32
    %762 = vector.broadcast %cst_195 : f32 to vector<8x1xf32>
    %763 = arith.divf %761, %762 : vector<8x1xf32>
    %764 = vector.broadcast %763 : vector<8x1xf32> to vector<8x32xf32>
    %765 = arith.subf %758, %764 : vector<8x32xf32>
    %766 = arith.mulf %765, %765 : vector<8x32xf32>
    %cst_196 = arith.constant dense<0.000000e+00> : vector<8xf32>
    %767 = vector.multi_reduction <add>, %766, %cst_196 [1] : vector<8x32xf32> to vector<8xf32>
    %768 = vector.shape_cast %767 : vector<8xf32> to vector<8x1xf32>
    %cst_197 = arith.constant 3.200000e+01 : f32
    %769 = vector.broadcast %cst_197 : f32 to vector<8x1xf32>
    %770 = arith.divf %768, %769 : vector<8x1xf32>
    %771 = vector.broadcast %763 : vector<8x1xf32> to vector<8x32xf32>
    %772 = arith.subf %758, %771 : vector<8x32xf32>
    %cst_198 = arith.constant 9.99999974E-6 : f32
    %773 = vector.broadcast %cst_198 : f32 to vector<8x1xf32>
    %774 = arith.addf %770, %773 : vector<8x1xf32>
    %775 = math.rsqrt %774 : vector<8x1xf32>
    %776 = vector.broadcast %775 : vector<8x1xf32> to vector<8x32xf32>
    %777 = arith.mulf %772, %776 : vector<8x32xf32>
    %778 = vector.broadcast %759 : vector<1x32xf32> to vector<8x32xf32>
    %779 = arith.mulf %777, %778 : vector<8x32xf32>
    %780 = arith.truncf %779 : vector<8x32xf32> to vector<8x32xbf16>
    %c0_199 = arith.constant 0 : index
    %c0_200 = arith.constant 0 : index
    %781 = vector.load %arg23[%c0_199, %c0_200] : memref<32x16xbf16, #tpu.memory_space<vmem>>, vector<32x16xbf16>
    %cst_201 = arith.constant dense<0.000000e+00> : vector<8x16xf32>
    %782 = tpu.matmul %780, %781, %cst_201 {dimension_numbers = #tpu.dot_dimension_numbers<[1], [0], [0], [1], [0, 0, 1, 1], [], []>} : vector<8x32xbf16>, vector<32x16xbf16>, vector<8x16xf32> -> vector<8x16xf32>
    %c0_202 = arith.constant 0 : index
    %c0_203 = arith.constant 0 : index
    %783 = vector.load %arg24[%c0_202, %c0_203] : memref<1x16xf32, #tpu.memory_space<vmem>>, vector<1x16xf32>
    %784 = vector.broadcast %783 : vector<1x16xf32> to vector<8x16xf32>
    %785 = arith.addf %782, %784 : vector<8x16xf32>
    %c0_204 = arith.constant 0 : index
    %c0_205 = arith.constant 0 : index
    %c0_206 = arith.constant 0 : index
    %786 = vector.load %arg25[%c0_204, %c0_205, %c0_206] : memref<1x8x16xf32, #tpu.memory_space<vmem>>, vector<1x8x16xf32>
    %787 = vector.shape_cast %786 : vector<1x8x16xf32> to vector<8x16xf32>
    %788 = vector.shape_cast %785 : vector<8x16xf32> to vector<1x8x16xf32>
    tpu.vector_store %arg25[%c0_204, %c0_205, %c0_206], %788 {strides = array<i32>} : memref<1x8x16xf32, #tpu.memory_space<vmem>>, vector<1x8x16xf32>,
    return
  }
  func.func @transform_0(%arg0: i32) -> (i32, i32, i32) {
    %c0_i32 = arith.constant 0 : i32
    %c0_i32_0 = arith.constant 0 : i32
    %c0_i32_1 = arith.constant 0 : i32
    return %arg0, %c0_i32, %c0_i32_0 : i32, i32, i32
  }
  func.func @transform_1(%arg0: i32) -> (i32, i32) {
    %c0_i32 = arith.constant 0 : i32
    %c0_i32_0 = arith.constant 0 : i32
    %c0_i32_1 = arith.constant 0 : i32
    return %c0_i32, %c0_i32_0 : i32, i32
  }
  func.func @transform_2(%arg0: i32) -> (i32, i32) {
    %c0_i32 = arith.constant 0 : i32
    %c0_i32_0 = arith.constant 0 : i32
    %c0_i32_1 = arith.constant 0 : i32
    return %c0_i32, %c0_i32_0 : i32, i32
  }
  func.func @transform_3(%arg0: i32) -> (i32, i32) {
    %c0_i32 = arith.constant 0 : i32
    %c0_i32_0 = arith.constant 0 : i32
    %c0_i32_1 = arith.constant 0 : i32
    return %c0_i32, %c0_i32_0 : i32, i32
  }
  func.func @transform_4(%arg0: i32) -> (i32, i32) {
    %c0_i32 = arith.constant 0 : i32
    %c0_i32_0 = arith.constant 0 : i32
    %c0_i32_1 = arith.constant 0 : i32
    return %c0_i32, %c0_i32_0 : i32, i32
  }
  func.func @transform_5(%arg0: i32) -> (i32, i32) {
    %c0_i32 = arith.constant 0 : i32
    %c0_i32_0 = arith.constant 0 : i32
    %c0_i32_1 = arith.constant 0 : i32
    return %c0_i32, %c0_i32_0 : i32, i32
  }
  func.func @transform_6(%arg0: i32) -> (i32, i32) {
    %c0_i32 = arith.constant 0 : i32
    %c0_i32_0 = arith.constant 0 : i32
    %c0_i32_1 = arith.constant 0 : i32
    return %c0_i32, %c0_i32_0 : i32, i32
  }
  func.func @transform_7(%arg0: i32) -> (i32, i32) {
    %c0_i32 = arith.constant 0 : i32
    %c0_i32_0 = arith.constant 0 : i32
    %c0_i32_1 = arith.constant 0 : i32
    return %c0_i32, %c0_i32_0 : i32, i32
  }
  func.func @transform_8(%arg0: i32) -> (i32, i32) {
    %c0_i32 = arith.constant 0 : i32
    %c0_i32_0 = arith.constant 0 : i32
    %c0_i32_1 = arith.constant 0 : i32
    return %c0_i32, %c0_i32_0 : i32, i32
  }
  func.func @transform_9(%arg0: i32) -> (i32, i32) {
    %c0_i32 = arith.constant 0 : i32
    %c0_i32_0 = arith.constant 0 : i32
    %c0_i32_1 = arith.constant 0 : i32
    return %c0_i32, %c0_i32_0 : i32, i32
  }
  func.func @transform_10(%arg0: i32) -> (i32, i32) {
    %c0_i32 = arith.constant 0 : i32
    %c0_i32_0 = arith.constant 0 : i32
    %c0_i32_1 = arith.constant 0 : i32
    return %c0_i32, %c0_i32_0 : i32, i32
  }
  func.func @transform_11(%arg0: i32) -> (i32, i32) {
    %c0_i32 = arith.constant 0 : i32
    %c0_i32_0 = arith.constant 0 : i32
    %c0_i32_1 = arith.constant 0 : i32
    return %c0_i32, %c0_i32_0 : i32, i32
  }
  func.func @transform_12(%arg0: i32) -> (i32, i32) {
    %c0_i32 = arith.constant 0 : i32
    %c0_i32_0 = arith.constant 0 : i32
    %c0_i32_1 = arith.constant 0 : i32
    return %c0_i32, %c0_i32_0 : i32, i32
  }
  func.func @transform_13(%arg0: i32) -> (i32, i32) {
    %c0_i32 = arith.constant 0 : i32
    %c0_i32_0 = arith.constant 0 : i32
    %c0_i32_1 = arith.constant 0 : i32
    return %c0_i32, %c0_i32_0 : i32, i32
  }
  func.func @transform_14(%arg0: i32) -> (i32, i32) {
    %c0_i32 = arith.constant 0 : i32
    %c0_i32_0 = arith.constant 0 : i32
    %c0_i32_1 = arith.constant 0 : i32
    return %c0_i32, %c0_i32_0 : i32, i32
  }
  func.func @transform_15(%arg0: i32) -> (i32, i32) {
    %c0_i32 = arith.constant 0 : i32
    %c0_i32_0 = arith.constant 0 : i32
    %c0_i32_1 = arith.constant 0 : i32
    return %c0_i32, %c0_i32_0 : i32, i32
  }
  func.func @transform_16(%arg0: i32) -> (i32, i32) {
    %c0_i32 = arith.constant 0 : i32
    %c0_i32_0 = arith.constant 0 : i32
    %c0_i32_1 = arith.constant 0 : i32
    return %c0_i32, %c0_i32_0 : i32, i32
  }
  func.func @transform_17(%arg0: i32) -> (i32, i32) {
    %c0_i32 = arith.constant 0 : i32
    %c0_i32_0 = arith.constant 0 : i32
    %c0_i32_1 = arith.constant 0 : i32
    return %c0_i32, %c0_i32_0 : i32, i32
  }
  func.func @transform_18(%arg0: i32) -> (i32, i32) {
    %c0_i32 = arith.constant 0 : i32
    %c0_i32_0 = arith.constant 0 : i32
    %c0_i32_1 = arith.constant 0 : i32
    return %c0_i32, %c0_i32_0 : i32, i32
  }
  func.func @transform_19(%arg0: i32) -> (i32, i32) {
    %c0_i32 = arith.constant 0 : i32
    %c0_i32_0 = arith.constant 0 : i32
    %c0_i32_1 = arith.constant 0 : i32
    return %c0_i32, %c0_i32_0 : i32, i32
  }
  func.func @transform_20(%arg0: i32) -> (i32, i32) {
    %c0_i32 = arith.constant 0 : i32
    %c0_i32_0 = arith.constant 0 : i32
    %c0_i32_1 = arith.constant 0 : i32
    return %c0_i32, %c0_i32_0 : i32, i32
  }
  func.func @transform_21(%arg0: i32) -> (i32, i32) {
    %c0_i32 = arith.constant 0 : i32
    %c0_i32_0 = arith.constant 0 : i32
    %c0_i32_1 = arith.constant 0 : i32
    return %c0_i32, %c0_i32_0 : i32, i32
  }
  func.func @transform_22(%arg0: i32) -> (i32, i32) {
    %c0_i32 = arith.constant 0 : i32
    %c0_i32_0 = arith.constant 0 : i32
    %c0_i32_1 = arith.constant 0 : i32
    return %c0_i32, %c0_i32_0 : i32, i32
  }
  func.func @transform_23(%arg0: i32) -> (i32, i32) {
    %c0_i32 = arith.constant 0 : i32
    %c0_i32_0 = arith.constant 0 : i32
    %c0_i32_1 = arith.constant 0 : i32
    return %c0_i32, %c0_i32_0 : i32, i32
  }
  func.func @transform_24(%arg0: i32) -> (i32, i32, i32) {
    %c0_i32 = arith.constant 0 : i32
    %c0_i32_0 = arith.constant 0 : i32
    %c0_i32_1 = arith.constant 0 : i32
    return %arg0, %c0_i32, %c0_i32_0 : i32, i32, i32
  }
}

</mosaic_0001>

<llo_original>
// kernel: double_xlstm_down.1
$region0: #{double_xlstm_down.1}
  #allocation0 [shape = 'u32[]', space=smem, size = 0x4, offset = 0x4, fixed_abs, tag = 'smem constant byte address 0x4 - core index']
  #allocation1 [shape = 'u32[144,128]{1,0:T(1,128)}', space=vmem, size = 0x12000, scoped, tag = 'internal scratch']
  %s0 = inlined_call_operand.hbm [shape: f32[2,8,32], index: 0, kind: input, shape index: {}]
  %s1 = inlined_call_operand.hbm [shape: f32[1,32], index: 1, kind: input, shape index: {}]
  %s2 = inlined_call_operand.hbm [shape: bf16[32,128], index: 2, kind: input, shape index: {}]
  %s3 = inlined_call_operand.hbm [shape: f32[4,64], index: 3, kind: input, shape index: {}]
  %s4 = inlined_call_operand.hbm [shape: f32[1,64], index: 4, kind: input, shape index: {}]
  %s5 = inlined_call_operand.vmem [shape: bf16[64,136], index: 5, kind: input, shape index: {}]
  %s6 = inlined_call_operand.hbm [shape: bf16[64,72], index: 6, kind: input, shape index: {}]
  %s7 = inlined_call_operand.hbm [shape: f32[1,8], index: 7, kind: input, shape index: {}]
  %s8 = inlined_call_operand.hbm [shape: f32[1,64], index: 8, kind: input, shape index: {}]
  %s9 = inlined_call_operand.hbm [shape: f32[1,64], index: 9, kind: input, shape index: {}]
  %s10 = inlined_call_operand.vmem [shape: bf16[64,32], index: 10, kind: input, shape index: {}]
  %s11 = inlined_call_operand.hbm [shape: f32[1,32], index: 11, kind: input, shape index: {}]
  %s12 = inlined_call_operand.vmem [shape: bf16[32,128], index: 12, kind: input, shape index: {}]
  %s13 = inlined_call_operand.hbm [shape: f32[4,64], index: 13, kind: input, shape index: {}]
  %s14 = inlined_call_operand.hbm [shape: f32[1,64], index: 14, kind: input, shape index: {}]
  %s15 = inlined_call_operand.vmem [shape: bf16[64,136], index: 15, kind: input, shape index: {}]
  %s16 = inlined_call_operand.vmem [shape: bf16[64,72], index: 16, kind: input, shape index: {}]
  %s17 = inlined_call_operand.hbm [shape: f32[1,8], index: 17, kind: input, shape index: {}]
  %s18 = inlined_call_operand.hbm [shape: f32[1,64], index: 18, kind: input, shape index: {}]
  %s19 = inlined_call_operand.vmem [shape: f32[1,64], index: 19, kind: input, shape index: {}]
  %s20 = inlined_call_operand.vmem [shape: bf16[64,32], index: 20, kind: input, shape index: {}]
  %s21 = inlined_call_operand.vmem [shape: f32[1,32], index: 21, kind: input, shape index: {}]
  %s22 = inlined_call_operand.vmem [shape: bf16[32,16], index: 22, kind: input, shape index: {}]
  %s23 = inlined_call_operand.vmem [shape: f32[1,16], index: 23, kind: input, shape index: {}]
  %s24 = inlined_call_operand.hbm [shape: f32[2,8,16], index: 24, kind: output, shape index: {}]
  %s25 = sld [smem:[#allocation0]]
  $region185: #{double_xlstm_down.1} parent=0
    _
  %s27 = ssub.s32 1, %s25
  %s28 = scalar_select 0, %s27, %s25
  $region1: #{double_xlstm_down.1} parent=0
    #allocation2 [shape = 'u8[8192]{0}', space=vmem, size = 0x2000, scoped, tag = 'input window, operand 0']
    #allocation3 [shape = 's32[2]{0}', space=sflag, size = 0x8, scoped, tag = 'scoped memory for double_xlstm_down.1']
    #allocation4 [shape = 's32[2]{0}', space=sflag, size = 0x8, scoped, tag = 'scoped memory for double_xlstm_down.1']
    #allocation5 [shape = 'u8[512]{0}', space=vmem, size = 0x400, scoped, tag = 'input window, operand 1, single buffered']
    #allocation6 [shape = 's32[1]{0}', space=sflag, size = 0x4, scoped, tag = 'scoped memory for double_xlstm_down.1']
    #allocation7 [shape = 'u8[8192]{0}', space=vmem, size = 0x2000, scoped, tag = 'input window, operand 2, single buffered']
    #allocation8 [shape = 'u8[2048]{0}', space=vmem, size = 0x800, scoped, tag = 'input window, operand 3, single buffered']
    #allocation9 [shape = 's32[1]{0}', space=sflag, size = 0x4, scoped, tag = 'scoped memory for double_xlstm_down.1']
    #allocation10 [shape = 'u8[512]{0}', space=vmem, size = 0x400, scoped, tag = 'input window, operand 4, single buffered']
    #allocation11 [shape = 'u8[16384]{0}', space=vmem, size = 0x4000, scoped, tag = 'input window, operand 6, single buffered']
    #allocation12 [shape = 's32[1]{0}', space=sflag, size = 0x4, scoped, tag = 'scoped memory for double_xlstm_down.1']
    #allocation13 [shape = 'u8[512]{0}', space=vmem, size = 0x400, scoped, tag = 'input window, operand 7, single buffered']
    #allocation14 [shape = 'u8[512]{0}', space=vmem, size = 0x400, scoped, tag = 'input window, operand 8, single buffered']
    #allocation15 [shape = 's32[1]{0}', space=sflag, size = 0x4, scoped, tag = 'scoped memory for double_xlstm_down.1']
    #allocation16 [shape = 'u8[512]{0}', space=vmem, size = 0x400, scoped, tag = 'input window, operand 9, single buffered']
    #allocation17 [shape = 'u8[512]{0}', space=vmem, size = 0x400, scoped, tag = 'input window, operand 11, single buffered']
    #allocation18 [shape = 's32[1]{0}', space=sflag, size = 0x4, scoped, tag = 'scoped memory for double_xlstm_down.1']
    #allocation19 [shape = 'u8[2048]{0}', space=vmem, size = 0x800, scoped, tag = 'input window, operand 13, single buffered']
    #allocation20 [shape = 'u8[512]{0}', space=vmem, size = 0x400, scoped, tag = 'input window, operand 14, single buffered']
    #allocation21 [shape = 's32[1]{0}', space=sflag, size = 0x4, scoped, tag = 'scoped memory for double_xlstm_down.1']
    #allocation22 [shape = 'u8[512]{0}', space=vmem, size = 0x400, scoped, tag = 'input window, operand 17, single buffered']
    #allocation23 [shape = 'u8[512]{0}', space=vmem, size = 0x400, scoped, tag = 'input window, operand 18, single buffered']
    #allocation24 [shape = 's32[1]{0}', space=sflag, size = 0x4, scoped, tag = 'scoped memory for double_xlstm_down.1']
    #allocation25 [shape = 'u8[8192]{0}', space=vmem, size = 0x2000, scoped, tag = 'output window, operand 0']
    %29 = vsyncpa [#allocation3], 0
    %s30 = scalar_lea.sflag [#allocation3], 1
    %31 = vsyncpa %s30, 0
    %32 = vsyncpa [#allocation6], 0
    %33 = vsyncpa [#allocation9], 0
    %34 = vsyncpa [#allocation12], 0
    %35 = vsyncpa [#allocation15], 0
    %36 = vsyncpa [#allocation18], 0
    %37 = vsyncpa [#allocation21], 0
    %38 = vsyncpa [#allocation24], 0
    %39 = vsyncpa [#allocation4], 0
    %s40 = scalar_lea.sflag [#allocation4], 1
    %41 = vsyncpa %s40, 0
    loop: start=0, step=1, limit=4
    $region2: #{double_xlstm_down.1} parent=1 // loop_pre_header
      _
    $region3: #{double_xlstm_down.1} parent=1 // loop_header
      %s43 = sphi 0, %s47
      %p44 = scmp.ge.s32.totalorder %s43, 4
      %s53 = sphi 0, %s55
      %s56 = sphi 0, %s53
      %s57 = sphi 0, %s56
      %s73 = sphi 0, %s57
      %s77 = sphi 0, %s77
      %s79 = sphi 0, %s77
      %s80 = sphi 0, %s79
      %s94 = sphi 0, %s80
      %s98 = sphi 0, %s98
      %s100 = sphi 0, %s98
      %s101 = sphi 0, %s100
      %s115 = sphi 0, %s101
      %s119 = sphi 0, %s119
      %s121 = sphi 0, %s119
      %s122 = sphi 0, %s121
      %s136 = sphi 0, %s122
      %s140 = sphi 0, %s140
      %s142 = sphi 0, %s140
      %s143 = sphi 0, %s142
      %s157 = sphi 0, %s143
      %s161 = sphi 0, %s161
      %s163 = sphi 0, %s161
      %s164 = sphi 0, %s163
      %s178 = sphi 0, %s164
      %s182 = sphi 0, %s182
      %s184 = sphi 0, %s182
      %s185 = sphi 0, %s184
      %s199 = sphi 0, %s185
      %s203 = sphi 0, %s203
      %s205 = sphi 0, %s203
      %s206 = sphi 0, %s205
      %s220 = sphi 0, %s206
      %s224 = sphi 0, %s224
      %s226 = sphi 0, %s224
      %s227 = sphi 0, %s226
      %s241 = sphi 0, %s227
      %s245 = sphi 0, %s245
      %s247 = sphi 0, %s245
      %s248 = sphi 0, %s247
      %s262 = sphi 0, %s248
      %s266 = sphi 0, %s266
      %s268 = sphi 0, %s266
      %s269 = sphi 0, %s268
      %s283 = sphi 0, %s269
      %s287 = sphi 0, %s287
      %s289 = sphi 0, %s287
      %s290 = sphi 0, %s289
      %s304 = sphi 0, %s290
      %s308 = sphi 0, %s308
      %s310 = sphi 0, %s308
      %s311 = sphi 0, %s310
      %s325 = sphi 0, %s311
      %s329 = sphi 0, %s329
      %s331 = sphi 0, %s329
      %s332 = sphi 0, %s331
      %s346 = sphi 0, %s332
      %s350 = sphi 0, %s350
      %s352 = sphi 0, %s350
      %s353 = sphi 0, %s352
      %s367 = sphi 0, %s353
      %s371 = sphi 0, %s371
      %s373 = sphi 0, %s371
      %s374 = sphi 0, %s373
      %s388 = sphi 0, %s374
      %s392 = sphi 0, %s392
      %s394 = sphi 0, %s392
      %s395 = sphi 0, %s394
      %s409 = sphi 0, %s395
      %s413 = sphi 0, %s413
      %s415 = sphi 0, %s413
      %s416 = sphi 0, %s415
      %s430 = sphi 0, %s416
      %s434 = sphi 0, %s434
      %s436 = sphi 0, %s434
      %s437 = sphi 0, %s436
      %s451 = sphi 0, %s437
      %s455 = sphi 0, %s455
      %s457 = sphi 0, %s455
      %s458 = sphi 0, %s457
      %s472 = sphi 0, %s458
      %s476 = sphi 0, %s476
      %s478 = sphi 0, %s476
      %s479 = sphi 0, %s478
      %s493 = sphi 0, %s479
      %s497 = sphi 0, %s497
      %s499 = sphi 0, %s497
      %s500 = sphi 0, %s499
      %s514 = sphi 0, %s500
      %s518 = sphi 0, %s518
      %s520 = sphi 0, %s518
      %s521 = sphi 0, %s520
      %s535 = sphi 0, %s521
      %s539 = sphi 0, %s539
      %s541 = sphi 0, %s539
      %s542 = sphi 0, %s541
      %s556 = sphi 0, %s542
      %s562 = sphi 0, %s564
      %s565 = sphi 0, %s562
      %s566 = sphi 0, %s565
      %s582 = sphi 0, %s566
    $region4: #{double_xlstm_down.1} parent=1 // loop_header_branch
      %46 = sbr.rel (%p44) target = $region8
    $region5: #{double_xlstm_down.1} parent=1 // loop_body
      %s48 = ssub.s32 %s43, 1
      %s49 = ssub.s32 %s43, 2
      %s50 = sadd.s32 %s43, 1
      %s51 = ssub.s32 %s43, %s50
      %p52 = scmp.eq.s32.totalorder %s51, 0
      %s54 = sadd.s32 %s53, 1
      %s55 = scalar_select %p52, %s53, %s54
      %p58 = pneg %p52
      %p59 = scmp.eq.s32.totalorder %s43, 1
      %p60 = por %p58, %p59
      %p61 = scmp.ne.s32.totalorder %s53, %s56
      %p62 = scmp.eq.s32.totalorder %s43, 0
      %p63 = por %p61, %p62
      %p64 = scmp.ne.s32.totalorder %s53, %s56
      %p65 = scmp.eq.s32.totalorder %s48, 1
      %p66 = por %p64, %p65
      %p67 = scmp.ne.s32.totalorder %s56, %s57
      %p68 = scmp.eq.s32.totalorder %s48, 0
      %p69 = por %p67, %p68
      %p70 = scmp.ne.s32.totalorder %s56, %s57
      %p71 = scmp.eq.s32.totalorder %s49, 1
      %p72 = por %p70, %p71
      %p74 = scmp.ne.s32.totalorder %s57, %s73
      %p75 = scmp.eq.s32.totalorder %s49, 0
      %p76 = por %p74, %p75
      %s78 = sadd.s32 %s77, 1
      %p81 = scmp.eq.s32.totalorder %s43, 1
      %p82 = scmp.ne.s32.totalorder %s77, %s79
      %p83 = scmp.eq.s32.totalorder %s43, 0
      %p84 = por %p82, %p83
      %p85 = scmp.ne.s32.totalorder %s77, %s79
      %p86 = scmp.eq.s32.totalorder %s48, 1
      %p87 = por %p85, %p86
      %p88 = scmp.ne.s32.totalorder %s79, %s80
      %p89 = scmp.eq.s32.totalorder %s48, 0
      %p90 = por %p88, %p89
      %p91 = scmp.ne.s32.totalorder %s79, %s80
      %p92 = scmp.eq.s32.totalorder %s49, 1
      %p93 = por %p91, %p92
      %p95 = scmp.ne.s32.totalorder %s80, %s94
      %p96 = scmp.eq.s32.totalorder %s49, 0
      %p97 = por %p95, %p96
      %s99 = sadd.s32 %s98, 1
      %p102 = scmp.eq.s32.totalorder %s43, 1
      %p103 = scmp.ne.s32.totalorder %s98, %s100
      %p104 = scmp.eq.s32.totalorder %s43, 0
      %p105 = por %p103, %p104
      %p106 = scmp.ne.s32.totalorder %s98, %s100
      %p107 = scmp.eq.s32.totalorder %s48, 1
      %p108 = por %p106, %p107
      %p109 = scmp.ne.s32.totalorder %s100, %s101
      %p110 = scmp.eq.s32.totalorder %s48, 0
      %p111 = por %p109, %p110
      %p112 = scmp.ne.s32.totalorder %s100, %s101
      %p113 = scmp.eq.s32.totalorder %s49, 1
      %p114 = por %p112, %p113
      %p116 = scmp.ne.s32.totalorder %s101, %s115
      %p117 = scmp.eq.s32.totalorder %s49, 0
      %p118 = por %p116, %p117
      %s120 = sadd.s32 %s119, 1
      %p123 = scmp.eq.s32.totalorder %s43, 1
      %p124 = scmp.ne.s32.totalorder %s119, %s121
      %p125 = scmp.eq.s32.totalorder %s43, 0
      %p126 = por %p124, %p125
      %p127 = scmp.ne.s32.totalorder %s119, %s121
      %p128 = scmp.eq.s32.totalorder %s48, 1
      %p129 = por %p127, %p128
      %p130 = scmp.ne.s32.totalorder %s121, %s122
      %p131 = scmp.eq.s32.totalorder %s48, 0
      %p132 = por %p130, %p131
      %p133 = scmp.ne.s32.totalorder %s121, %s122
      %p134 = scmp.eq.s32.totalorder %s49, 1
      %p135 = por %p133, %p134
      %p137 = scmp.ne.s32.totalorder %s122, %s136
      %p138 = scmp.eq.s32.totalorder %s49, 0
      %p139 = por %p137, %p138
      %s141 = sadd.s32 %s140, 1
      %p144 = scmp.eq.s32.totalorder %s43, 1
      %p145 = scmp.ne.s32.totalorder %s140, %s142
      %p146 = scmp.eq.s32.totalorder %s43, 0
      %p147 = por %p145, %p146
      %p148 = scmp.ne.s32.totalorder %s140, %s142
      %p149 = scmp.eq.s32.totalorder %s48, 1
      %p150 = por %p148, %p149
      %p151 = scmp.ne.s32.totalorder %s142, %s143
      %p152 = scmp.eq.s32.totalorder %s48, 0
      %p153 = por %p151, %p152
      %p154 = scmp.ne.s32.totalorder %s142, %s143
      %p155 = scmp.eq.s32.totalorder %s49, 1
      %p156 = por %p154, %p155
      %p158 = scmp.ne.s32.totalorder %s143, %s157
      %p159 = scmp.eq.s32.totalorder %s49, 0
      %p160 = por %p158, %p159
      %s162 = sadd.s32 %s161, 1
      %p165 = scmp.eq.s32.totalorder %s43, 1
      %p166 = scmp.ne.s32.totalorder %s161, %s163
      %p167 = scmp.eq.s32.totalorder %s43, 0
      %p168 = por %p166, %p167
      %p169 = scmp.ne.s32.totalorder %s161, %s163
      %p170 = scmp.eq.s32.totalorder %s48, 1
      %p171 = por %p169, %p170
      %p172 = scmp.ne.s32.totalorder %s163, %s164
      %p173 = scmp.eq.s32.totalorder %s48, 0
      %p174 = por %p172, %p173
      %p175 = scmp.ne.s32.totalorder %s163, %s164
      %p176 = scmp.eq.s32.totalorder %s49, 1
      %p177 = por %p175, %p176
      %p179 = scmp.ne.s32.totalorder %s164, %s178
      %p180 = scmp.eq.s32.totalorder %s49, 0
      %p181 = por %p179, %p180
      %s183 = sadd.s32 %s182, 1
      %p186 = scmp.eq.s32.totalorder %s43, 1
      %p187 = scmp.ne.s32.totalorder %s182, %s184
      %p188 = scmp.eq.s32.totalorder %s43, 0
      %p189 = por %p187, %p188
      %p190 = scmp.ne.s32.totalorder %s182, %s184
      %p191 = scmp.eq.s32.totalorder %s48, 1
      %p192 = por %p190, %p191
      %p193 = scmp.ne.s32.totalorder %s184, %s185
      %p194 = scmp.eq.s32.totalorder %s48, 0
      %p195 = por %p193, %p194
      %p196 = scmp.ne.s32.totalorder %s184, %s185
      %p197 = scmp.eq.s32.totalorder %s49, 1
      %p198 = por %p196, %p197
      %p200 = scmp.ne.s32.totalorder %s185, %s199
      %p201 = scmp.eq.s32.totalorder %s49, 0
      %p202 = por %p200, %p201
      %s204 = sadd.s32 %s203, 1
      %p207 = scmp.eq.s32.totalorder %s43, 1
      %p208 = scmp.ne.s32.totalorder %s203, %s205
      %p209 = scmp.eq.s32.totalorder %s43, 0
      %p210 = por %p208, %p209
      %p211 = scmp.ne.s32.totalorder %s203, %s205
      %p212 = scmp.eq.s32.totalorder %s48, 1
      %p213 = por %p211, %p212
      %p214 = scmp.ne.s32.totalorder %s205, %s206
      %p215 = scmp.eq.s32.totalorder %s48, 0
      %p216 = por %p214, %p215
      %p217 = scmp.ne.s32.totalorder %s205, %s206
      %p218 = scmp.eq.s32.totalorder %s49, 1
      %p219 = por %p217, %p218
      %p221 = scmp.ne.s32.totalorder %s206, %s220
      %p222 = scmp.eq.s32.totalorder %s49, 0
      %p223 = por %p221, %p222
      %s225 = sadd.s32 %s224, 1
      %p228 = scmp.eq.s32.totalorder %s43, 1
      %p229 = scmp.ne.s32.totalorder %s224, %s226
      %p230 = scmp.eq.s32.totalorder %s43, 0
      %p231 = por %p229, %p230
      %p232 = scmp.ne.s32.totalorder %s224, %s226
      %p233 = scmp.eq.s32.totalorder %s48, 1
      %p234 = por %p232, %p233
      %p235 = scmp.ne.s32.totalorder %s226, %s227
      %p236 = scmp.eq.s32.totalorder %s48, 0
      %p237 = por %p235, %p236
      %p238 = scmp.ne.s32.totalorder %s226, %s227
      %p239 = scmp.eq.s32.totalorder %s49, 1
      %p240 = por %p238, %p239
      %p242 = scmp.ne.s32.totalorder %s227, %s241
      %p243 = scmp.eq.s32.totalorder %s49, 0
      %p244 = por %p242, %p243
      %s246 = sadd.s32 %s245, 1
      %p249 = scmp.eq.s32.totalorder %s43, 1
      %p250 = scmp.ne.s32.totalorder %s245, %s247
      %p251 = scmp.eq.s32.totalorder %s43, 0
      %p252 = por %p250, %p251
      %p253 = scmp.ne.s32.totalorder %s245, %s247
      %p254 = scmp.eq.s32.totalorder %s48, 1
      %p255 = por %p253, %p254
      %p256 = scmp.ne.s32.totalorder %s247, %s248
      %p257 = scmp.eq.s32.totalorder %s48, 0
      %p258 = por %p256, %p257
      %p259 = scmp.ne.s32.totalorder %s247, %s248
      %p260 = scmp.eq.s32.totalorder %s49, 1
      %p261 = por %p259, %p260
      %p263 = scmp.ne.s32.totalorder %s248, %s262
      %p264 = scmp.eq.s32.totalorder %s49, 0
      %p265 = por %p263, %p264
      %s267 = sadd.s32 %s266, 1
      %p270 = scmp.eq.s32.totalorder %s43, 1
      %p271 = scmp.ne.s32.totalorder %s266, %s268
      %p272 = scmp.eq.s32.totalorder %s43, 0
      %p273 = por %p271, %p272
      %p274 = scmp.ne.s32.totalorder %s266, %s268
      %p275 = scmp.eq.s32.totalorder %s48, 1
      %p276 = por %p274, %p275
      %p277 = scmp.ne.s32.totalorder %s268, %s269
      %p278 = scmp.eq.s32.totalorder %s48, 0
      %p279 = por %p277, %p278
      %p280 = scmp.ne.s32.totalorder %s268, %s269
      %p281 = scmp.eq.s32.totalorder %s49, 1
      %p282 = por %p280, %p281
      %p284 = scmp.ne.s32.totalorder %s269, %s283
      %p285 = scmp.eq.s32.totalorder %s49, 0
      %p286 = por %p284, %p285
      %s288 = sadd.s32 %s287, 1
      %p291 = scmp.eq.s32.totalorder %s43, 1
      %p292 = scmp.ne.s32.totalorder %s287, %s289
      %p293 = scmp.eq.s32.totalorder %s43, 0
      %p294 = por %p292, %p293
      %p295 = scmp.ne.s32.totalorder %s287, %s289
      %p296 = scmp.eq.s32.totalorder %s48, 1
      %p297 = por %p295, %p296
      %p298 = scmp.ne.s32.totalorder %s289, %s290
      %p299 = scmp.eq.s32.totalorder %s48, 0
      %p300 = por %p298, %p299
      %p301 = scmp.ne.s32.totalorder %s289, %s290
      %p302 = scmp.eq.s32.totalorder %s49, 1
      %p303 = por %p301, %p302
      %p305 = scmp.ne.s32.totalorder %s290, %s304
      %p306 = scmp.eq.s32.totalorder %s49, 0
      %p307 = por %p305, %p306
      %s309 = sadd.s32 %s308, 1
      %p312 = scmp.eq.s32.totalorder %s43, 1
      %p313 = scmp.ne.s32.totalorder %s308, %s310
      %p314 = scmp.eq.s32.totalorder %s43, 0
      %p315 = por %p313, %p314
      %p316 = scmp.ne.s32.totalorder %s308, %s310
      %p317 = scmp.eq.s32.totalorder %s48, 1
      %p318 = por %p316, %p317
      %p319 = scmp.ne.s32.totalorder %s310, %s311
      %p320 = scmp.eq.s32.totalorder %s48, 0
      %p321 = por %p319, %p320
      %p322 = scmp.ne.s32.totalorder %s310, %s311
      %p323 = scmp.eq.s32.totalorder %s49, 1
      %p324 = por %p322, %p323
      %p326 = scmp.ne.s32.totalorder %s311, %s325
      %p327 = scmp.eq.s32.totalorder %s49, 0
      %p328 = por %p326, %p327
      %s330 = sadd.s32 %s329, 1
      %p333 = scmp.eq.s32.totalorder %s43, 1
      %p334 = scmp.ne.s32.totalorder %s329, %s331
      %p335 = scmp.eq.s32.totalorder %s43, 0
      %p336 = por %p334, %p335
      %p337 = scmp.ne.s32.totalorder %s329, %s331
      %p338 = scmp.eq.s32.totalorder %s48, 1
      %p339 = por %p337, %p338
      %p340 = scmp.ne.s32.totalorder %s331, %s332
      %p341 = scmp.eq.s32.totalorder %s48, 0
      %p342 = por %p340, %p341
      %p343 = scmp.ne.s32.totalorder %s331, %s332
      %p344 = scmp.eq.s32.totalorder %s49, 1
      %p345 = por %p343, %p344
      %p347 = scmp.ne.s32.totalorder %s332, %s346
      %p348 = scmp.eq.s32.totalorder %s49, 0
      %p349 = por %p347, %p348
      %s351 = sadd.s32 %s350, 1
      %p354 = scmp.eq.s32.totalorder %s43, 1
      %p355 = scmp.ne.s32.totalorder %s350, %s352
      %p356 = scmp.eq.s32.totalorder %s43, 0
      %p357 = por %p355, %p356
      %p358 = scmp.ne.s32.totalorder %s350, %s352
      %p359 = scmp.eq.s32.totalorder %s48, 1
      %p360 = por %p358, %p359
      %p361 = scmp.ne.s32.totalorder %s352, %s353
      %p362 = scmp.eq.s32.totalorder %s48, 0
      %p363 = por %p361, %p362
      %p364 = scmp.ne.s32.totalorder %s352, %s353
      %p365 = scmp.eq.s32.totalorder %s49, 1
      %p366 = por %p364, %p365
      %p368 = scmp.ne.s32.totalorder %s353, %s367
      %p369 = scmp.eq.s32.totalorder %s49, 0
      %p370 = por %p368, %p369
      %s372 = sadd.s32 %s371, 1
      %p375 = scmp.eq.s32.totalorder %s43, 1
      %p376 = scmp.ne.s32.totalorder %s371, %s373
      %p377 = scmp.eq.s32.totalorder %s43, 0
      %p378 = por %p376, %p377
      %p379 = scmp.ne.s32.totalorder %s371, %s373
      %p380 = scmp.eq.s32.totalorder %s48, 1
      %p381 = por %p379, %p380
      %p382 = scmp.ne.s32.totalorder %s373, %s374
      %p383 = scmp.eq.s32.totalorder %s48, 0
      %p384 = por %p382, %p383
      %p385 = scmp.ne.s32.totalorder %s373, %s374
      %p386 = scmp.eq.s32.totalorder %s49, 1
      %p387 = por %p385, %p386
      %p389 = scmp.ne.s32.totalorder %s374, %s388
      %p390 = scmp.eq.s32.totalorder %s49, 0
      %p391 = por %p389, %p390
      %s393 = sadd.s32 %s392, 1
      %p396 = scmp.eq.s32.totalorder %s43, 1
      %p397 = scmp.ne.s32.totalorder %s392, %s394
      %p398 = scmp.eq.s32.totalorder %s43, 0
      %p399 = por %p397, %p398
      %p400 = scmp.ne.s32.totalorder %s392, %s394
      %p401 = scmp.eq.s32.totalorder %s48, 1
      %p402 = por %p400, %p401
      %p403 = scmp.ne.s32.totalorder %s394, %s395
      %p404 = scmp.eq.s32.totalorder %s48, 0
      %p405 = por %p403, %p404
      %p406 = scmp.ne.s32.totalorder %s394, %s395
      %p407 = scmp.eq.s32.totalorder %s49, 1
      %p408 = por %p406, %p407
      %p410 = scmp.ne.s32.totalorder %s395, %s409
      %p411 = scmp.eq.s32.totalorder %s49, 0
      %p412 = por %p410, %p411
      %s414 = sadd.s32 %s413, 1
      %p417 = scmp.eq.s32.totalorder %s43, 1
      %p418 = scmp.ne.s32.totalorder %s413, %s415
      %p419 = scmp.eq.s32.totalorder %s43, 0
      %p420 = por %p418, %p419
      %p421 = scmp.ne.s32.totalorder %s413, %s415
      %p422 = scmp.eq.s32.totalorder %s48, 1
      %p423 = por %p421, %p422
      %p424 = scmp.ne.s32.totalorder %s415, %s416
      %p425 = scmp.eq.s32.totalorder %s48, 0
      %p426 = por %p424, %p425
      %p427 = scmp.ne.s32.totalorder %s415, %s416
      %p428 = scmp.eq.s32.totalorder %s49, 1
      %p429 = por %p427, %p428
      %p431 = scmp.ne.s32.totalorder %s416, %s430
      %p432 = scmp.eq.s32.totalorder %s49, 0
      %p433 = por %p431, %p432
      %s435 = sadd.s32 %s434, 1
      %p438 = scmp.eq.s32.totalorder %s43, 1
      %p439 = scmp.ne.s32.totalorder %s434, %s436
      %p440 = scmp.eq.s32.totalorder %s43, 0
      %p441 = por %p439, %p440
      %p442 = scmp.ne.s32.totalorder %s434, %s436
      %p443 = scmp.eq.s32.totalorder %s48, 1
      %p444 = por %p442, %p443
      %p445 = scmp.ne.s32.totalorder %s436, %s437
      %p446 = scmp.eq.s32.totalorder %s48, 0
      %p447 = por %p445, %p446
      %p448 = scmp.ne.s32.totalorder %s436, %s437
      %p449 = scmp.eq.s32.totalorder %s49, 1
      %p450 = por %p448, %p449
      %p452 = scmp.ne.s32.totalorder %s437, %s451
      %p453 = scmp.eq.s32.totalorder %s49, 0
      %p454 = por %p452, %p453
      %s456 = sadd.s32 %s455, 1
      %p459 = scmp.eq.s32.totalorder %s43, 1
      %p460 = scmp.ne.s32.totalorder %s455, %s457
      %p461 = scmp.eq.s32.totalorder %s43, 0
      %p462 = por %p460, %p461
      %p463 = scmp.ne.s32.totalorder %s455, %s457
      %p464 = scmp.eq.s32.totalorder %s48, 1
      %p465 = por %p463, %p464
      %p466 = scmp.ne.s32.totalorder %s457, %s458
      %p467 = scmp.eq.s32.totalorder %s48, 0
      %p468 = por %p466, %p467
      %p469 = scmp.ne.s32.totalorder %s457, %s458
      %p470 = scmp.eq.s32.totalorder %s49, 1
      %p471 = por %p469, %p470
      %p473 = scmp.ne.s32.totalorder %s458, %s472
      %p474 = scmp.eq.s32.totalorder %s49, 0
      %p475 = por %p473, %p474
      %s477 = sadd.s32 %s476, 1
      %p480 = scmp.eq.s32.totalorder %s43, 1
      %p481 = scmp.ne.s32.totalorder %s476, %s478
      %p482 = scmp.eq.s32.totalorder %s43, 0
      %p483 = por %p481, %p482
      %p484 = scmp.ne.s32.totalorder %s476, %s478
      %p485 = scmp.eq.s32.totalorder %s48, 1
      %p486 = por %p484, %p485
      %p487 = scmp.ne.s32.totalorder %s478, %s479
      %p488 = scmp.eq.s32.totalorder %s48, 0
      %p489 = por %p487, %p488
      %p490 = scmp.ne.s32.totalorder %s478, %s479
      %p491 = scmp.eq.s32.totalorder %s49, 1
      %p492 = por %p490, %p491
      %p494 = scmp.ne.s32.totalorder %s479, %s493
      %p495 = scmp.eq.s32.totalorder %s49, 0
      %p496 = por %p494, %p495
      %s498 = sadd.s32 %s497, 1
      %p501 = scmp.eq.s32.totalorder %s43, 1
      %p502 = scmp.ne.s32.totalorder %s497, %s499
      %p503 = scmp.eq.s32.totalorder %s43, 0
      %p504 = por %p502, %p503
      %p505 = scmp.ne.s32.totalorder %s497, %s499
      %p506 = scmp.eq.s32.totalorder %s48, 1
      %p507 = por %p505, %p506
      %p508 = scmp.ne.s32.totalorder %s499, %s500
      %p509 = scmp.eq.s32.totalorder %s48, 0
      %p510 = por %p508, %p509
      %p511 = scmp.ne.s32.totalorder %s499, %s500
      %p512 = scmp.eq.s32.totalorder %s49, 1
      %p513 = por %p511, %p512
      %p515 = scmp.ne.s32.totalorder %s500, %s514
      %p516 = scmp.eq.s32.totalorder %s49, 0
      %p517 = por %p515, %p516
      %s519 = sadd.s32 %s518, 1
      %p522 = scmp.eq.s32.totalorder %s43, 1
      %p523 = scmp.ne.s32.totalorder %s518, %s520
      %p524 = scmp.eq.s32.totalorder %s43, 0
      %p525 = por %p523, %p524
      %p526 = scmp.ne.s32.totalorder %s518, %s520
      %p527 = scmp.eq.s32.totalorder %s48, 1
      %p528 = por %p526, %p527
      %p529 = scmp.ne.s32.totalorder %s520, %s521
      %p530 = scmp.eq.s32.totalorder %s48, 0
      %p531 = por %p529, %p530
      %p532 = scmp.ne.s32.totalorder %s520, %s521
      %p533 = scmp.eq.s32.totalorder %s49, 1
      %p534 = por %p532, %p533
      %p536 = scmp.ne.s32.totalorder %s521, %s535
      %p537 = scmp.eq.s32.totalorder %s49, 0
      %p538 = por %p536, %p537
      %s540 = sadd.s32 %s539, 1
      %p543 = scmp.eq.s32.totalorder %s43, 1
      %p544 = scmp.ne.s32.totalorder %s539, %s541
      %p545 = scmp.eq.s32.totalorder %s43, 0
      %p546 = por %p544, %p545
      %p547 = scmp.ne.s32.totalorder %s539, %s541
      %p548 = scmp.eq.s32.totalorder %s48, 1
      %p549 = por %p547, %p548
      %p550 = scmp.ne.s32.totalorder %s541, %s542
      %p551 = scmp.eq.s32.totalorder %s48, 0
      %p552 = por %p550, %p551
      %p553 = scmp.ne.s32.totalorder %s541, %s542
      %p554 = scmp.eq.s32.totalorder %s49, 1
      %p555 = por %p553, %p554
      %p557 = scmp.ne.s32.totalorder %s542, %s556
      %p558 = scmp.eq.s32.totalorder %s49, 0
      %p559 = por %p557, %p558
      %s560 = ssub.s32 %s43, %s50
      %p561 = scmp.eq.s32.totalorder %s560, 0
      %s563 = sadd.s32 %s562, 1
      %s564 = scalar_select %p561, %s562, %s563
      %p567 = pneg %p561
      %p568 = scmp.eq.s32.totalorder %s43, 1
      %p569 = por %p567, %p568
      %p570 = scmp.ne.s32.totalorder %s562, %s565
      %p571 = scmp.eq.s32.totalorder %s43, 0
      %p572 = por %p570, %p571
      %p573 = scmp.ne.s32.totalorder %s562, %s565
      %p574 = scmp.eq.s32.totalorder %s48, 1
      %p575 = por %p573, %p574
      %p576 = scmp.ne.s32.totalorder %s565, %s566
      %p577 = scmp.eq.s32.totalorder %s48, 0
      %p578 = por %p576, %p577
      %p579 = scmp.ne.s32.totalorder %s565, %s566
      %p580 = scmp.eq.s32.totalorder %s49, 1
      %p581 = por %p579, %p580
      %p583 = scmp.ne.s32.totalorder %s566, %s582
      %p584 = scmp.eq.s32.totalorder %s49, 0
      %p585 = por %p583, %p584
      %p586 = scmp.le.s32.totalorder 1, %s43
      %p587 = scmp.lt.s32.totalorder %s43, 3
      %p588 = pnand %p586, %p587
      %p589 = pneg %p588
      // Predicated region
      $region9: #{double_xlstm_down.1} parent=5 // pred_check
        _
      $region10: #{double_xlstm_down.1} parent=5 // pred_check_branch
        %591 = sbr.rel (%p588) target = $region12
      $region11: #{double_xlstm_down.1} parent=5 // pred_region
        %s592 = ssub.s32 %s43, 1
        // Predicated region
        $region13: #{double_xlstm_down.1} parent=11 // pred_check
          %p593 = pneg %p90
        $region14: #{double_xlstm_down.1} parent=11 // pred_check_branch
          %595 = sbr.rel (%p593) target = $region16
        $region15: #{double_xlstm_down.1} parent=11 // pred_region
          %s597 = ssub.s32 16, 16
          %598 = vsyncadd [#allocation6], %s597
          %s600 = sshll.u32 [#allocation5], 4
          %s601 = int_to_ptr.vmem [resolvable:$true] %s600
          %603 = dma.hbm_to_vmem [thread:$0]  %s1, 16, %s601, [#allocation6]
        $region16: #{double_xlstm_down.1} parent=11 // pred_fallthru
          _
        // Predicated region
        $region17: #{double_xlstm_down.1} parent=11 // pred_check
          %p604 = pneg %p111
        $region18: #{double_xlstm_down.1} parent=11 // pred_check_branch
          %606 = sbr.rel (%p604) target = $region20
        $region19: #{double_xlstm_down.1} parent=11 // pred_region
          %s608 = ssub.s32 256, 256
          %609 = vsyncadd [#allocation6], %s608
          %s610 = sshll.u32 [#allocation7], 4
          %s611 = int_to_ptr.vmem [resolvable:$true] %s610
          %616 = dma.hbm_to_vmem [thread:$0]  %s2, 256, %s611, [#allocation6], 64, 64, 4
        $region20: #{double_xlstm_down.1} parent=11 // pred_fallthru
          _
        // Predicated region
        $region21: #{double_xlstm_down.1} parent=11 // pred_check
          %p617 = pneg %p132
        $region22: #{double_xlstm_down.1} parent=11 // pred_check_branch
          %619 = sbr.rel (%p617) target = $region24
        $region23: #{double_xlstm_down.1} parent=11 // pred_region
          %s621 = ssub.s32 64, 64
          %622 = vsyncadd [#allocation9], %s621
          %s624 = sshll.u32 [#allocation8], 4
          %s625 = int_to_ptr.vmem [resolvable:$true] %s624
          %627 = dma.hbm_to_vmem [thread:$0]  %s3, 64, %s625, [#allocation9]
        $region24: #{double_xlstm_down.1} parent=11 // pred_fallthru
          _
        // Predicated region
        $region25: #{double_xlstm_down.1} parent=11 // pred_check
          %p628 = pneg %p153
        $region26: #{double_xlstm_down.1} parent=11 // pred_check_branch
          %630 = sbr.rel (%p628) target = $region28
        $region27: #{double_xlstm_down.1} parent=11 // pred_region
          %s632 = ssub.s32 16, 16
          %633 = vsyncadd [#allocation9], %s632
          %s635 = sshll.u32 [#allocation10], 4
          %s636 = int_to_ptr.vmem [resolvable:$true] %s635
          %638 = dma.hbm_to_vmem [thread:$0]  %s4, 16, %s636, [#allocation9]
        $region28: #{double_xlstm_down.1} parent=11 // pred_fallthru
          _
        // Predicated region
        $region29: #{double_xlstm_down.1} parent=11 // pred_check
          %p639 = pneg %p174
        $region30: #{double_xlstm_down.1} parent=11 // pred_check_branch
          %641 = sbr.rel (%p639) target = $region32
        $region31: #{double_xlstm_down.1} parent=11 // pred_region
          _
        $region32: #{double_xlstm_down.1} parent=11 // pred_fallthru
          _
        // Predicated region
        $region33: #{double_xlstm_down.1} parent=11 // pred_check
          %p642 = pneg %p195
        $region34: #{double_xlstm_down.1} parent=11 // pred_check_branch
          %644 = sbr.rel (%p642) target = $region36
        $region35: #{double_xlstm_down.1} parent=11 // pred_region
          %s646 = ssub.s32 512, 512
          %647 = vsyncadd [#allocation12], %s646
          %s648 = sshll.u32 [#allocation11], 4
          %s649 = int_to_ptr.vmem [resolvable:$true] %s648
          %654 = dma.hbm_to_vmem [thread:$0]  %s6, 512, %s649, [#allocation12], 64, 64, 4
        $region36: #{double_xlstm_down.1} parent=11 // pred_fallthru
          _
        // Predicated region
        $region37: #{double_xlstm_down.1} parent=11 // pred_check
          %p655 = pneg %p216
        $region38: #{double_xlstm_down.1} parent=11 // pred_check_branch
          %657 = sbr.rel (%p655) target = $region40
        $region39: #{double_xlstm_down.1} parent=11 // pred_region
          %s659 = ssub.s32 16, 16
          %660 = vsyncadd [#allocation12], %s659
          %s662 = sshll.u32 [#allocation13], 4
          %s663 = int_to_ptr.vmem [resolvable:$true] %s662
          %665 = dma.hbm_to_vmem [thread:$0]  %s7, 16, %s663, [#allocation12]
        $region40: #{double_xlstm_down.1} parent=11 // pred_fallthru
          _
        // Predicated region
        $region41: #{double_xlstm_down.1} parent=11 // pred_check
          %p666 = pneg %p237
        $region42: #{double_xlstm_down.1} parent=11 // pred_check_branch
          %668 = sbr.rel (%p666) target = $region44
        $region43: #{double_xlstm_down.1} parent=11 // pred_region
          %s670 = ssub.s32 16, 16
          %671 = vsyncadd [#allocation15], %s670
          %s673 = sshll.u32 [#allocation14], 4
          %s674 = int_to_ptr.vmem [resolvable:$true] %s673
          %676 = dma.hbm_to_vmem [thread:$0]  %s8, 16, %s674, [#allocation15]
        $region44: #{double_xlstm_down.1} parent=11 // pred_fallthru
          _
        // Predicated region
        $region45: #{double_xlstm_down.1} parent=11 // pred_check
          %p677 = pneg %p258
        $region46: #{double_xlstm_down.1} parent=11 // pred_check_branch
          %679 = sbr.rel (%p677) target = $region48
        $region47: #{double_xlstm_down.1} parent=11 // pred_region
          %s681 = ssub.s32 16, 16
          %682 = vsyncadd [#allocation15], %s681
          %s684 = sshll.u32 [#allocation16], 4
          %s685 = int_to_ptr.vmem [resolvable:$true] %s684
          %687 = dma.hbm_to_vmem [thread:$0]  %s9, 16, %s685, [#allocation15]
        $region48: #{double_xlstm_down.1} parent=11 // pred_fallthru
          _
        // Predicated region
        $region49: #{double_xlstm_down.1} parent=11 // pred_check
          %p688 = pneg %p279
        $region50: #{double_xlstm_down.1} parent=11 // pred_check_branch
          %690 = sbr.rel (%p688) target = $region52
        $region51: #{double_xlstm_down.1} parent=11 // pred_region
          _
        $region52: #{double_xlstm_down.1} parent=11 // pred_fallthru
          _
        // Predicated region
        $region53: #{double_xlstm_down.1} parent=11 // pred_check
          %p691 = pneg %p300
        $region54: #{double_xlstm_down.1} parent=11 // pred_check_branch
          %693 = sbr.rel (%p691) target = $region56
        $region55: #{double_xlstm_down.1} parent=11 // pred_region
          %s695 = ssub.s32 16, 16
          %696 = vsyncadd [#allocation18], %s695
          %s698 = sshll.u32 [#allocation17], 4
          %s699 = int_to_ptr.vmem [resolvable:$true] %s698
          %701 = dma.hbm_to_vmem [thread:$0]  %s11, 16, %s699, [#allocation18]
        $region56: #{double_xlstm_down.1} parent=11 // pred_fallthru
          _
        // Predicated region
        $region57: #{double_xlstm_down.1} parent=11 // pred_check
          %p702 = pneg %p321
        $region58: #{double_xlstm_down.1} parent=11 // pred_check_branch
          %704 = sbr.rel (%p702) target = $region60
        $region59: #{double_xlstm_down.1} parent=11 // pred_region
          _
        $region60: #{double_xlstm_down.1} parent=11 // pred_fallthru
          _
        // Predicated region
        $region61: #{double_xlstm_down.1} parent=11 // pred_check
          %p705 = pneg %p342
        $region62: #{double_xlstm_down.1} parent=11 // pred_check_branch
          %707 = sbr.rel (%p705) target = $region64
        $region63: #{double_xlstm_down.1} parent=11 // pred_region
          %s709 = ssub.s32 64, 64
          %710 = vsyncadd [#allocation18], %s709
          %s712 = sshll.u32 [#allocation19], 4
          %s713 = int_to_ptr.vmem [resolvable:$true] %s712
          %715 = dma.hbm_to_vmem [thread:$0]  %s13, 64, %s713, [#allocation18]
        $region64: #{double_xlstm_down.1} parent=11 // pred_fallthru
          _
        // Predicated region
        $region65: #{double_xlstm_down.1} parent=11 // pred_check
          %p716 = pneg %p363
        $region66: #{double_xlstm_down.1} parent=11 // pred_check_branch
          %718 = sbr.rel (%p716) target = $region68
        $region67: #{double_xlstm_down.1} parent=11 // pred_region
          %s720 = ssub.s32 16, 16
          %721 = vsyncadd [#allocation21], %s720
          %s723 = sshll.u32 [#allocation20], 4
          %s724 = int_to_ptr.vmem [resolvable:$true] %s723
          %726 = dma.hbm_to_vmem [thread:$0]  %s14, 16, %s724, [#allocation21]
        $region68: #{double_xlstm_down.1} parent=11 // pred_fallthru
          _
        // Predicated region
        $region69: #{double_xlstm_down.1} parent=11 // pred_check
          %p727 = pneg %p384
        $region70: #{double_xlstm_down.1} parent=11 // pred_check_branch
          %729 = sbr.rel (%p727) target = $region72
        $region71: #{double_xlstm_down.1} parent=11 // pred_region
          _
        $region72: #{double_xlstm_down.1} parent=11 // pred_fallthru
          _
        // Predicated region
        $region73: #{double_xlstm_down.1} parent=11 // pred_check
          %p730 = pneg %p405
        $region74: #{double_xlstm_down.1} parent=11 // pred_check_branch
          %732 = sbr.rel (%p730) target = $region76
        $region75: #{double_xlstm_down.1} parent=11 // pred_region
          _
        $region76: #{double_xlstm_down.1} parent=11 // pred_fallthru
          _
        // Predicated region
        $region77: #{double_xlstm_down.1} parent=11 // pred_check
          %p733 = pneg %p426
        $region78: #{double_xlstm_down.1} parent=11 // pred_check_branch
          %735 = sbr.rel (%p733) target = $region80
        $region79: #{double_xlstm_down.1} parent=11 // pred_region
          %s737 = ssub.s32 16, 16
          %738 = vsyncadd [#allocation21], %s737
          %s740 = sshll.u32 [#allocation22], 4
          %s741 = int_to_ptr.vmem [resolvable:$true] %s740
          %743 = dma.hbm_to_vmem [thread:$0]  %s17, 16, %s741, [#allocation21]
        $region80: #{double_xlstm_down.1} parent=11 // pred_fallthru
          _
        // Predicated region
        $region81: #{double_xlstm_down.1} parent=11 // pred_check
          %p744 = pneg %p447
        $region82: #{double_xlstm_down.1} parent=11 // pred_check_branch
          %746 = sbr.rel (%p744) target = $region84
        $region83: #{double_xlstm_down.1} parent=11 // pred_region
          %s748 = ssub.s32 16, 16
          %749 = vsyncadd [#allocation24], %s748
          %s751 = sshll.u32 [#allocation23], 4
          %s752 = int_to_ptr.vmem [resolvable:$true] %s751
          %754 = dma.hbm_to_vmem [thread:$0]  %s18, 16, %s752, [#allocation24]
        $region84: #{double_xlstm_down.1} parent=11 // pred_fallthru
          _
        // Predicated region
        $region85: #{double_xlstm_down.1} parent=11 // pred_check
          %p755 = pneg %p468
        $region86: #{double_xlstm_down.1} parent=11 // pred_check_branch
          %757 = sbr.rel (%p755) target = $region88
        $region87: #{double_xlstm_down.1} parent=11 // pred_region
          _
        $region88: #{double_xlstm_down.1} parent=11 // pred_fallthru
          _
        // Predicated region
        $region89: #{double_xlstm_down.1} parent=11 // pred_check
          %p758 = pneg %p489
        $region90: #{double_xlstm_down.1} parent=11 // pred_check_branch
          %760 = sbr.rel (%p758) target = $region92
        $region91: #{double_xlstm_down.1} parent=11 // pred_region
          _
        $region92: #{double_xlstm_down.1} parent=11 // pred_fallthru
          _
        // Predicated region
        $region93: #{double_xlstm_down.1} parent=11 // pred_check
          %p761 = pneg %p510
        $region94: #{double_xlstm_down.1} parent=11 // pred_check_branch
          %763 = sbr.rel (%p761) target = $region96
        $region95: #{double_xlstm_down.1} parent=11 // pred_region
          _
        $region96: #{double_xlstm_down.1} parent=11 // pred_fallthru
          _
        // Predicated region
        $region97: #{double_xlstm_down.1} parent=11 // pred_check
          %p764 = pneg %p531
        $region98: #{double_xlstm_down.1} parent=11 // pred_check_branch
          %766 = sbr.rel (%p764) target = $region100
        $region99: #{double_xlstm_down.1} parent=11 // pred_region
          _
        $region100: #{double_xlstm_down.1} parent=11 // pred_fallthru
          _
        // Predicated region
        $region101: #{double_xlstm_down.1} parent=11 // pred_check
          %p767 = pneg %p552
        $region102: #{double_xlstm_down.1} parent=11 // pred_check_branch
          %769 = sbr.rel (%p767) target = $region104
        $region103: #{double_xlstm_down.1} parent=11 // pred_region
          _
        $region104: #{double_xlstm_down.1} parent=11 // pred_fallthru
          _
      $region12: #{double_xlstm_down.1} parent=5 // pred_fallthru
        _
      %p770 = scmp.lt.s32.totalorder %s43, 2
      // Predicated region
      $region105: #{double_xlstm_down.1} parent=5 // pred_check
        %p771 = pneg %p770
      $region106: #{double_xlstm_down.1} parent=5 // pred_check_branch
        %773 = sbr.rel (%p771) target = $region108
      $region107: #{double_xlstm_down.1} parent=5 // pred_region
        // Predicated region
        $region109: #{double_xlstm_down.1} parent=107 // pred_check
          %p774 = pneg %p63
        $region110: #{double_xlstm_down.1} parent=107 // pred_check_branch
          %776 = sbr.rel (%p774) target = $region112
        $region111: #{double_xlstm_down.1} parent=107 // pred_region
          %s777 = sand.u32 %s53, 1
          %s778 = scalar_lea.sflag [#allocation3], %s777
          %s779 = sand.u32 %s53, 1
          %s780 = smul.addr %s779, 8
          %s781 = scalar_lea.vmem [#allocation2], %s780
          %s783 = ssub.s32 128, 128
          %784 = vsyncadd %s778, %s783
          %s785 = smul.addr %s43, 128
          %s786 = scalar_lea.hbm %s0, %s785
          %s788 = sshll.u32 %s781, 4
          %s789 = int_to_ptr.vmem [resolvable:$true] %s788
          %791 = dma.hbm_to_vmem [thread:$0]  %s786, 128, %s789, %s778
        $region112: #{double_xlstm_down.1} parent=107 // pred_fallthru
          _
      $region108: #{double_xlstm_down.1} parent=5 // pred_fallthru
        _
      %p792 = scmp.le.s32.totalorder 1, %s43
      %p793 = scmp.lt.s32.totalorder %s43, 3
      %p794 = pnand %p792, %p793
      %p795 = pneg %p794
      // Predicated region
      $region113: #{double_xlstm_down.1} parent=5 // pred_check
        _
      $region114: #{double_xlstm_down.1} parent=5 // pred_check_branch
        %797 = sbr.rel (%p794) target = $region116
      $region115: #{double_xlstm_down.1} parent=5 // pred_region
        %s798 = ssub.s32 %s43, 1
        %s799 = sand.u32 %s56, 1
        %s800 = scalar_lea.sflag [#allocation3], %s799
        %s801 = sand.u32 %s56, 1
        %s802 = smul.addr %s801, 8
        %s803 = scalar_lea.vmem [#allocation2], %s802
        // Predicated region
        $region117: #{double_xlstm_down.1} parent=115 // pred_check
          %p804 = pneg %p69
        $region118: #{double_xlstm_down.1} parent=115 // pred_check_branch
          %806 = sbr.rel (%p804) target = $region120
        $region119: #{double_xlstm_down.1} parent=115 // pred_region
          %807 = dma.done %s800, 128
        $region120: #{double_xlstm_down.1} parent=115 // pred_fallthru
          _
        // Predicated region
        $region121: #{double_xlstm_down.1} parent=115 // pred_check
          %p808 = pneg %p90
        $region122: #{double_xlstm_down.1} parent=115 // pred_check_branch
          %810 = sbr.rel (%p808) target = $region124
        $region123: #{double_xlstm_down.1} parent=115 // pred_region
          %811 = dma.done [#allocation6], 16
        $region124: #{double_xlstm_down.1} parent=115 // pred_fallthru
          _
        // Predicated region
        $region125: #{double_xlstm_down.1} parent=115 // pred_check
          %p812 = pneg %p111
        $region126: #{double_xlstm_down.1} parent=115 // pred_check_branch
          %814 = sbr.rel (%p812) target = $region128
        $region127: #{double_xlstm_down.1} parent=115 // pred_region
          %815 = dma.done [#allocation6], 256
        $region128: #{double_xlstm_down.1} parent=115 // pred_fallthru
          _
        // Predicated region
        $region129: #{double_xlstm_down.1} parent=115 // pred_check
          %p816 = pneg %p132
        $region130: #{double_xlstm_down.1} parent=115 // pred_check_branch
          %818 = sbr.rel (%p816) target = $region132
        $region131: #{double_xlstm_down.1} parent=115 // pred_region
          %819 = dma.done [#allocation9], 64
        $region132: #{double_xlstm_down.1} parent=115 // pred_fallthru
          _
        // Predicated region
        $region133: #{double_xlstm_down.1} parent=115 // pred_check
          %p820 = pneg %p153
        $region134: #{double_xlstm_down.1} parent=115 // pred_check_branch
          %822 = sbr.rel (%p820) target = $region136
        $region135: #{double_xlstm_down.1} parent=115 // pred_region
          %823 = dma.done [#allocation9], 16
        $region136: #{double_xlstm_down.1} parent=115 // pred_fallthru
          _
        // Predicated region
        $region137: #{double_xlstm_down.1} parent=115 // pred_check
          %p824 = pneg %p195
        $region138: #{double_xlstm_down.1} parent=115 // pred_check_branch
          %826 = sbr.rel (%p824) target = $region140
        $region139: #{double_xlstm_down.1} parent=115 // pred_region
          %827 = dma.done [#allocation12], 512
        $region140: #{double_xlstm_down.1} parent=115 // pred_fallthru
          _
        // Predicated region
        $region141: #{double_xlstm_down.1} parent=115 // pred_check
          %p828 = pneg %p216
        $region142: #{double_xlstm_down.1} parent=115 // pred_check_branch
          %830 = sbr.rel (%p828) target = $region144
        $region143: #{double_xlstm_down.1} parent=115 // pred_region
          %831 = dma.done [#allocation12], 16
        $region144: #{double_xlstm_down.1} parent=115 // pred_fallthru
          _
        // Predicated region
        $region145: #{double_xlstm_down.1} parent=115 // pred_check
          %p832 = pneg %p237
        $region146: #{double_xlstm_down.1} parent=115 // pred_check_branch
          %834 = sbr.rel (%p832) target = $region148
        $region147: #{double_xlstm_down.1} parent=115 // pred_region
          %835 = dma.done [#allocation15], 16
        $region148: #{double_xlstm_down.1} parent=115 // pred_fallthru
          _
        // Predicated region
        $region149: #{double_xlstm_down.1} parent=115 // pred_check
          %p836 = pneg %p258
        $region150: #{double_xlstm_down.1} parent=115 // pred_check_branch
          %838 = sbr.rel (%p836) target = $region152
        $region151: #{double_xlstm_down.1} parent=115 // pred_region
          %839 = dma.done [#allocation15], 16
        $region152: #{double_xlstm_down.1} parent=115 // pred_fallthru
          _
        // Predicated region
        $region153: #{double_xlstm_down.1} parent=115 // pred_check
          %p840 = pneg %p300
        $region154: #{double_xlstm_down.1} parent=115 // pred_check_branch
          %842 = sbr.rel (%p840) target = $region156
        $region155: #{double_xlstm_down.1} parent=115 // pred_region
          %843 = dma.done [#allocation18], 16
        $region156: #{double_xlstm_down.1} parent=115 // pred_fallthru
          _
        // Predicated region
        $region157: #{double_xlstm_down.1} parent=115 // pred_check
          %p844 = pneg %p342
        $region158: #{double_xlstm_down.1} parent=115 // pred_check_branch
          %846 = sbr.rel (%p844) target = $region160
        $region159: #{double_xlstm_down.1} parent=115 // pred_region
          %847 = dma.done [#allocation18], 64
        $region160: #{double_xlstm_down.1} parent=115 // pred_fallthru
          _
        // Predicated region
        $region161: #{double_xlstm_down.1} parent=115 // pred_check
          %p848 = pneg %p363
        $region162: #{double_xlstm_down.1} parent=115 // pred_check_branch
          %850 = sbr.rel (%p848) target = $region164
        $region163: #{double_xlstm_down.1} parent=115 // pred_region
          %851 = dma.done [#allocation21], 16
        $region164: #{double_xlstm_down.1} parent=115 // pred_fallthru
          _
        // Predicated region
        $region165: #{double_xlstm_down.1} parent=115 // pred_check
          %p852 = pneg %p426
        $region166: #{double_xlstm_down.1} parent=115 // pred_check_branch
          %854 = sbr.rel (%p852) target = $region168
        $region167: #{double_xlstm_down.1} parent=115 // pred_region
          %855 = dma.done [#allocation21], 16
        $region168: #{double_xlstm_down.1} parent=115 // pred_fallthru
          _
        // Predicated region
        $region169: #{double_xlstm_down.1} parent=115 // pred_check
          %p856 = pneg %p447
        $region170: #{double_xlstm_down.1} parent=115 // pred_check_branch
          %858 = sbr.rel (%p856) target = $region172
        $region171: #{double_xlstm_down.1} parent=115 // pred_region
          %859 = dma.done [#allocation24], 16
        $region172: #{double_xlstm_down.1} parent=115 // pred_fallthru
          _
        %s860 = sand.u32 %s56, 1
        %s861 = scalar_lea.sflag [#allocation3], %s860
        %s862 = sand.u32 %s56, 1
        %s863 = smul.addr %s862, 8
        %s864 = scalar_lea.vmem [#allocation2], %s863
        %p865 = pneg %p69
        %p866 = pneg %p66
        %p867 = pneg %p90
        %p868 = pneg %p87
        %p869 = pneg %p111
        %p870 = pneg %p108
        %p871 = pneg %p132
        %p872 = pneg %p129
        %p873 = pneg %p153
        %p874 = pneg %p150
        %p875 = pneg %p174
        %p876 = pneg %p171
        %p877 = pneg %p195
        %p878 = pneg %p192
        %p879 = pneg %p216
        %p880 = pneg %p213
        %p881 = pneg %p237
        %p882 = pneg %p234
        %p883 = pneg %p258
        %p884 = pneg %p255
        %p885 = pneg %p279
        %p886 = pneg %p276
        %p887 = pneg %p300
        %p888 = pneg %p297
        %p889 = pneg %p321
        %p890 = pneg %p318
        %p891 = pneg %p342
        %p892 = pneg %p339
        %p893 = pneg %p363
        %p894 = pneg %p360
        %p895 = pneg %p384
        %p896 = pneg %p381
        %p897 = pneg %p405
        %p898 = pneg %p402
        %p899 = pneg %p426
        %p900 = pneg %p423
        %p901 = pneg %p447
        %p902 = pneg %p444
        %p903 = pneg %p468
        %p904 = pneg %p465
        %p905 = pneg %p489
        %p906 = pneg %p486
        %p907 = pneg %p510
        %p908 = pneg %p507
        %p909 = pneg %p531
        %p910 = pneg %p528
        %p911 = pneg %p552
        %p912 = pneg %p549
        %p913 = pneg %p578
        %p914 = pneg %p575
        %s915 = sand.u32 %s565, 1
        %s916 = scalar_lea.sflag [#allocation4], %s915
        %s917 = sand.u32 %s565, 1
        %s918 = smul.addr %s917, 8
        %s919 = scalar_lea.vmem [#allocation25], %s918
        %v921 = vld [vmem:[%s803] sm:$0xff]
        %v922 = vlaneseq
        %v923 = vshrl.u32 %v922, 7
        %v924 = vlaneseq
        %v925 = vand.u32 %v924, 127
        %vm926 = vcmp.ge.s32.totalorder %v923, %v925
        %v927 = vld [vmem:[#allocation5] sm:$0x1]
        %v928 = vld [vmem:[#allocation7] sm:$0xf]
        %v929 = vld [vmem:[#allocation7 + $0x4] sm:$0xf]
        %v930 = vld [vmem:[#allocation7 + $0x8] sm:$0xf]
        %v931 = vld [vmem:[#allocation7 + $0xc] sm:$0xf]
        %v932 = vld [vmem:[#allocation8] sm:$0xf]
        %v933 = vld [vmem:[#allocation10] sm:$0x1]
        %v934 = vld [vmem:[%s5] sm:$0xff]
        %v935 = vld [vmem:[%s5 + $0x8] sm:$0xff]
        %v936 = vld [vmem:[%s5 + $0x10] sm:$0xff]
        %v937 = vld [vmem:[%s5 + $0x18] sm:$0xff]
        %v938 = vld [vmem:[%s5 + $0x20] sm:$0xff]
        %v939 = vld [vmem:[%s5 + $0x28] sm:$0xff]
        %v940 = vld [vmem:[%s5 + $0x30] sm:$0xff]
        %v941 = vld [vmem:[%s5 + $0x38] sm:$0xff]
        %v942 = vld [vmem:[#allocation11] sm:$0xf]
        %v943 = vld [vmem:[#allocation11 + $0x4] sm:$0xf]
        %v944 = vld [vmem:[#allocation11 + $0x8] sm:$0xf]
        %v945 = vld [vmem:[#allocation11 + $0xc] sm:$0xf]
        %v946 = vld [vmem:[#allocation11 + $0x10] sm:$0xf]
        %v947 = vld [vmem:[#allocation11 + $0x14] sm:$0xf]
        %v948 = vld [vmem:[#allocation11 + $0x18] sm:$0xf]
        %v949 = vld [vmem:[#allocation11 + $0x1c] sm:$0xf]
        %v950 = vld [vmem:[#allocation13] sm:$0x1]
        %v951 = vld [vmem:[#allocation14] sm:$0x1]
        %v952 = vld [vmem:[#allocation16] sm:$0x1]
        %v953 = vld [vmem:[%s10] sm:$0xf]
        %v954 = vld [vmem:[%s10 + $0x4] sm:$0xf]
        %v955 = vld [vmem:[%s10 + $0x8] sm:$0xf]
        %v956 = vld [vmem:[%s10 + $0xc] sm:$0xf]
        %v957 = vld [vmem:[%s10 + $0x10] sm:$0xf]
        %v958 = vld [vmem:[%s10 + $0x14] sm:$0xf]
        %v959 = vld [vmem:[%s10 + $0x18] sm:$0xf]
        %v960 = vld [vmem:[%s10 + $0x1c] sm:$0xf]
        %vm961 = vcmask 261120
        %v962 = vsel %vm961, %v921, 0.0
        %963 = vadd.xlane.f32.xlu0 %v962
        %v964 = vpop.xlane.xlu0 %963
        %v965 = vrcp.pop 32.0
        %v966 = vmul.f32 %v964, %v965
        %v967 = vsub.f32 %v921, %v966
        %v968 = vmul.f32 %v967, %v967
        %v969 = vsel %vm961, %v968, 0.0
        %970 = vadd.xlane.f32.xlu0 %v969
        %v971 = vpop.xlane.xlu0 %970
        %v972 = vmul.f32 %v971, %v965
        %v973 = vadd.f32 %v972, 1e-05
        %v974 = vrsqrt.pop %v973
        %v975 = vmul.f32 %v967, %v974
        %v977 = vlaneseq
        %v978 = vshrl.u32 %v977, 7
        %v979 = vsub.s32 0, %v978
        %v980 = vrot.slane %v927, %v979
        %v982 = vmul.f32 %v975, %v980
        %v983 = vpack.c.bf16 %v982, %v982
        %v988 = vunpack.c.l.b16 %v928
        %v989 = vunpack.c.l.b16 %v929
        %v990 = vunpack.c.l.b16 %v930
        %v991 = vunpack.c.l.b16 %v931
        %v992 = vpack.c.b16 %v989, %v988
        %v993 = vpack.c.b16 %v991, %v990
        %v997 = vsel %vm961, %v983, 0
        %999 = vmatprep.subr.bf16.mxu0 0
        %1000 = vmatpush1.bf16.msra.mxu0 %v992
        %1001 = vmatprep.subr.bf16.mxu0 0
        %1002 = vmatpush1.bf16.msra.mxu0 %v993
        %1003 = vmatprep.subr.bf16.mxu0 0
        %1004 = vmatpush1.bf16.msra.mxu0 0
        %1005 = vmatprep.subr.bf16.mxu0 0
        %1006 = vmatpush1.bf16.msra.mxu0 0
        %1007 = vmatprep.subr.bf16.mxu0 0
        %1008 = vmatpush1.bf16.msra.mxu0 0
        %1009 = vmatprep.subr.bf16.mxu0 0
        %1010 = vmatpush1.bf16.msra.mxu0 0
        %1011 = vmatprep.subr.bf16.mxu0 0
        %1012 = vmatpush1.bf16.msra.mxu0 0
        %1013 = vmatprep.subr.bf16.mxu0 0
        %1014 = vmatpush1.bf16.msra.mxu0 0
        %1015 = vmatprep.subr.bf16.mxu0 0
        %1016 = vmatpush1.bf16.msra.mxu0 0
        %1017 = vmatprep.subr.bf16.mxu0 0
        %1018 = vmatpush1.bf16.msra.mxu0 0
        %1019 = vmatprep.subr.bf16.mxu0 0
        %1020 = vmatpush1.bf16.msra.mxu0 0
        %1021 = vmatprep.subr.bf16.mxu0 0
        %1022 = vmatpush1.bf16.msra.mxu0 0
        %1023 = vmatprep.subr.bf16.mxu0 0
        %1024 = vmatpush1.bf16.msra.mxu0 0
        %1025 = vmatprep.subr.bf16.mxu0 0
        %1026 = vmatpush1.bf16.msra.mxu0 0
        %1027 = vmatprep.subr.bf16.mxu0 0
        %1028 = vmatpush1.bf16.msra.mxu0 0
        %1029 = vmatprep.subr.bf16.mxu0 0
        %1030 = vmatpush1.bf16.msra.mxu0 0
        %1031 = vmatprep.mubr.bf16.mxu0 0
        %1032 = vmatmul.mubr.bf16.gmra.mrb[0].mxu0 %v997
        %v1033 = vpop.f32.mrb[0].mxu0
        %v1034 = vadd.f32 0.0, %v1033
        %v1035 = vpop.f32.mrb[0].mxu0
        %v1036 = vpop.f32.mrb[0].mxu0
        %v1037 = vpop.f32.mrb[0].mxu0
        %1038 = vdwg.mxu0
        %v1039 = vlaneseq
        %v1040 = vshrl.u32 %v1039, 7
        %v1041 = vsub.s32 3, %v1040
        %v1042 = vrot.slane %v932, %v1041
        %v1043 = vmul.f32 %v1034, %v1042
        %vm1044 = vcmp.ge.s32.totalorder %v923, 3
        %v1045 = vrot.slane %v1034, 5
        %v1046 = vsel %vm1044, 1, 0
        %vm1047 = vcmp.eq.s32.totalorder %v1046, 1
        %v1048 = vsel %vm1047, %v1045, 0.0
        %v1049 = vlaneseq
        %v1050 = vshrl.u32 %v1049, 7
        %v1051 = vsub.s32 0, %v1050
        %v1052 = vrot.slane %v932, %v1051
        %v1053 = vmul.f32 %v1048, %v1052
        %v1054 = vadd.f32 %v1043, %v1053
        %vm1055 = vcmp.ge.s32.totalorder %v923, 2
        %v1056 = vrot.slane %v1034, 6
        %v1057 = vsel %vm1055, 1, 0
        %vm1058 = vcmp.eq.s32.totalorder %v1057, 1
        %v1059 = vsel %vm1058, %v1056, 0.0
        %v1060 = vlaneseq
        %v1061 = vshrl.u32 %v1060, 7
        %v1062 = vsub.s32 1, %v1061
        %v1063 = vrot.slane %v932, %v1062
        %v1064 = vmul.f32 %v1059, %v1063
        %v1065 = vadd.f32 %v1054, %v1064
        %vm1066 = vcmp.ge.s32.totalorder %v923, 1
        %v1067 = vrot.slane %v1034, 7
        %v1068 = vsel %vm1066, 1, 0
        %vm1069 = vcmp.eq.s32.totalorder %v1068, 1
        %v1070 = vsel %vm1069, %v1067, 0.0
        %v1071 = vlaneseq
        %v1072 = vshrl.u32 %v1071, 7
        %v1073 = vsub.s32 2, %v1072
        %v1074 = vrot.slane %v932, %v1073
        %v1075 = vmul.f32 %v1070, %v1074
        %v1076 = vadd.f32 %v1065, %v1075
        %v1078 = vlaneseq
        %v1079 = vshrl.u32 %v1078, 7
        %v1080 = vsub.s32 0, %v1079
        %v1081 = vrot.slane %v933, %v1080
        %v1083 = vadd.f32 %v1076, %v1081
        %v1084 = vxor.u32 %v1083, 2147483648
        %v1085 = vmul.f32 %v1084, 1.442695
        %v1086 = vpow.pop %v1085
        %v1087 = vadd.f32 %v1086, 1.0
        %v1088 = vrcp.pop %v1087
        %v1089 = vmul.f32 1.0, %v1088
        %v1090 = vmul.f32 %v1083, %v1089
        %v1091 = vpack.c.bf16 %v1090, %v1090
        %v1100 = vunpack.c.l.b16 %v934
        %v1101 = vunpack.c.h.b16 %v934
        %v1102 = vunpack.c.l.b16 %v935
        %v1103 = vunpack.c.h.b16 %v935
        %v1104 = vunpack.c.l.b16 %v936
        %v1105 = vunpack.c.h.b16 %v936
        %v1106 = vunpack.c.l.b16 %v937
        %v1107 = vunpack.c.h.b16 %v937
        %v1108 = vunpack.c.l.b16 %v938
        %v1109 = vunpack.c.h.b16 %v938
        %v1110 = vunpack.c.l.b16 %v939
        %v1111 = vunpack.c.h.b16 %v939
        %v1112 = vunpack.c.l.b16 %v940
        %v1113 = vunpack.c.h.b16 %v940
        %v1114 = vunpack.c.l.b16 %v941
        %v1115 = vunpack.c.h.b16 %v941
        %v1116 = vpack.c.b16 %v1102, %v1100
        %v1117 = vpack.c.b16 %v1103, %v1101
        %v1118 = vpack.c.b16 %v1106, %v1104
        %v1119 = vpack.c.b16 %v1107, %v1105
        %v1120 = vpack.c.b16 %v1110, %v1108
        %v1121 = vpack.c.b16 %v1111, %v1109
        %v1122 = vpack.c.b16 %v1114, %v1112
        %v1123 = vpack.c.b16 %v1115, %v1113
        %vm1132 = vcmask 523264
        %v1134 = vsel %vm1132, %v1091, 0
        %1136 = vmatprep.subr.bf16.mxu0 %v1117
        %1137 = vmatpush1.bf16.msra.mxu0 %v1116
        %1138 = vmatprep.subr.bf16.mxu0 %v1119
        %1139 = vmatpush1.bf16.msra.mxu0 %v1118
        %1140 = vmatprep.subr.bf16.mxu0 %v1121
        %1141 = vmatpush1.bf16.msra.mxu0 %v1120
        %1142 = vmatprep.subr.bf16.mxu0 %v1123
        %1143 = vmatpush1.bf16.msra.mxu0 %v1122
        %1144 = vmatprep.subr.bf16.mxu0 0
        %1145 = vmatpush1.bf16.msra.mxu0 0
        %1146 = vmatprep.subr.bf16.mxu0 0
        %1147 = vmatpush1.bf16.msra.mxu0 0
        %1148 = vmatprep.subr.bf16.mxu0 0
        %1149 = vmatpush1.bf16.msra.mxu0 0
        %1150 = vmatprep.subr.bf16.mxu0 0
        %1151 = vmatpush1.bf16.msra.mxu0 0
        %1152 = vmatprep.subr.bf16.mxu0 0
        %1153 = vmatpush1.bf16.msra.mxu0 0
        %1154 = vmatprep.subr.bf16.mxu0 0
        %1155 = vmatpush1.bf16.msra.mxu0 0
        %1156 = vmatprep.subr.bf16.mxu0 0
        %1157 = vmatpush1.bf16.msra.mxu0 0
        %1158 = vmatprep.subr.bf16.mxu0 0
        %1159 = vmatpush1.bf16.msra.mxu0 0
        %1160 = vmatprep.subr.bf16.mxu0 0
        %1161 = vmatpush1.bf16.msra.mxu0 0
        %1162 = vmatprep.subr.bf16.mxu0 0
        %1163 = vmatpush1.bf16.msra.mxu0 0
        %1164 = vmatprep.subr.bf16.mxu0 0
        %1165 = vmatpush1.bf16.msra.mxu0 0
        %1166 = vmatprep.subr.bf16.mxu0 0
        %1167 = vmatpush1.bf16.msra.mxu0 0
        %1168 = vmatprep.mubr.bf16.mxu0 0
        %1169 = vmatmul.mubr.bf16.gmra.mrb[0].mxu0 %v1134
        %v1170 = vpop.f32.mrb[0].mxu0
        %v1171 = vadd.f32 0.0, %v1170
        %v1172 = vpop.f32.mrb[0].mxu0
        %v1173 = vadd.f32 0.0, %v1172
        %v1174 = vpop.f32.mrb[0].mxu0
        %v1175 = vpop.f32.mrb[0].mxu0
        %1176 = vdwg.mxu0
        %v1177 = vpack.c.bf16 %v1034, %v1034
        %v1186 = vunpack.c.l.b16 %v942
        %v1187 = vunpack.c.l.b16 %v943
        %v1188 = vunpack.c.l.b16 %v944
        %v1189 = vunpack.c.l.b16 %v945
        %v1190 = vunpack.c.l.b16 %v946
        %v1191 = vunpack.c.l.b16 %v947
        %v1192 = vunpack.c.l.b16 %v948
        %v1193 = vunpack.c.l.b16 %v949
        %v1194 = vpack.c.b16 %v1187, %v1186
        %v1195 = vpack.c.b16 %v1189, %v1188
        %v1196 = vpack.c.b16 %v1191, %v1190
        %v1197 = vpack.c.b16 %v1193, %v1192
        %v1203 = vsel %vm1132, %v1177, 0
        %1205 = vmatprep.subr.bf16.mxu0 0
        %1206 = vmatpush1.bf16.msra.mxu0 %v1194
        %1207 = vmatprep.subr.bf16.mxu0 0
        %1208 = vmatpush1.bf16.msra.mxu0 %v1195
        %1209 = vmatprep.subr.bf16.mxu0 0
        %1210 = vmatpush1.bf16.msra.mxu0 %v1196
        %1211 = vmatprep.subr.bf16.mxu0 0
        %1212 = vmatpush1.bf16.msra.mxu0 %v1197
        %1213 = vmatprep.subr.bf16.mxu0 0
        %1214 = vmatpush1.bf16.msra.mxu0 0
        %1215 = vmatprep.subr.bf16.mxu0 0
        %1216 = vmatpush1.bf16.msra.mxu0 0
        %1217 = vmatprep.subr.bf16.mxu0 0
        %1218 = vmatpush1.bf16.msra.mxu0 0
        %1219 = vmatprep.subr.bf16.mxu0 0
        %1220 = vmatpush1.bf16.msra.mxu0 0
        %1221 = vmatprep.subr.bf16.mxu0 0
        %1222 = vmatpush1.bf16.msra.mxu0 0
        %1223 = vmatprep.subr.bf16.mxu0 0
        %1224 = vmatpush1.bf16.msra.mxu0 0
        %1225 = vmatprep.subr.bf16.mxu0 0
        %1226 = vmatpush1.bf16.msra.mxu0 0
        %1227 = vmatprep.subr.bf16.mxu0 0
        %1228 = vmatpush1.bf16.msra.mxu0 0
        %1229 = vmatprep.subr.bf16.mxu0 0
        %1230 = vmatpush1.bf16.msra.mxu0 0
        %1231 = vmatprep.subr.bf16.mxu0 0
        %1232 = vmatpush1.bf16.msra.mxu0 0
        %1233 = vmatprep.subr.bf16.mxu0 0
        %1234 = vmatpush1.bf16.msra.mxu0 0
        %1235 = vmatprep.subr.bf16.mxu0 0
        %1236 = vmatpush1.bf16.msra.mxu0 0
        %1237 = vmatprep.mubr.bf16.mxu0 0
        %1238 = vmatmul.mubr.bf16.gmra.mrb[0].mxu0 %v1203
        %v1239 = vpop.f32.mrb[0].mxu0
        %v1240 = vadd.f32 0.0, %v1239
        %v1241 = vpop.f32.mrb[0].mxu0
        %v1242 = vpop.f32.mrb[0].mxu0
        %v1243 = vpop.f32.mrb[0].mxu0
        %1244 = vdwg.mxu0
        %1246 = vrot.lane.b32.xlu0 %v1240, 64
        %v1247 = vpop.permute.xlu0 %1246
        %v1249 = vadd.f32 %v1173, %v1247
        %v1251 = vlaneseq
        %v1252 = vshrl.u32 %v1251, 7
        %v1253 = vsub.s32 0, %v1252
        %v1254 = vrot.slane %v950, %v1253
        %v1256 = vadd.f32 %v1249, %v1254
        %v1257 = vsub.f32 0.0, %v1256
        %v1258 = vmax.f32 %v1257, 0.0
        %vm1259 = vcmp.ne.f32.partialorder %v1257, %v1257
        %v1260 = vadd.f32 %v1257, 0.0
        %v1261 = vand.u32 2147483647, %v1257
        %v1262 = vsub.f32 0.0, %v1261
        %v1263 = vmul.f32 %v1262, 1.442695
        %v1264 = vpow.pop %v1263
        %v1265 = vadd.f32 %v1264, 1.0
        %v1266 = vlog2.pop %v1265
        %v1267 = vmul.f32 %v1266, 0.6931472
        %v1268 = vmul.f32 -0.5, %v1264
        %v1269 = vadd.f32 %v1268, 1.0
        %v1270 = vmul.f32 %v1269, %v1264
        %v1271 = vand.u32 2147483647, %v1264
        %vm1272 = vcmp.lt.f32.partialorder %v1271, 0.0004427343
        %v1273 = vsel %vm1272, %v1270, %v1267
        %v1274 = vadd.f32 %v1258, %v1273
        %v1275 = vsel %vm1259, %v1260, %v1274
        %v1276 = vsub.f32 0.0, %v1275
        %1278 = vrot.lane.b32.xlu0 %v1276, 124
        %v1279 = vpop.permute.xlu0 %1278
        %v1281 = vrot.slane %v1279, 7
        %v1282 = vsel %vm1069, %v1281, 0.0
        %1284 = vrot.lane.b32.xlu0 %v1282, 4
        %v1285 = vpop.permute.xlu0 %1284
        %v1287 = vadd.f32 %v1276, %v1285
        %1289 = vrot.lane.b32.xlu0 %v1287, 124
        %v1290 = vpop.permute.xlu0 %1289
        %v1292 = vrot.slane %v1290, 6
        %v1293 = vsel %vm1058, %v1292, 0.0
        %1295 = vrot.lane.b32.xlu0 %v1293, 4
        %v1296 = vpop.permute.xlu0 %1295
        %v1298 = vadd.f32 %v1287, %v1296
        %vm1299 = vcmp.ge.s32.totalorder %v923, 4
        %1301 = vrot.lane.b32.xlu0 %v1298, 124
        %v1302 = vpop.permute.xlu0 %1301
        %v1304 = vrot.slane %v1302, 4
        %v1305 = vsel %vm1299, 1, 0
        %vm1306 = vcmp.eq.s32.totalorder %v1305, 1
        %v1307 = vsel %vm1306, %v1304, 0.0
        %1309 = vrot.lane.b32.xlu0 %v1307, 4
        %v1310 = vpop.permute.xlu0 %1309
        %v1312 = vadd.f32 %v1298, %v1310
        %1314 = vrot.lane.b32.xlu0 %v1312, 124
        %v1315 = vpop.permute.xlu0 %1314
        %1317 = vxpose.xlu0.b32.start [1/16] %v1315, 128
        %1318 = vxpose.xlu0.b32.cont [2/16] 0.0, 128
        %1319 = vxpose.xlu0.b32.cont [3/16] 0.0, 128
        %1320 = vxpose.xlu0.b32.cont [4/16] 0.0, 128
        %1321 = vxpose.xlu0.b32.cont [5/16] 0.0, 128
        %1322 = vxpose.xlu0.b32.cont [6/16] 0.0, 128
        %1323 = vxpose.xlu0.b32.cont [7/16] 0.0, 128
        %1324 = vxpose.xlu0.b32.cont [8/16] 0.0, 128
        %1325 = vxpose.xlu0.b32.cont [9/16] 0.0, 128
        %1326 = vxpose.xlu0.b32.cont [10/16] 0.0, 128
        %1327 = vxpose.xlu0.b32.cont [11/16] 0.0, 128
        %1328 = vxpose.xlu0.b32.cont [12/16] 0.0, 128
        %1329 = vxpose.xlu0.b32.cont [13/16] 0.0, 128
        %1330 = vxpose.xlu0.b32.cont [14/16] 0.0, 128
        %1331 = vxpose.xlu0.b32.cont [15/16] 0.0, 128
        %1332 = vxpose.xlu0.b32.end [16/16] 0.0, 128
        %v1333 = vpop.trf.xlu0
        %v1334 = vpop.trf.xlu0
        %v1335 = vpop.trf.xlu0
        %v1336 = vpop.trf.xlu0
        %v1337 = vpop.trf.xlu0
        %v1338 = vpop.trf.xlu0
        %v1339 = vpop.trf.xlu0
        %v1340 = vpop.trf.xlu0
        %v1341 = vpop.trf.xlu0
        %v1342 = vpop.trf.xlu0
        %v1343 = vpop.trf.xlu0
        %v1344 = vpop.trf.xlu0
        %v1345 = vpop.trf.xlu0
        %v1346 = vpop.trf.xlu0
        %v1347 = vpop.trf.xlu0
        %v1348 = vpop.trf.xlu0
        %1349 = vxpose.xlu0.b32.start [1/16] %v1256, 128
        %1350 = vxpose.xlu0.b32.cont [2/16] 0.0, 128
        %1351 = vxpose.xlu0.b32.cont [3/16] 0.0, 128
        %1352 = vxpose.xlu0.b32.cont [4/16] 0.0, 128
        %1353 = vxpose.xlu0.b32.cont [5/16] 0.0, 128
        %1354 = vxpose.xlu0.b32.cont [6/16] 0.0, 128
        %1355 = vxpose.xlu0.b32.cont [7/16] 0.0, 128
        %1356 = vxpose.xlu0.b32.cont [8/16] 0.0, 128
        %1357 = vxpose.xlu0.b32.cont [9/16] 0.0, 128
        %1358 = vxpose.xlu0.b32.cont [10/16] 0.0, 128
        %1359 = vxpose.xlu0.b32.cont [11/16] 0.0, 128
        %1360 = vxpose.xlu0.b32.cont [12/16] 0.0, 128
        %1361 = vxpose.xlu0.b32.cont [13/16] 0.0, 128
        %1362 = vxpose.xlu0.b32.cont [14/16] 0.0, 128
        %1363 = vxpose.xlu0.b32.cont [15/16] 0.0, 128
        %1364 = vxpose.xlu0.b32.end [16/16] 0.0, 128
        %v1365 = vpop.trf.xlu0
        %v1366 = vpop.trf.xlu0
        %v1367 = vpop.trf.xlu0
        %v1368 = vpop.trf.xlu0
        %v1369 = vpop.trf.xlu0
        %v1370 = vpop.trf.xlu0
        %v1371 = vpop.trf.xlu0
        %v1372 = vpop.trf.xlu0
        %v1373 = vpop.trf.xlu0
        %v1374 = vpop.trf.xlu0
        %v1375 = vpop.trf.xlu0
        %v1376 = vpop.trf.xlu0
        %v1377 = vpop.trf.xlu0
        %v1378 = vpop.trf.xlu0
        %v1379 = vpop.trf.xlu0
        %v1380 = vpop.trf.xlu0
        %v1381 = vpack.c.bf16 %v1171, %v1171
        %1382 = vset.pattern.permute.xlu0 4
        %1383 = vperm.xlu0 %1382, %v1312
        %v1384 = vpop.permute.xlu0 %1383
        %v1386 = vlaneseq
        %v1387 = vshrl.u32 %v1386, 7
        %v1388 = vsub.s32 0, %v1387
        %v1389 = vrot.slane %v1333, %v1388
        %v1390 = vsub.f32 %v1384, %v1389
        %v1391 = vsel %vm926, %v1390, -inf
        %v1392 = vlaneseq
        %v1393 = vshrl.u32 %v1392, 7
        %v1394 = vsub.s32 0, %v1393
        %v1395 = vrot.slane %v1365, %v1394
        %v1396 = vadd.f32 %v1391, %v1395
        %vm1397 = vcmask 64512
        %v1398 = vsel %vm1397, %v1396, -inf
        %1399 = vmax.xlane.f32.xlu0 %v1398
        %v1400 = vpop.xlane.xlu0 %1399
        %v1401 = vsub.f32 %v1396, %v1400
        %v1402 = vmul.f32 %v1401, 1.442695
        %v1403 = vpow.pop %v1402
        %1405 = vrot.lane.b32.xlu0 %v1381, 64
        %v1406 = vpop.permute.xlu0 %1405
        %vm1407 = vcmask 130048
        %v1409 = vsel %vm1407, %v1381, 0
        %v1412 = vsel %vm1407, %v1406, 0
        %1414 = vmatprep.subr.bf16.mxu0 0
        %1415 = vmatpush1.bf16.xpose.msra.mxu0 %v1412
        %1416 = vmatprep.subr.bf16.mxu0 0
        %1417 = vmatpush1.bf16.xpose.msra.mxu0 0
        %1418 = vmatprep.subr.bf16.mxu0 0
        %1419 = vmatpush1.bf16.xpose.msra.mxu0 0
        %1420 = vmatprep.subr.bf16.mxu0 0
        %1421 = vmatpush1.bf16.xpose.msra.mxu0 0
        %1422 = vmatprep.subr.bf16.mxu0 0
        %1423 = vmatpush1.bf16.xpose.msra.mxu0 0
        %1424 = vmatprep.subr.bf16.mxu0 0
        %1425 = vmatpush1.bf16.xpose.msra.mxu0 0
        %1426 = vmatprep.subr.bf16.mxu0 0
        %1427 = vmatpush1.bf16.xpose.msra.mxu0 0
        %1428 = vmatprep.subr.bf16.mxu0 0
        %1429 = vmatpush1.bf16.xpose.msra.mxu0 0
        %1430 = vmatprep.subr.bf16.mxu0 0
        %1431 = vmatpush1.bf16.xpose.msra.mxu0 0
        %1432 = vmatprep.subr.bf16.mxu0 0
        %1433 = vmatpush1.bf16.xpose.msra.mxu0 0
        %1434 = vmatprep.subr.bf16.mxu0 0
        %1435 = vmatpush1.bf16.xpose.msra.mxu0 0
        %1436 = vmatprep.subr.bf16.mxu0 0
        %1437 = vmatpush1.bf16.xpose.msra.mxu0 0
        %1438 = vmatprep.subr.bf16.mxu0 0
        %1439 = vmatpush1.bf16.xpose.msra.mxu0 0
        %1440 = vmatprep.subr.bf16.mxu0 0
        %1441 = vmatpush1.bf16.xpose.msra.mxu0 0
        %1442 = vmatprep.subr.bf16.mxu0 0
        %1443 = vmatpush1.bf16.xpose.msra.mxu0 0
        %1444 = vmatprep.subr.bf16.mxu0 0
        %1445 = vmatpush1.bf16.xpose.msra.mxu0 0
        %1446 = vmatprep.mubr.bf16.mxu0 0
        %1447 = vmatmul.mubr.bf16.gmra.mrb[0].mxu0 %v1409
        %v1448 = vpop.f32.mrb[0].mxu0
        %v1449 = vadd.f32 0.0, %v1448
        %v1450 = vpop.f32.mrb[0].mxu0
        %v1451 = vpop.f32.mrb[0].mxu0
        %v1452 = vpop.f32.mrb[0].mxu0
        %1453 = vdwg.mxu0
        %v1454 = vmul.f32 %v1449, %v1403
        %v1455 = vsel %vm1407, %v1240, 1.0
        %v1456 = vpack.c.bf16 %v1455, %v1455
        %v1457 = vpack.c.bf16 %v1454, %v1454
        %v1459 = vsel %vm1397, %v1457, 0
        %vm1461 = vcmask 1043456
        %v1463 = vsel %vm1461, %v1456, 0
        %1465 = vmatprep.subr.bf16.mxu0 0
        %1466 = vmatpush1.bf16.msra.mxu0 %v1463
        %1467 = vmatprep.subr.bf16.mxu0 0
        %1468 = vmatpush1.bf16.msra.mxu0 0
        %1469 = vmatprep.subr.bf16.mxu0 0
        %1470 = vmatpush1.bf16.msra.mxu0 0
        %1471 = vmatprep.subr.bf16.mxu0 0
        %1472 = vmatpush1.bf16.msra.mxu0 0
        %1473 = vmatprep.subr.bf16.mxu0 0
        %1474 = vmatpush1.bf16.msra.mxu0 0
        %1475 = vmatprep.subr.bf16.mxu0 0
        %1476 = vmatpush1.bf16.msra.mxu0 0
        %1477 = vmatprep.subr.bf16.mxu0 0
        %1478 = vmatpush1.bf16.msra.mxu0 0
        %1479 = vmatprep.subr.bf16.mxu0 0
        %1480 = vmatpush1.bf16.msra.mxu0 0
        %1481 = vmatprep.subr.bf16.mxu0 0
        %1482 = vmatpush1.bf16.msra.mxu0 0
        %1483 = vmatprep.subr.bf16.mxu0 0
        %1484 = vmatpush1.bf16.msra.mxu0 0
        %1485 = vmatprep.subr.bf16.mxu0 0
        %1486 = vmatpush1.bf16.msra.mxu0 0
        %1487 = vmatprep.subr.bf16.mxu0 0
        %1488 = vmatpush1.bf16.msra.mxu0 0
        %1489 = vmatprep.subr.bf16.mxu0 0
        %1490 = vmatpush1.bf16.msra.mxu0 0
        %1491 = vmatprep.subr.bf16.mxu0 0
        %1492 = vmatpush1.bf16.msra.mxu0 0
        %1493 = vmatprep.subr.bf16.mxu0 0
        %1494 = vmatpush1.bf16.msra.mxu0 0
        %1495 = vmatprep.subr.bf16.mxu0 0
        %1496 = vmatpush1.bf16.msra.mxu0 0
        %1497 = vmatprep.mubr.bf16.mxu0 0
        %1498 = vmatmul.mubr.bf16.gmra.mrb[0].mxu0 %v1459
        %v1499 = vpop.f32.mrb[0].mxu0
        %v1500 = vadd.f32 0.0, %v1499
        %v1501 = vpop.f32.mrb[0].mxu0
        %v1502 = vpop.f32.mrb[0].mxu0
        %v1503 = vpop.f32.mrb[0].mxu0
        %1504 = vdwg.mxu0
        %v1505 = vand.u32 2147483647, %v1500
        %v1506 = vsub.f32 0.0, %v1400
        %v1507 = vmul.f32 %v1506, 1.442695
        %v1508 = vpow.pop %v1507
        %v1509 = vmax.f32 %v1505, %v1508
        %v1510 = vadd.f32 %v1509, 1e-06
        %v1511 = vrcp.pop %v1510
        %1513 = vset.pattern.permute.xlu0 16
        %1514 = vperm.xlu0 %1513, %v1511
        %v1515 = vpop.permute.xlu0 %1514
        %v1517 = vmul.f32 %v1500, %v1515
        %v1518 = vsel %vm1407, %v1517, 0.0
        %1519 = vadd.xlane.f32.xlu0 %v1518
        %v1520 = vpop.xlane.xlu0 %1519
        %v1521 = vrcp.pop 16.0
        %v1522 = vmul.f32 %v1520, %v1521
        %v1523 = vsub.f32 %v1517, %v1522
        %v1524 = vmul.f32 %v1523, %v1523
        %v1525 = vsel %vm1407, %v1524, 0.0
        %1526 = vadd.xlane.f32.xlu0 %v1525
        %v1527 = vpop.xlane.xlu0 %1526
        %v1528 = vmul.f32 %v1527, %v1521
        %v1529 = vadd.f32 %v1528, 1e-05
        %v1530 = vrsqrt.pop %v1529
        %v1531 = vmul.f32 %v1523, %v1530
        %1532 = vset.pattern.permute.xlu0 5
        %1533 = vperm.xlu0 %1532, %v1312
        %v1534 = vpop.permute.xlu0 %1533
        %v1536 = vlaneseq
        %v1537 = vshrl.u32 %v1536, 7
        %v1538 = vsub.s32 1, %v1537
        %v1539 = vrot.slane %v1333, %v1538
        %v1540 = vsub.f32 %v1534, %v1539
        %v1541 = vsel %vm926, %v1540, -inf
        %v1542 = vlaneseq
        %v1543 = vshrl.u32 %v1542, 7
        %v1544 = vsub.s32 1, %v1543
        %v1545 = vrot.slane %v1365, %v1544
        %v1546 = vadd.f32 %v1541, %v1545
        %v1547 = vsel %vm1397, %v1546, -inf
        %1548 = vmax.xlane.f32.xlu0 %v1547
        %v1549 = vpop.xlane.xlu0 %1548
        %v1550 = vsub.f32 %v1546, %v1549
        %v1551 = vmul.f32 %v1550, 1.442695
        %v1552 = vpow.pop %v1551
        %1553 = vrot.lane.b32.xlu0 %v1381, 112
        %v1554 = vpop.permute.xlu0 %1553
        %1555 = vrot.lane.b32.xlu0 %v1381, 48
        %v1556 = vpop.permute.xlu0 %1555
        %v1558 = vsel %vm1407, %v1554, 0
        %v1561 = vsel %vm1407, %v1556, 0
        %1563 = vmatprep.subr.bf16.mxu0 0
        %1564 = vmatpush1.bf16.xpose.msra.mxu0 %v1561
        %1565 = vmatprep.subr.bf16.mxu0 0
        %1566 = vmatpush1.bf16.xpose.msra.mxu0 0
        %1567 = vmatprep.subr.bf16.mxu0 0
        %1568 = vmatpush1.bf16.xpose.msra.mxu0 0
        %1569 = vmatprep.subr.bf16.mxu0 0
        %1570 = vmatpush1.bf16.xpose.msra.mxu0 0
        %1571 = vmatprep.subr.bf16.mxu0 0
        %1572 = vmatpush1.bf16.xpose.msra.mxu0 0
        %1573 = vmatprep.subr.bf16.mxu0 0
        %1574 = vmatpush1.bf16.xpose.msra.mxu0 0
        %1575 = vmatprep.subr.bf16.mxu0 0
        %1576 = vmatpush1.bf16.xpose.msra.mxu0 0
        %1577 = vmatprep.subr.bf16.mxu0 0
        %1578 = vmatpush1.bf16.xpose.msra.mxu0 0
        %1579 = vmatprep.subr.bf16.mxu0 0
        %1580 = vmatpush1.bf16.xpose.msra.mxu0 0
        %1581 = vmatprep.subr.bf16.mxu0 0
        %1582 = vmatpush1.bf16.xpose.msra.mxu0 0
        %1583 = vmatprep.subr.bf16.mxu0 0
        %1584 = vmatpush1.bf16.xpose.msra.mxu0 0
        %1585 = vmatprep.subr.bf16.mxu0 0
        %1586 = vmatpush1.bf16.xpose.msra.mxu0 0
        %1587 = vmatprep.subr.bf16.mxu0 0
        %1588 = vmatpush1.bf16.xpose.msra.mxu0 0
        %1589 = vmatprep.subr.bf16.mxu0 0
        %1590 = vmatpush1.bf16.xpose.msra.mxu0 0
        %1591 = vmatprep.subr.bf16.mxu0 0
        %1592 = vmatpush1.bf16.xpose.msra.mxu0 0
        %1593 = vmatprep.subr.bf16.mxu0 0
        %1594 = vmatpush1.bf16.xpose.msra.mxu0 0
        %1595 = vmatprep.mubr.bf16.mxu0 0
        %1596 = vmatmul.mubr.bf16.gmra.mrb[0].mxu0 %v1558
        %v1597 = vpop.f32.mrb[0].mxu0
        %v1598 = vadd.f32 0.0, %v1597
        %v1599 = vpop.f32.mrb[0].mxu0
        %v1600 = vpop.f32.mrb[0].mxu0
        %v1601 = vpop.f32.mrb[0].mxu0
        %1602 = vdwg.mxu0
        %v1603 = vmul.f32 %v1598, %v1552
        %1604 = vrot.lane.b32.xlu0 %v1240, 112
        %v1605 = vpop.permute.xlu0 %1604
        %v1607 = vsel %vm1407, %v1605, 1.0
        %v1608 = vpack.c.bf16 %v1607, %v1607
        %v1609 = vpack.c.bf16 %v1603, %v1603
        %v1611 = vsel %vm1397, %v1609, 0
        %v1614 = vsel %vm1461, %v1608, 0
        %1616 = vmatprep.subr.bf16.mxu0 0
        %1617 = vmatpush1.bf16.msra.mxu0 %v1614
        %1618 = vmatprep.subr.bf16.mxu0 0
        %1619 = vmatpush1.bf16.msra.mxu0 0
        %1620 = vmatprep.subr.bf16.mxu0 0
        %1621 = vmatpush1.bf16.msra.mxu0 0
        %1622 = vmatprep.subr.bf16.mxu0 0
        %1623 = vmatpush1.bf16.msra.mxu0 0
        %1624 = vmatprep.subr.bf16.mxu0 0
        %1625 = vmatpush1.bf16.msra.mxu0 0
        %1626 = vmatprep.subr.bf16.mxu0 0
        %1627 = vmatpush1.bf16.msra.mxu0 0
        %1628 = vmatprep.subr.bf16.mxu0 0
        %1629 = vmatpush1.bf16.msra.mxu0 0
        %1630 = vmatprep.subr.bf16.mxu0 0
        %1631 = vmatpush1.bf16.msra.mxu0 0
        %1632 = vmatprep.subr.bf16.mxu0 0
        %1633 = vmatpush1.bf16.msra.mxu0 0
        %1634 = vmatprep.subr.bf16.mxu0 0
        %1635 = vmatpush1.bf16.msra.mxu0 0
        %1636 = vmatprep.subr.bf16.mxu0 0
        %1637 = vmatpush1.bf16.msra.mxu0 0
        %1638 = vmatprep.subr.bf16.mxu0 0
        %1639 = vmatpush1.bf16.msra.mxu0 0
        %1640 = vmatprep.subr.bf16.mxu0 0
        %1641 = vmatpush1.bf16.msra.mxu0 0
        %1642 = vmatprep.subr.bf16.mxu0 0
        %1643 = vmatpush1.bf16.msra.mxu0 0
        %1644 = vmatprep.subr.bf16.mxu0 0
        %1645 = vmatpush1.bf16.msra.mxu0 0
        %1646 = vmatprep.subr.bf16.mxu0 0
        %1647 = vmatpush1.bf16.msra.mxu0 0
        %1648 = vmatprep.mubr.bf16.mxu0 0
        %1649 = vmatmul.mubr.bf16.gmra.mrb[0].mxu0 %v1611
        %v1650 = vpop.f32.mrb[0].mxu0
        %v1651 = vadd.f32 0.0, %v1650
        %v1652 = vpop.f32.mrb[0].mxu0
        %v1653 = vpop.f32.mrb[0].mxu0
        %v1654 = vpop.f32.mrb[0].mxu0
        %1655 = vdwg.mxu0
        %v1656 = vand.u32 2147483647, %v1651
        %v1657 = vsub.f32 0.0, %v1549
        %v1658 = vmul.f32 %v1657, 1.442695
        %v1659 = vpow.pop %v1658
        %v1660 = vmax.f32 %v1656, %v1659
        %v1661 = vadd.f32 %v1660, 1e-06
        %v1662 = vrcp.pop %v1661
        %1664 = vset.pattern.permute.xlu0 16
        %1665 = vperm.xlu0 %1664, %v1662
        %v1666 = vpop.permute.xlu0 %1665
        %v1668 = vmul.f32 %v1651, %v1666
        %v1669 = vsel %vm1407, %v1668, 0.0
        %1670 = vadd.xlane.f32.xlu0 %v1669
        %v1671 = vpop.xlane.xlu0 %1670
        %v1672 = vmul.f32 %v1671, %v1521
        %v1673 = vsub.f32 %v1668, %v1672
        %v1674 = vmul.f32 %v1673, %v1673
        %v1675 = vsel %vm1407, %v1674, 0.0
        %1676 = vadd.xlane.f32.xlu0 %v1675
        %v1677 = vpop.xlane.xlu0 %1676
        %v1678 = vmul.f32 %v1677, %v1521
        %v1679 = vadd.f32 %v1678, 1e-05
        %v1680 = vrsqrt.pop %v1679
        %v1681 = vmul.f32 %v1673, %v1680
        %1682 = vset.pattern.permute.xlu0 6
        %1683 = vperm.xlu0 %1682, %v1312
        %v1684 = vpop.permute.xlu0 %1683
        %v1686 = vlaneseq
        %v1687 = vshrl.u32 %v1686, 7
        %v1688 = vsub.s32 2, %v1687
        %v1689 = vrot.slane %v1333, %v1688
        %v1690 = vsub.f32 %v1684, %v1689
        %v1691 = vsel %vm926, %v1690, -inf
        %v1692 = vlaneseq
        %v1693 = vshrl.u32 %v1692, 7
        %v1694 = vsub.s32 2, %v1693
        %v1695 = vrot.slane %v1365, %v1694
        %v1696 = vadd.f32 %v1691, %v1695
        %v1697 = vsel %vm1397, %v1696, -inf
        %1698 = vmax.xlane.f32.xlu0 %v1697
        %v1699 = vpop.xlane.xlu0 %1698
        %v1700 = vsub.f32 %v1696, %v1699
        %v1701 = vmul.f32 %v1700, 1.442695
        %v1702 = vpow.pop %v1701
        %1703 = vrot.lane.b32.xlu0 %v1381, 96
        %v1704 = vpop.permute.xlu0 %1703
        %1705 = vrot.lane.b32.xlu0 %v1381, 32
        %v1706 = vpop.permute.xlu0 %1705
        %v1708 = vsel %vm1407, %v1704, 0
        %v1711 = vsel %vm1407, %v1706, 0
        %1713 = vmatprep.subr.bf16.mxu0 0
        %1714 = vmatpush1.bf16.xpose.msra.mxu0 %v1711
        %1715 = vmatprep.subr.bf16.mxu0 0
        %1716 = vmatpush1.bf16.xpose.msra.mxu0 0
        %1717 = vmatprep.subr.bf16.mxu0 0
        %1718 = vmatpush1.bf16.xpose.msra.mxu0 0
        %1719 = vmatprep.subr.bf16.mxu0 0
        %1720 = vmatpush1.bf16.xpose.msra.mxu0 0
        %1721 = vmatprep.subr.bf16.mxu0 0
        %1722 = vmatpush1.bf16.xpose.msra.mxu0 0
        %1723 = vmatprep.subr.bf16.mxu0 0
        %1724 = vmatpush1.bf16.xpose.msra.mxu0 0
        %1725 = vmatprep.subr.bf16.mxu0 0
        %1726 = vmatpush1.bf16.xpose.msra.mxu0 0
        %1727 = vmatprep.subr.bf16.mxu0 0
        %1728 = vmatpush1.bf16.xpose.msra.mxu0 0
        %1729 = vmatprep.subr.bf16.mxu0 0
        %1730 = vmatpush1.bf16.xpose.msra.mxu0 0
        %1731 = vmatprep.subr.bf16.mxu0 0
        %1732 = vmatpush1.bf16.xpose.msra.mxu0 0
        %1733 = vmatprep.subr.bf16.mxu0 0
        %1734 = vmatpush1.bf16.xpose.msra.mxu0 0
        %1735 = vmatprep.subr.bf16.mxu0 0
        %1736 = vmatpush1.bf16.xpose.msra.mxu0 0
        %1737 = vmatprep.subr.bf16.mxu0 0
        %1738 = vmatpush1.bf16.xpose.msra.mxu0 0
        %1739 = vmatprep.subr.bf16.mxu0 0
        %1740 = vmatpush1.bf16.xpose.msra.mxu0 0
        %1741 = vmatprep.subr.bf16.mxu0 0
        %1742 = vmatpush1.bf16.xpose.msra.mxu0 0
        %1743 = vmatprep.subr.bf16.mxu0 0
        %1744 = vmatpush1.bf16.xpose.msra.mxu0 0
        %1745 = vmatprep.mubr.bf16.mxu0 0
        %1746 = vmatmul.mubr.bf16.gmra.mrb[0].mxu0 %v1708
        %v1747 = vpop.f32.mrb[0].mxu0
        %v1748 = vadd.f32 0.0, %v1747
        %v1749 = vpop.f32.mrb[0].mxu0
        %v1750 = vpop.f32.mrb[0].mxu0
        %v1751 = vpop.f32.mrb[0].mxu0
        %1752 = vdwg.mxu0
        %v1753 = vmul.f32 %v1748, %v1702
        %1754 = vrot.lane.b32.xlu0 %v1240, 96
        %v1755 = vpop.permute.xlu0 %1754
        %v1757 = vsel %vm1407, %v1755, 1.0
        %v1758 = vpack.c.bf16 %v1757, %v1757
        %v1759 = vpack.c.bf16 %v1753, %v1753
        %v1761 = vsel %vm1397, %v1759, 0
        %v1764 = vsel %vm1461, %v1758, 0
        %1766 = vmatprep.subr.bf16.mxu0 0
        %1767 = vmatpush1.bf16.msra.mxu0 %v1764
        %1768 = vmatprep.subr.bf16.mxu0 0
        %1769 = vmatpush1.bf16.msra.mxu0 0
        %1770 = vmatprep.subr.bf16.mxu0 0
        %1771 = vmatpush1.bf16.msra.mxu0 0
        %1772 = vmatprep.subr.bf16.mxu0 0
        %1773 = vmatpush1.bf16.msra.mxu0 0
        %1774 = vmatprep.subr.bf16.mxu0 0
        %1775 = vmatpush1.bf16.msra.mxu0 0
        %1776 = vmatprep.subr.bf16.mxu0 0
        %1777 = vmatpush1.bf16.msra.mxu0 0
        %1778 = vmatprep.subr.bf16.mxu0 0
        %1779 = vmatpush1.bf16.msra.mxu0 0
        %1780 = vmatprep.subr.bf16.mxu0 0
        %1781 = vmatpush1.bf16.msra.mxu0 0
        %1782 = vmatprep.subr.bf16.mxu0 0
        %1783 = vmatpush1.bf16.msra.mxu0 0
        %1784 = vmatprep.subr.bf16.mxu0 0
        %1785 = vmatpush1.bf16.msra.mxu0 0
        %1786 = vmatprep.subr.bf16.mxu0 0
        %1787 = vmatpush1.bf16.msra.mxu0 0
        %1788 = vmatprep.subr.bf16.mxu0 0
        %1789 = vmatpush1.bf16.msra.mxu0 0
        %1790 = vmatprep.subr.bf16.mxu0 0
        %1791 = vmatpush1.bf16.msra.mxu0 0
        %1792 = vmatprep.subr.bf16.mxu0 0
        %1793 = vmatpush1.bf16.msra.mxu0 0
        %1794 = vmatprep.subr.bf16.mxu0 0
        %1795 = vmatpush1.bf16.msra.mxu0 0
        %1796 = vmatprep.subr.bf16.mxu0 0
        %1797 = vmatpush1.bf16.msra.mxu0 0
        %1798 = vmatprep.mubr.bf16.mxu0 0
        %1799 = vmatmul.mubr.bf16.gmra.mrb[0].mxu0 %v1761
        %v1800 = vpop.f32.mrb[0].mxu0
        %v1801 = vadd.f32 0.0, %v1800
        %v1802 = vpop.f32.mrb[0].mxu0
        %v1803 = vpop.f32.mrb[0].mxu0
        %v1804 = vpop.f32.mrb[0].mxu0
        %1805 = vdwg.mxu0
        %v1806 = vand.u32 2147483647, %v1801
        %v1807 = vsub.f32 0.0, %v1699
        %v1808 = vmul.f32 %v1807, 1.442695
        %v1809 = vpow.pop %v1808
        %v1810 = vmax.f32 %v1806, %v1809
        %v1811 = vadd.f32 %v1810, 1e-06
        %v1812 = vrcp.pop %v1811
        %1814 = vset.pattern.permute.xlu0 16
        %1815 = vperm.xlu0 %1814, %v1812
        %v1816 = vpop.permute.xlu0 %1815
        %v1818 = vmul.f32 %v1801, %v1816
        %v1819 = vsel %vm1407, %v1818, 0.0
        %1820 = vadd.xlane.f32.xlu0 %v1819
        %v1821 = vpop.xlane.xlu0 %1820
        %v1822 = vmul.f32 %v1821, %v1521
        %v1823 = vsub.f32 %v1818, %v1822
        %v1824 = vmul.f32 %v1823, %v1823
        %v1825 = vsel %vm1407, %v1824, 0.0
        %1826 = vadd.xlane.f32.xlu0 %v1825
        %v1827 = vpop.xlane.xlu0 %1826
        %v1828 = vmul.f32 %v1827, %v1521
        %v1829 = vadd.f32 %v1828, 1e-05
        %v1830 = vrsqrt.pop %v1829
        %v1831 = vmul.f32 %v1823, %v1830
        %1832 = vset.pattern.permute.xlu0 7
        %1833 = vperm.xlu0 %1832, %v1312
        %v1834 = vpop.permute.xlu0 %1833
        %v1836 = vlaneseq
        %v1837 = vshrl.u32 %v1836, 7
        %v1838 = vsub.s32 3, %v1837
        %v1839 = vrot.slane %v1333, %v1838
        %v1840 = vsub.f32 %v1834, %v1839
        %v1841 = vsel %vm926, %v1840, -inf
        %v1842 = vlaneseq
        %v1843 = vshrl.u32 %v1842, 7
        %v1844 = vsub.s32 3, %v1843
        %v1845 = vrot.slane %v1365, %v1844
        %v1846 = vadd.f32 %v1841, %v1845
        %v1847 = vsel %vm1397, %v1846, -inf
        %1848 = vmax.xlane.f32.xlu0 %v1847
        %v1849 = vpop.xlane.xlu0 %1848
        %v1850 = vsub.f32 %v1846, %v1849
        %v1851 = vmul.f32 %v1850, 1.442695
        %v1852 = vpow.pop %v1851
        %1853 = vrot.lane.b32.xlu0 %v1381, 80
        %v1854 = vpop.permute.xlu0 %1853
        %1855 = vrot.lane.b32.xlu0 %v1381, 16
        %v1856 = vpop.permute.xlu0 %1855
        %v1858 = vsel %vm1407, %v1854, 0
        %v1861 = vsel %vm1407, %v1856, 0
        %1863 = vmatprep.subr.bf16.mxu0 0
        %1864 = vmatpush1.bf16.xpose.msra.mxu0 %v1861
        %1865 = vmatprep.subr.bf16.mxu0 0
        %1866 = vmatpush1.bf16.xpose.msra.mxu0 0
        %1867 = vmatprep.subr.bf16.mxu0 0
        %1868 = vmatpush1.bf16.xpose.msra.mxu0 0
        %1869 = vmatprep.subr.bf16.mxu0 0
        %1870 = vmatpush1.bf16.xpose.msra.mxu0 0
        %1871 = vmatprep.subr.bf16.mxu0 0
        %1872 = vmatpush1.bf16.xpose.msra.mxu0 0
        %1873 = vmatprep.subr.bf16.mxu0 0
        %1874 = vmatpush1.bf16.xpose.msra.mxu0 0
        %1875 = vmatprep.subr.bf16.mxu0 0
        %1876 = vmatpush1.bf16.xpose.msra.mxu0 0
        %1877 = vmatprep.subr.bf16.mxu0 0
        %1878 = vmatpush1.bf16.xpose.msra.mxu0 0
        %1879 = vmatprep.subr.bf16.mxu0 0
        %1880 = vmatpush1.bf16.xpose.msra.mxu0 0
        %1881 = vmatprep.subr.bf16.mxu0 0
        %1882 = vmatpush1.bf16.xpose.msra.mxu0 0
        %1883 = vmatprep.subr.bf16.mxu0 0
        %1884 = vmatpush1.bf16.xpose.msra.mxu0 0
        %1885 = vmatprep.subr.bf16.mxu0 0
        %1886 = vmatpush1.bf16.xpose.msra.mxu0 0
        %1887 = vmatprep.subr.bf16.mxu0 0
        %1888 = vmatpush1.bf16.xpose.msra.mxu0 0
        %1889 = vmatprep.subr.bf16.mxu0 0
        %1890 = vmatpush1.bf16.xpose.msra.mxu0 0
        %1891 = vmatprep.subr.bf16.mxu0 0
        %1892 = vmatpush1.bf16.xpose.msra.mxu0 0
        %1893 = vmatprep.subr.bf16.mxu0 0
        %1894 = vmatpush1.bf16.xpose.msra.mxu0 0
        %1895 = vmatprep.mubr.bf16.mxu0 0
        %1896 = vmatmul.mubr.bf16.gmra.mrb[0].mxu0 %v1858
        %v1897 = vpop.f32.mrb[0].mxu0
        %v1898 = vadd.f32 0.0, %v1897
        %v1899 = vpop.f32.mrb[0].mxu0
        %v1900 = vpop.f32.mrb[0].mxu0
        %v1901 = vpop.f32.mrb[0].mxu0
        %1902 = vdwg.mxu0
        %v1903 = vmul.f32 %v1898, %v1852
        %1904 = vrot.lane.b32.xlu0 %v1240, 80
        %v1905 = vpop.permute.xlu0 %1904
        %v1907 = vsel %vm1407, %v1905, 1.0
        %v1908 = vpack.c.bf16 %v1907, %v1907
        %v1909 = vpack.c.bf16 %v1903, %v1903
        %v1911 = vsel %vm1397, %v1909, 0
        %v1914 = vsel %vm1461, %v1908, 0
        %1916 = vmatprep.subr.bf16.mxu0 0
        %1917 = vmatpush1.bf16.msra.mxu0 %v1914
        %1918 = vmatprep.subr.bf16.mxu0 0
        %1919 = vmatpush1.bf16.msra.mxu0 0
        %1920 = vmatprep.subr.bf16.mxu0 0
        %1921 = vmatpush1.bf16.msra.mxu0 0
        %1922 = vmatprep.subr.bf16.mxu0 0
        %1923 = vmatpush1.bf16.msra.mxu0 0
        %1924 = vmatprep.subr.bf16.mxu0 0
        %1925 = vmatpush1.bf16.msra.mxu0 0
        %1926 = vmatprep.subr.bf16.mxu0 0
        %1927 = vmatpush1.bf16.msra.mxu0 0
        %1928 = vmatprep.subr.bf16.mxu0 0
        %1929 = vmatpush1.bf16.msra.mxu0 0
        %1930 = vmatprep.subr.bf16.mxu0 0
        %1931 = vmatpush1.bf16.msra.mxu0 0
        %1932 = vmatprep.subr.bf16.mxu0 0
        %1933 = vmatpush1.bf16.msra.mxu0 0
        %1934 = vmatprep.subr.bf16.mxu0 0
        %1935 = vmatpush1.bf16.msra.mxu0 0
        %1936 = vmatprep.subr.bf16.mxu0 0
        %1937 = vmatpush1.bf16.msra.mxu0 0
        %1938 = vmatprep.subr.bf16.mxu0 0
        %1939 = vmatpush1.bf16.msra.mxu0 0
        %1940 = vmatprep.subr.bf16.mxu0 0
        %1941 = vmatpush1.bf16.msra.mxu0 0
        %1942 = vmatprep.subr.bf16.mxu0 0
        %1943 = vmatpush1.bf16.msra.mxu0 0
        %1944 = vmatprep.subr.bf16.mxu0 0
        %1945 = vmatpush1.bf16.msra.mxu0 0
        %1946 = vmatprep.subr.bf16.mxu0 0
        %1947 = vmatpush1.bf16.msra.mxu0 0
        %1948 = vmatprep.mubr.bf16.mxu0 0
        %1949 = vmatmul.mubr.bf16.gmra.mrb[0].mxu0 %v1911
        %v1950 = vpop.f32.mrb[0].mxu0
        %v1951 = vadd.f32 0.0, %v1950
        %v1952 = vpop.f32.mrb[0].mxu0
        %v1953 = vpop.f32.mrb[0].mxu0
        %v1954 = vpop.f32.mrb[0].mxu0
        %1955 = vdwg.mxu0
        %v1956 = vand.u32 2147483647, %v1951
        %v1957 = vsub.f32 0.0, %v1849
        %v1958 = vmul.f32 %v1957, 1.442695
        %v1959 = vpow.pop %v1958
        %v1960 = vmax.f32 %v1956, %v1959
        %v1961 = vadd.f32 %v1960, 1e-06
        %v1962 = vrcp.pop %v1961
        %1964 = vset.pattern.permute.xlu0 16
        %1965 = vperm.xlu0 %1964, %v1962
        %v1966 = vpop.permute.xlu0 %1965
        %v1968 = vmul.f32 %v1951, %v1966
        %v1969 = vsel %vm1407, %v1968, 0.0
        %1970 = vadd.xlane.f32.xlu0 %v1969
        %v1971 = vpop.xlane.xlu0 %1970
        %v1972 = vmul.f32 %v1971, %v1521
        %v1973 = vsub.f32 %v1968, %v1972
        %v1974 = vmul.f32 %v1973, %v1973
        %v1975 = vsel %vm1407, %v1974, 0.0
        %1976 = vadd.xlane.f32.xlu0 %v1975
        %v1977 = vpop.xlane.xlu0 %1976
        %v1978 = vmul.f32 %v1977, %v1521
        %v1979 = vadd.f32 %v1978, 1e-05
        %v1980 = vrsqrt.pop %v1979
        %v1981 = vmul.f32 %v1973, %v1980
        %1983 = vrot.lane.b32.xlu0 %v1681, 16
        %v1984 = vpop.permute.xlu0 %1983
        %1987 = vrot.lane.b32.xlu0 %v1831, 32
        %v1988 = vpop.permute.xlu0 %1987
        %1991 = vrot.lane.b32.xlu0 %v1981, 48
        %v1992 = vpop.permute.xlu0 %1991
        %v1994 = vsel %vm1407, %v1531, %v1984
        %v1995 = vsel %vm961, %v1994, %v1988
        %vm1996 = vcmask 392192
        %v1997 = vsel %vm1996, %v1995, %v1992
        %v1999 = vlaneseq
        %v2000 = vshrl.u32 %v1999, 7
        %v2001 = vsub.s32 0, %v2000
        %v2002 = vrot.slane %v951, %v2001
        %v2004 = vmul.f32 %v1997, %v2002
        %v2006 = vlaneseq
        %v2007 = vshrl.u32 %v2006, 7
        %v2008 = vsub.s32 0, %v2007
        %v2009 = vrot.slane %v952, %v2008
        %v2011 = vmul.f32 %v2009, %v1090
        %v2012 = vadd.f32 %v2004, %v2011
        %v2013 = vxor.u32 %v1034, 2147483648
        %v2014 = vmul.f32 %v2013, 1.442695
        %v2015 = vpow.pop %v2014
        %v2016 = vadd.f32 %v2015, 1.0
        %v2017 = vrcp.pop %v2016
        %v2018 = vmul.f32 1.0, %v2017
        %v2019 = vmul.f32 %v1034, %v2018
        %2021 = vrot.lane.b32.xlu0 %v2019, 64
        %v2022 = vpop.permute.xlu0 %2021
        %v2024 = vmul.f32 %v2012, %v2022
        %v2025 = vpack.c.bf16 %v2024, %v2024
        %v2034 = vunpack.c.l.b16 %v953
        %v2035 = vunpack.c.l.b16 %v954
        %v2036 = vunpack.c.l.b16 %v955
        %v2037 = vunpack.c.l.b16 %v956
        %v2038 = vunpack.c.l.b16 %v957
        %v2039 = vunpack.c.l.b16 %v958
        %v2040 = vunpack.c.l.b16 %v959
        %v2041 = vunpack.c.l.b16 %v960
        %v2042 = vpack.c.b16 %v2035, %v2034
        %v2043 = vpack.c.b16 %v2037, %v2036
        %v2044 = vpack.c.b16 %v2039, %v2038
        %v2045 = vpack.c.b16 %v2041, %v2040
        %v2051 = vsel %vm1132, %v2025, 0
        %2053 = vmatprep.subr.bf16.mxu0 0
        %2054 = vmatpush1.bf16.msra.mxu0 %v2042
        %2055 = vmatprep.subr.bf16.mxu0 0
        %2056 = vmatpush1.bf16.msra.mxu0 %v2043
        %2057 = vmatprep.subr.bf16.mxu0 0
        %2058 = vmatpush1.bf16.msra.mxu0 %v2044
        %2059 = vmatprep.subr.bf16.mxu0 0
        %2060 = vmatpush1.bf16.msra.mxu0 %v2045
        %2061 = vmatprep.subr.bf16.mxu0 0
        %2062 = vmatpush1.bf16.msra.mxu0 0
        %2063 = vmatprep.subr.bf16.mxu0 0
        %2064 = vmatpush1.bf16.msra.mxu0 0
        %2065 = vmatprep.subr.bf16.mxu0 0
        %2066 = vmatpush1.bf16.msra.mxu0 0
        %2067 = vmatprep.subr.bf16.mxu0 0
        %2068 = vmatpush1.bf16.msra.mxu0 0
        %2069 = vmatprep.subr.bf16.mxu0 0
        %2070 = vmatpush1.bf16.msra.mxu0 0
        %2071 = vmatprep.subr.bf16.mxu0 0
        %2072 = vmatpush1.bf16.msra.mxu0 0
        %2073 = vmatprep.subr.bf16.mxu0 0
        %2074 = vmatpush1.bf16.msra.mxu0 0
        %2075 = vmatprep.subr.bf16.mxu0 0
        %2076 = vmatpush1.bf16.msra.mxu0 0
        %2077 = vmatprep.subr.bf16.mxu0 0
        %2078 = vmatpush1.bf16.msra.mxu0 0
        %2079 = vmatprep.subr.bf16.mxu0 0
        %2080 = vmatpush1.bf16.msra.mxu0 0
        %2081 = vmatprep.subr.bf16.mxu0 0
        %2082 = vmatpush1.bf16.msra.mxu0 0
        %2083 = vmatprep.subr.bf16.mxu0 0
        %2084 = vmatpush1.bf16.msra.mxu0 0
        %2085 = vmatprep.mubr.bf16.mxu0 0
        %2086 = vmatmul.mubr.bf16.gmra.mrb[0].mxu0 %v2051
        %v2087 = vpop.f32.mrb[0].mxu0
        %v2088 = vadd.f32 0.0, %v2087
        %v2089 = vpop.f32.mrb[0].mxu0
        %v2090 = vpop.f32.mrb[0].mxu0
        %v2091 = vpop.f32.mrb[0].mxu0
        %2092 = vdwg.mxu0
        %v2093 = vadd.f32 %v921, %v2088
        %v2094 = vld [vmem:[#allocation17] sm:$0x1]
        %v2095 = vld [vmem:[%s12] sm:$0xf]
        %v2096 = vld [vmem:[%s12 + $0x4] sm:$0xf]
        %v2097 = vld [vmem:[%s12 + $0x8] sm:$0xf]
        %v2098 = vld [vmem:[%s12 + $0xc] sm:$0xf]
        %v2099 = vld [vmem:[#allocation19] sm:$0xf]
        %v2100 = vld [vmem:[#allocation20] sm:$0x1]
        %v2101 = vld [vmem:[%s15] sm:$0xff]
        %v2102 = vld [vmem:[%s15 + $0x8] sm:$0xff]
        %v2103 = vld [vmem:[%s15 + $0x10] sm:$0xff]
        %v2104 = vld [vmem:[%s15 + $0x18] sm:$0xff]
        %v2105 = vld [vmem:[%s15 + $0x20] sm:$0xff]
        %v2106 = vld [vmem:[%s15 + $0x28] sm:$0xff]
        %v2107 = vld [vmem:[%s15 + $0x30] sm:$0xff]
        %v2108 = vld [vmem:[%s15 + $0x38] sm:$0xff]
        %v2109 = vld [vmem:[%s16] sm:$0xf]
        %v2110 = vld [vmem:[%s16 + $0x4] sm:$0xf]
        %v2111 = vld [vmem:[%s16 + $0x8] sm:$0xf]
        %v2112 = vld [vmem:[%s16 + $0xc] sm:$0xf]
        %v2113 = vld [vmem:[%s16 + $0x10] sm:$0xf]
        %v2114 = vld [vmem:[%s16 + $0x14] sm:$0xf]
        %v2115 = vld [vmem:[%s16 + $0x18] sm:$0xf]
        %v2116 = vld [vmem:[%s16 + $0x1c] sm:$0xf]
        %v2117 = vld [vmem:[#allocation22] sm:$0x1]
        %v2118 = vld [vmem:[#allocation23] sm:$0x1]
        %v2119 = vld [vmem:[%s19] sm:$0x1]
        %v2120 = vld [vmem:[%s20] sm:$0xf]
        %v2121 = vld [vmem:[%s20 + $0x4] sm:$0xf]
        %v2122 = vld [vmem:[%s20 + $0x8] sm:$0xf]
        %v2123 = vld [vmem:[%s20 + $0xc] sm:$0xf]
        %v2124 = vld [vmem:[%s20 + $0x10] sm:$0xf]
        %v2125 = vld [vmem:[%s20 + $0x14] sm:$0xf]
        %v2126 = vld [vmem:[%s20 + $0x18] sm:$0xf]
        %v2127 = vld [vmem:[%s20 + $0x1c] sm:$0xf]
        %v2128 = vsel %vm961, %v2093, 0.0
        %2129 = vadd.xlane.f32.xlu0 %v2128
        %v2130 = vpop.xlane.xlu0 %2129
        %v2131 = vmul.f32 %v2130, %v965
        %v2132 = vsub.f32 %v2093, %v2131
        %v2133 = vmul.f32 %v2132, %v2132
        %v2134 = vsel %vm961, %v2133, 0.0
        %2135 = vadd.xlane.f32.xlu0 %v2134
        %v2136 = vpop.xlane.xlu0 %2135
        %v2137 = vmul.f32 %v2136, %v965
        %v2138 = vadd.f32 %v2137, 1e-05
        %v2139 = vrsqrt.pop %v2138
        %v2140 = vmul.f32 %v2132, %v2139
        %v2142 = vlaneseq
        %v2143 = vshrl.u32 %v2142, 7
        %v2144 = vsub.s32 0, %v2143
        %v2145 = vrot.slane %v2094, %v2144
        %v2147 = vmul.f32 %v2140, %v2145
        %v2148 = vpack.c.bf16 %v2147, %v2147
        %v2153 = vunpack.c.l.b16 %v2095
        %v2154 = vunpack.c.l.b16 %v2096
        %v2155 = vunpack.c.l.b16 %v2097
        %v2156 = vunpack.c.l.b16 %v2098
        %v2157 = vpack.c.b16 %v2154, %v2153
        %v2158 = vpack.c.b16 %v2156, %v2155
        %v2162 = vsel %vm961, %v2148, 0
        %2164 = vmatprep.subr.bf16.mxu0 0
        %2165 = vmatpush1.bf16.msra.mxu0 %v2157
        %2166 = vmatprep.subr.bf16.mxu0 0
        %2167 = vmatpush1.bf16.msra.mxu0 %v2158
        %2168 = vmatprep.subr.bf16.mxu0 0
        %2169 = vmatpush1.bf16.msra.mxu0 0
        %2170 = vmatprep.subr.bf16.mxu0 0
        %2171 = vmatpush1.bf16.msra.mxu0 0
        %2172 = vmatprep.subr.bf16.mxu0 0
        %2173 = vmatpush1.bf16.msra.mxu0 0
        %2174 = vmatprep.subr.bf16.mxu0 0
        %2175 = vmatpush1.bf16.msra.mxu0 0
        %2176 = vmatprep.subr.bf16.mxu0 0
        %2177 = vmatpush1.bf16.msra.mxu0 0
        %2178 = vmatprep.subr.bf16.mxu0 0
        %2179 = vmatpush1.bf16.msra.mxu0 0
        %2180 = vmatprep.subr.bf16.mxu0 0
        %2181 = vmatpush1.bf16.msra.mxu0 0
        %2182 = vmatprep.subr.bf16.mxu0 0
        %2183 = vmatpush1.bf16.msra.mxu0 0
        %2184 = vmatprep.subr.bf16.mxu0 0
        %2185 = vmatpush1.bf16.msra.mxu0 0
        %2186 = vmatprep.subr.bf16.mxu0 0
        %2187 = vmatpush1.bf16.msra.mxu0 0
        %2188 = vmatprep.subr.bf16.mxu0 0
        %2189 = vmatpush1.bf16.msra.mxu0 0
        %2190 = vmatprep.subr.bf16.mxu0 0
        %2191 = vmatpush1.bf16.msra.mxu0 0
        %2192 = vmatprep.subr.bf16.mxu0 0
        %2193 = vmatpush1.bf16.msra.mxu0 0
        %2194 = vmatprep.subr.bf16.mxu0 0
        %2195 = vmatpush1.bf16.msra.mxu0 0
        %2196 = vmatprep.mubr.bf16.mxu0 0
        %2197 = vmatmul.mubr.bf16.gmra.mrb[0].mxu0 %v2162
        %v2198 = vpop.f32.mrb[0].mxu0
        %v2199 = vadd.f32 0.0, %v2198
        %v2200 = vpop.f32.mrb[0].mxu0
        %v2201 = vpop.f32.mrb[0].mxu0
        %v2202 = vpop.f32.mrb[0].mxu0
        %2203 = vdwg.mxu0
        %v2204 = vlaneseq
        %v2205 = vshrl.u32 %v2204, 7
        %v2206 = vsub.s32 3, %v2205
        %v2207 = vrot.slane %v2099, %v2206
        %v2208 = vmul.f32 %v2199, %v2207
        %v2209 = vrot.slane %v2199, 5
        %v2210 = vsel %vm1047, %v2209, 0.0
        %v2211 = vlaneseq
        %v2212 = vshrl.u32 %v2211, 7
        %v2213 = vsub.s32 0, %v2212
        %v2214 = vrot.slane %v2099, %v2213
        %v2215 = vmul.f32 %v2210, %v2214
        %v2216 = vadd.f32 %v2208, %v2215
        %v2217 = vrot.slane %v2199, 6
        %v2218 = vsel %vm1058, %v2217, 0.0
        %v2219 = vlaneseq
        %v2220 = vshrl.u32 %v2219, 7
        %v2221 = vsub.s32 1, %v2220
        %v2222 = vrot.slane %v2099, %v2221
        %v2223 = vmul.f32 %v2218, %v2222
        %v2224 = vadd.f32 %v2216, %v2223
        %v2225 = vrot.slane %v2199, 7
        %v2226 = vsel %vm1069, %v2225, 0.0
        %v2227 = vlaneseq
        %v2228 = vshrl.u32 %v2227, 7
        %v2229 = vsub.s32 2, %v2228
        %v2230 = vrot.slane %v2099, %v2229
        %v2231 = vmul.f32 %v2226, %v2230
        %v2232 = vadd.f32 %v2224, %v2231
        %v2234 = vlaneseq
        %v2235 = vshrl.u32 %v2234, 7
        %v2236 = vsub.s32 0, %v2235
        %v2237 = vrot.slane %v2100, %v2236
        %v2239 = vadd.f32 %v2232, %v2237
        %v2240 = vxor.u32 %v2239, 2147483648
        %v2241 = vmul.f32 %v2240, 1.442695
        %v2242 = vpow.pop %v2241
        %v2243 = vadd.f32 %v2242, 1.0
        %v2244 = vrcp.pop %v2243
        %v2245 = vmul.f32 1.0, %v2244
        %v2246 = vmul.f32 %v2239, %v2245
        %v2247 = vpack.c.bf16 %v2246, %v2246
        %v2256 = vunpack.c.l.b16 %v2101
        %v2257 = vunpack.c.h.b16 %v2101
        %v2258 = vunpack.c.l.b16 %v2102
        %v2259 = vunpack.c.h.b16 %v2102
        %v2260 = vunpack.c.l.b16 %v2103
        %v2261 = vunpack.c.h.b16 %v2103
        %v2262 = vunpack.c.l.b16 %v2104
        %v2263 = vunpack.c.h.b16 %v2104
        %v2264 = vunpack.c.l.b16 %v2105
        %v2265 = vunpack.c.h.b16 %v2105
        %v2266 = vunpack.c.l.b16 %v2106
        %v2267 = vunpack.c.h.b16 %v2106
        %v2268 = vunpack.c.l.b16 %v2107
        %v2269 = vunpack.c.h.b16 %v2107
        %v2270 = vunpack.c.l.b16 %v2108
        %v2271 = vunpack.c.h.b16 %v2108
        %v2272 = vpack.c.b16 %v2258, %v2256
        %v2273 = vpack.c.b16 %v2259, %v2257
        %v2274 = vpack.c.b16 %v2262, %v2260
        %v2275 = vpack.c.b16 %v2263, %v2261
        %v2276 = vpack.c.b16 %v2266, %v2264
        %v2277 = vpack.c.b16 %v2267, %v2265
        %v2278 = vpack.c.b16 %v2270, %v2268
        %v2279 = vpack.c.b16 %v2271, %v2269
        %v2289 = vsel %vm1132, %v2247, 0
        %2291 = vmatprep.subr.bf16.mxu0 %v2273
        %2292 = vmatpush1.bf16.msra.mxu0 %v2272
        %2293 = vmatprep.subr.bf16.mxu0 %v2275
        %2294 = vmatpush1.bf16.msra.mxu0 %v2274
        %2295 = vmatprep.subr.bf16.mxu0 %v2277
        %2296 = vmatpush1.bf16.msra.mxu0 %v2276
        %2297 = vmatprep.subr.bf16.mxu0 %v2279
        %2298 = vmatpush1.bf16.msra.mxu0 %v2278
        %2299 = vmatprep.subr.bf16.mxu0 0
        %2300 = vmatpush1.bf16.msra.mxu0 0
        %2301 = vmatprep.subr.bf16.mxu0 0
        %2302 = vmatpush1.bf16.msra.mxu0 0
        %2303 = vmatprep.subr.bf16.mxu0 0
        %2304 = vmatpush1.bf16.msra.mxu0 0
        %2305 = vmatprep.subr.bf16.mxu0 0
        %2306 = vmatpush1.bf16.msra.mxu0 0
        %2307 = vmatprep.subr.bf16.mxu0 0
        %2308 = vmatpush1.bf16.msra.mxu0 0
        %2309 = vmatprep.subr.bf16.mxu0 0
        %2310 = vmatpush1.bf16.msra.mxu0 0
        %2311 = vmatprep.subr.bf16.mxu0 0
        %2312 = vmatpush1.bf16.msra.mxu0 0
        %2313 = vmatprep.subr.bf16.mxu0 0
        %2314 = vmatpush1.bf16.msra.mxu0 0
        %2315 = vmatprep.subr.bf16.mxu0 0
        %2316 = vmatpush1.bf16.msra.mxu0 0
        %2317 = vmatprep.subr.bf16.mxu0 0
        %2318 = vmatpush1.bf16.msra.mxu0 0
        %2319 = vmatprep.subr.bf16.mxu0 0
        %2320 = vmatpush1.bf16.msra.mxu0 0
        %2321 = vmatprep.subr.bf16.mxu0 0
        %2322 = vmatpush1.bf16.msra.mxu0 0
        %2323 = vmatprep.mubr.bf16.mxu0 0
        %2324 = vmatmul.mubr.bf16.gmra.mrb[0].mxu0 %v2289
        %v2325 = vpop.f32.mrb[0].mxu0
        %v2326 = vadd.f32 0.0, %v2325
        %v2327 = vpop.f32.mrb[0].mxu0
        %v2328 = vadd.f32 0.0, %v2327
        %v2329 = vpop.f32.mrb[0].mxu0
        %v2330 = vpop.f32.mrb[0].mxu0
        %2331 = vdwg.mxu0
        %v2332 = vpack.c.bf16 %v2199, %v2199
        %v2341 = vunpack.c.l.b16 %v2109
        %v2342 = vunpack.c.l.b16 %v2110
        %v2343 = vunpack.c.l.b16 %v2111
        %v2344 = vunpack.c.l.b16 %v2112
        %v2345 = vunpack.c.l.b16 %v2113
        %v2346 = vunpack.c.l.b16 %v2114
        %v2347 = vunpack.c.l.b16 %v2115
        %v2348 = vunpack.c.l.b16 %v2116
        %v2349 = vpack.c.b16 %v2342, %v2341
        %v2350 = vpack.c.b16 %v2344, %v2343
        %v2351 = vpack.c.b16 %v2346, %v2345
        %v2352 = vpack.c.b16 %v2348, %v2347
        %v2358 = vsel %vm1132, %v2332, 0
        %2360 = vmatprep.subr.bf16.mxu0 0
        %2361 = vmatpush1.bf16.msra.mxu0 %v2349
        %2362 = vmatprep.subr.bf16.mxu0 0
        %2363 = vmatpush1.bf16.msra.mxu0 %v2350
        %2364 = vmatprep.subr.bf16.mxu0 0
        %2365 = vmatpush1.bf16.msra.mxu0 %v2351
        %2366 = vmatprep.subr.bf16.mxu0 0
        %2367 = vmatpush1.bf16.msra.mxu0 %v2352
        %2368 = vmatprep.subr.bf16.mxu0 0
        %2369 = vmatpush1.bf16.msra.mxu0 0
        %2370 = vmatprep.subr.bf16.mxu0 0
        %2371 = vmatpush1.bf16.msra.mxu0 0
        %2372 = vmatprep.subr.bf16.mxu0 0
        %2373 = vmatpush1.bf16.msra.mxu0 0
        %2374 = vmatprep.subr.bf16.mxu0 0
        %2375 = vmatpush1.bf16.msra.mxu0 0
        %2376 = vmatprep.subr.bf16.mxu0 0
        %2377 = vmatpush1.bf16.msra.mxu0 0
        %2378 = vmatprep.subr.bf16.mxu0 0
        %2379 = vmatpush1.bf16.msra.mxu0 0
        %2380 = vmatprep.subr.bf16.mxu0 0
        %2381 = vmatpush1.bf16.msra.mxu0 0
        %2382 = vmatprep.subr.bf16.mxu0 0
        %2383 = vmatpush1.bf16.msra.mxu0 0
        %2384 = vmatprep.subr.bf16.mxu0 0
        %2385 = vmatpush1.bf16.msra.mxu0 0
        %2386 = vmatprep.subr.bf16.mxu0 0
        %2387 = vmatpush1.bf16.msra.mxu0 0
        %2388 = vmatprep.subr.bf16.mxu0 0
        %2389 = vmatpush1.bf16.msra.mxu0 0
        %2390 = vmatprep.subr.bf16.mxu0 0
        %2391 = vmatpush1.bf16.msra.mxu0 0
        %2392 = vmatprep.mubr.bf16.mxu0 0
        %2393 = vmatmul.mubr.bf16.gmra.mrb[0].mxu0 %v2358
        %v2394 = vpop.f32.mrb[0].mxu0
        %v2395 = vadd.f32 0.0, %v2394
        %v2396 = vpop.f32.mrb[0].mxu0
        %v2397 = vpop.f32.mrb[0].mxu0
        %v2398 = vpop.f32.mrb[0].mxu0
        %2399 = vdwg.mxu0
        %2401 = vrot.lane.b32.xlu0 %v2395, 64
        %v2402 = vpop.permute.xlu0 %2401
        %v2404 = vadd.f32 %v2328, %v2402
        %v2406 = vlaneseq
        %v2407 = vshrl.u32 %v2406, 7
        %v2408 = vsub.s32 0, %v2407
        %v2409 = vrot.slane %v2117, %v2408
        %v2411 = vadd.f32 %v2404, %v2409
        %v2412 = vsub.f32 0.0, %v2411
        %v2413 = vmax.f32 %v2412, 0.0
        %vm2414 = vcmp.ne.f32.partialorder %v2412, %v2412
        %v2415 = vadd.f32 %v2412, 0.0
        %v2416 = vand.u32 2147483647, %v2412
        %v2417 = vsub.f32 0.0, %v2416
        %v2418 = vmul.f32 %v2417, 1.442695
        %v2419 = vpow.pop %v2418
        %v2420 = vadd.f32 %v2419, 1.0
        %v2421 = vlog2.pop %v2420
        %v2422 = vmul.f32 %v2421, 0.6931472
        %v2423 = vmul.f32 -0.5, %v2419
        %v2424 = vadd.f32 %v2423, 1.0
        %v2425 = vmul.f32 %v2424, %v2419
        %v2426 = vand.u32 2147483647, %v2419
        %vm2427 = vcmp.lt.f32.partialorder %v2426, 0.0004427343
        %v2428 = vsel %vm2427, %v2425, %v2422
        %v2429 = vadd.f32 %v2413, %v2428
        %v2430 = vsel %vm2414, %v2415, %v2429
        %v2431 = vsub.f32 0.0, %v2430
        %2433 = vrot.lane.b32.xlu0 %v2431, 124
        %v2434 = vpop.permute.xlu0 %2433
        %v2436 = vrot.slane %v2434, 7
        %v2437 = vsel %vm1069, %v2436, 0.0
        %2439 = vrot.lane.b32.xlu0 %v2437, 4
        %v2440 = vpop.permute.xlu0 %2439
        %v2442 = vadd.f32 %v2431, %v2440
        %2444 = vrot.lane.b32.xlu0 %v2442, 124
        %v2445 = vpop.permute.xlu0 %2444
        %v2447 = vrot.slane %v2445, 6
        %v2448 = vsel %vm1058, %v2447, 0.0
        %2450 = vrot.lane.b32.xlu0 %v2448, 4
        %v2451 = vpop.permute.xlu0 %2450
        %v2453 = vadd.f32 %v2442, %v2451
        %2455 = vrot.lane.b32.xlu0 %v2453, 124
        %v2456 = vpop.permute.xlu0 %2455
        %v2458 = vrot.slane %v2456, 4
        %v2459 = vsel %vm1306, %v2458, 0.0
        %2461 = vrot.lane.b32.xlu0 %v2459, 4
        %v2462 = vpop.permute.xlu0 %2461
        %v2464 = vadd.f32 %v2453, %v2462
        %2466 = vrot.lane.b32.xlu0 %v2464, 124
        %v2467 = vpop.permute.xlu0 %2466
        %2469 = vxpose.xlu0.b32.start [1/16] %v2467, 128
        %2470 = vxpose.xlu0.b32.cont [2/16] 0.0, 128
        %2471 = vxpose.xlu0.b32.cont [3/16] 0.0, 128
        %2472 = vxpose.xlu0.b32.cont [4/16] 0.0, 128
        %2473 = vxpose.xlu0.b32.cont [5/16] 0.0, 128
        %2474 = vxpose.xlu0.b32.cont [6/16] 0.0, 128
        %2475 = vxpose.xlu0.b32.cont [7/16] 0.0, 128
        %2476 = vxpose.xlu0.b32.cont [8/16] 0.0, 128
        %2477 = vxpose.xlu0.b32.cont [9/16] 0.0, 128
        %2478 = vxpose.xlu0.b32.cont [10/16] 0.0, 128
        %2479 = vxpose.xlu0.b32.cont [11/16] 0.0, 128
        %2480 = vxpose.xlu0.b32.cont [12/16] 0.0, 128
        %2481 = vxpose.xlu0.b32.cont [13/16] 0.0, 128
        %2482 = vxpose.xlu0.b32.cont [14/16] 0.0, 128
        %2483 = vxpose.xlu0.b32.cont [15/16] 0.0, 128
        %2484 = vxpose.xlu0.b32.end [16/16] 0.0, 128
        %v2485 = vpop.trf.xlu0
        %v2486 = vpop.trf.xlu0
        %v2487 = vpop.trf.xlu0
        %v2488 = vpop.trf.xlu0
        %v2489 = vpop.trf.xlu0
        %v2490 = vpop.trf.xlu0
        %v2491 = vpop.trf.xlu0
        %v2492 = vpop.trf.xlu0
        %v2493 = vpop.trf.xlu0
        %v2494 = vpop.trf.xlu0
        %v2495 = vpop.trf.xlu0
        %v2496 = vpop.trf.xlu0
        %v2497 = vpop.trf.xlu0
        %v2498 = vpop.trf.xlu0
        %v2499 = vpop.trf.xlu0
        %v2500 = vpop.trf.xlu0
        %2501 = vxpose.xlu0.b32.start [1/16] %v2411, 128
        %2502 = vxpose.xlu0.b32.cont [2/16] 0.0, 128
        %2503 = vxpose.xlu0.b32.cont [3/16] 0.0, 128
        %2504 = vxpose.xlu0.b32.cont [4/16] 0.0, 128
        %2505 = vxpose.xlu0.b32.cont [5/16] 0.0, 128
        %2506 = vxpose.xlu0.b32.cont [6/16] 0.0, 128
        %2507 = vxpose.xlu0.b32.cont [7/16] 0.0, 128
        %2508 = vxpose.xlu0.b32.cont [8/16] 0.0, 128
        %2509 = vxpose.xlu0.b32.cont [9/16] 0.0, 128
        %2510 = vxpose.xlu0.b32.cont [10/16] 0.0, 128
        %2511 = vxpose.xlu0.b32.cont [11/16] 0.0, 128
        %2512 = vxpose.xlu0.b32.cont [12/16] 0.0, 128
        %2513 = vxpose.xlu0.b32.cont [13/16] 0.0, 128
        %2514 = vxpose.xlu0.b32.cont [14/16] 0.0, 128
        %2515 = vxpose.xlu0.b32.cont [15/16] 0.0, 128
        %2516 = vxpose.xlu0.b32.end [16/16] 0.0, 128
        %v2517 = vpop.trf.xlu0
        %v2518 = vpop.trf.xlu0
        %v2519 = vpop.trf.xlu0
        %v2520 = vpop.trf.xlu0
        %v2521 = vpop.trf.xlu0
        %v2522 = vpop.trf.xlu0
        %v2523 = vpop.trf.xlu0
        %v2524 = vpop.trf.xlu0
        %v2525 = vpop.trf.xlu0
        %v2526 = vpop.trf.xlu0
        %v2527 = vpop.trf.xlu0
        %v2528 = vpop.trf.xlu0
        %v2529 = vpop.trf.xlu0
        %v2530 = vpop.trf.xlu0
        %v2531 = vpop.trf.xlu0
        %v2532 = vpop.trf.xlu0
        %v2533 = vpack.c.bf16 %v2326, %v2326
        %2534 = vset.pattern.permute.xlu0 4
        %2535 = vperm.xlu0 %2534, %v2464
        %v2536 = vpop.permute.xlu0 %2535
        %v2538 = vlaneseq
        %v2539 = vshrl.u32 %v2538, 7
        %v2540 = vsub.s32 0, %v2539
        %v2541 = vrot.slane %v2485, %v2540
        %v2542 = vsub.f32 %v2536, %v2541
        %v2543 = vsel %vm926, %v2542, -inf
        %v2544 = vlaneseq
        %v2545 = vshrl.u32 %v2544, 7
        %v2546 = vsub.s32 0, %v2545
        %v2547 = vrot.slane %v2517, %v2546
        %v2548 = vadd.f32 %v2543, %v2547
        %v2549 = vsel %vm1397, %v2548, -inf
        %2550 = vmax.xlane.f32.xlu0 %v2549
        %v2551 = vpop.xlane.xlu0 %2550
        %v2552 = vsub.f32 %v2548, %v2551
        %v2553 = vmul.f32 %v2552, 1.442695
        %v2554 = vpow.pop %v2553
        %2556 = vrot.lane.b32.xlu0 %v2533, 64
        %v2557 = vpop.permute.xlu0 %2556
        %v2559 = vsel %vm1407, %v2533, 0
        %v2562 = vsel %vm1407, %v2557, 0
        %2564 = vmatprep.subr.bf16.mxu0 0
        %2565 = vmatpush1.bf16.xpose.msra.mxu0 %v2562
        %2566 = vmatprep.subr.bf16.mxu0 0
        %2567 = vmatpush1.bf16.xpose.msra.mxu0 0
        %2568 = vmatprep.subr.bf16.mxu0 0
        %2569 = vmatpush1.bf16.xpose.msra.mxu0 0
        %2570 = vmatprep.subr.bf16.mxu0 0
        %2571 = vmatpush1.bf16.xpose.msra.mxu0 0
        %2572 = vmatprep.subr.bf16.mxu0 0
        %2573 = vmatpush1.bf16.xpose.msra.mxu0 0
        %2574 = vmatprep.subr.bf16.mxu0 0
        %2575 = vmatpush1.bf16.xpose.msra.mxu0 0
        %2576 = vmatprep.subr.bf16.mxu0 0
        %2577 = vmatpush1.bf16.xpose.msra.mxu0 0
        %2578 = vmatprep.subr.bf16.mxu0 0
        %2579 = vmatpush1.bf16.xpose.msra.mxu0 0
        %2580 = vmatprep.subr.bf16.mxu0 0
        %2581 = vmatpush1.bf16.xpose.msra.mxu0 0
        %2582 = vmatprep.subr.bf16.mxu0 0
        %2583 = vmatpush1.bf16.xpose.msra.mxu0 0
        %2584 = vmatprep.subr.bf16.mxu0 0
        %2585 = vmatpush1.bf16.xpose.msra.mxu0 0
        %2586 = vmatprep.subr.bf16.mxu0 0
        %2587 = vmatpush1.bf16.xpose.msra.mxu0 0
        %2588 = vmatprep.subr.bf16.mxu0 0
        %2589 = vmatpush1.bf16.xpose.msra.mxu0 0
        %2590 = vmatprep.subr.bf16.mxu0 0
        %2591 = vmatpush1.bf16.xpose.msra.mxu0 0
        %2592 = vmatprep.subr.bf16.mxu0 0
        %2593 = vmatpush1.bf16.xpose.msra.mxu0 0
        %2594 = vmatprep.subr.bf16.mxu0 0
        %2595 = vmatpush1.bf16.xpose.msra.mxu0 0
        %2596 = vmatprep.mubr.bf16.mxu0 0
        %2597 = vmatmul.mubr.bf16.gmra.mrb[0].mxu0 %v2559
        %v2598 = vpop.f32.mrb[0].mxu0
        %v2599 = vadd.f32 0.0, %v2598
        %v2600 = vpop.f32.mrb[0].mxu0
        %v2601 = vpop.f32.mrb[0].mxu0
        %v2602 = vpop.f32.mrb[0].mxu0
        %2603 = vdwg.mxu0
        %v2604 = vmul.f32 %v2599, %v2554
        %v2605 = vsel %vm1407, %v2395, 1.0
        %v2606 = vpack.c.bf16 %v2605, %v2605
        %v2607 = vpack.c.bf16 %v2604, %v2604
        %v2609 = vsel %vm1397, %v2607, 0
        %v2612 = vsel %vm1461, %v2606, 0
        %2614 = vmatprep.subr.bf16.mxu0 0
        %2615 = vmatpush1.bf16.msra.mxu0 %v2612
        %2616 = vmatprep.subr.bf16.mxu0 0
        %2617 = vmatpush1.bf16.msra.mxu0 0
        %2618 = vmatprep.subr.bf16.mxu0 0
        %2619 = vmatpush1.bf16.msra.mxu0 0
        %2620 = vmatprep.subr.bf16.mxu0 0
        %2621 = vmatpush1.bf16.msra.mxu0 0
        %2622 = vmatprep.subr.bf16.mxu0 0
        %2623 = vmatpush1.bf16.msra.mxu0 0
        %2624 = vmatprep.subr.bf16.mxu0 0
        %2625 = vmatpush1.bf16.msra.mxu0 0
        %2626 = vmatprep.subr.bf16.mxu0 0
        %2627 = vmatpush1.bf16.msra.mxu0 0
        %2628 = vmatprep.subr.bf16.mxu0 0
        %2629 = vmatpush1.bf16.msra.mxu0 0
        %2630 = vmatprep.subr.bf16.mxu0 0
        %2631 = vmatpush1.bf16.msra.mxu0 0
        %2632 = vmatprep.subr.bf16.mxu0 0
        %2633 = vmatpush1.bf16.msra.mxu0 0
        %2634 = vmatprep.subr.bf16.mxu0 0
        %2635 = vmatpush1.bf16.msra.mxu0 0
        %2636 = vmatprep.subr.bf16.mxu0 0
        %2637 = vmatpush1.bf16.msra.mxu0 0
        %2638 = vmatprep.subr.bf16.mxu0 0
        %2639 = vmatpush1.bf16.msra.mxu0 0
        %2640 = vmatprep.subr.bf16.mxu0 0
        %2641 = vmatpush1.bf16.msra.mxu0 0
        %2642 = vmatprep.subr.bf16.mxu0 0
        %2643 = vmatpush1.bf16.msra.mxu0 0
        %2644 = vmatprep.subr.bf16.mxu0 0
        %2645 = vmatpush1.bf16.msra.mxu0 0
        %2646 = vmatprep.mubr.bf16.mxu0 0
        %2647 = vmatmul.mubr.bf16.gmra.mrb[0].mxu0 %v2609
        %v2648 = vpop.f32.mrb[0].mxu0
        %v2649 = vadd.f32 0.0, %v2648
        %v2650 = vpop.f32.mrb[0].mxu0
        %v2651 = vpop.f32.mrb[0].mxu0
        %v2652 = vpop.f32.mrb[0].mxu0
        %2653 = vdwg.mxu0
        %v2654 = vand.u32 2147483647, %v2649
        %v2655 = vsub.f32 0.0, %v2551
        %v2656 = vmul.f32 %v2655, 1.442695
        %v2657 = vpow.pop %v2656
        %v2658 = vmax.f32 %v2654, %v2657
        %v2659 = vadd.f32 %v2658, 1e-06
        %v2660 = vrcp.pop %v2659
        %2662 = vset.pattern.permute.xlu0 16
        %2663 = vperm.xlu0 %2662, %v2660
        %v2664 = vpop.permute.xlu0 %2663
        %v2666 = vmul.f32 %v2649, %v2664
        %v2667 = vsel %vm1407, %v2666, 0.0
        %2668 = vadd.xlane.f32.xlu0 %v2667
        %v2669 = vpop.xlane.xlu0 %2668
        %v2670 = vmul.f32 %v2669, %v1521
        %v2671 = vsub.f32 %v2666, %v2670
        %v2672 = vmul.f32 %v2671, %v2671
        %v2673 = vsel %vm1407, %v2672, 0.0
        %2674 = vadd.xlane.f32.xlu0 %v2673
        %v2675 = vpop.xlane.xlu0 %2674
        %v2676 = vmul.f32 %v2675, %v1521
        %v2677 = vadd.f32 %v2676, 1e-05
        %v2678 = vrsqrt.pop %v2677
        %v2679 = vmul.f32 %v2671, %v2678
        %2680 = vset.pattern.permute.xlu0 5
        %2681 = vperm.xlu0 %2680, %v2464
        %v2682 = vpop.permute.xlu0 %2681
        %v2684 = vlaneseq
        %v2685 = vshrl.u32 %v2684, 7
        %v2686 = vsub.s32 1, %v2685
        %v2687 = vrot.slane %v2485, %v2686
        %v2688 = vsub.f32 %v2682, %v2687
        %v2689 = vsel %vm926, %v2688, -inf
        %v2690 = vlaneseq
        %v2691 = vshrl.u32 %v2690, 7
        %v2692 = vsub.s32 1, %v2691
        %v2693 = vrot.slane %v2517, %v2692
        %v2694 = vadd.f32 %v2689, %v2693
        %v2695 = vsel %vm1397, %v2694, -inf
        %2696 = vmax.xlane.f32.xlu0 %v2695
        %v2697 = vpop.xlane.xlu0 %2696
        %v2698 = vsub.f32 %v2694, %v2697
        %v2699 = vmul.f32 %v2698, 1.442695
        %v2700 = vpow.pop %v2699
        %2701 = vrot.lane.b32.xlu0 %v2533, 112
        %v2702 = vpop.permute.xlu0 %2701
        %2703 = vrot.lane.b32.xlu0 %v2533, 48
        %v2704 = vpop.permute.xlu0 %2703
        %v2706 = vsel %vm1407, %v2702, 0
        %v2709 = vsel %vm1407, %v2704, 0
        %2711 = vmatprep.subr.bf16.mxu0 0
        %2712 = vmatpush1.bf16.xpose.msra.mxu0 %v2709
        %2713 = vmatprep.subr.bf16.mxu0 0
        %2714 = vmatpush1.bf16.xpose.msra.mxu0 0
        %2715 = vmatprep.subr.bf16.mxu0 0
        %2716 = vmatpush1.bf16.xpose.msra.mxu0 0
        %2717 = vmatprep.subr.bf16.mxu0 0
        %2718 = vmatpush1.bf16.xpose.msra.mxu0 0
        %2719 = vmatprep.subr.bf16.mxu0 0
        %2720 = vmatpush1.bf16.xpose.msra.mxu0 0
        %2721 = vmatprep.subr.bf16.mxu0 0
        %2722 = vmatpush1.bf16.xpose.msra.mxu0 0
        %2723 = vmatprep.subr.bf16.mxu0 0
        %2724 = vmatpush1.bf16.xpose.msra.mxu0 0
        %2725 = vmatprep.subr.bf16.mxu0 0
        %2726 = vmatpush1.bf16.xpose.msra.mxu0 0
        %2727 = vmatprep.subr.bf16.mxu0 0
        %2728 = vmatpush1.bf16.xpose.msra.mxu0 0
        %2729 = vmatprep.subr.bf16.mxu0 0
        %2730 = vmatpush1.bf16.xpose.msra.mxu0 0
        %2731 = vmatprep.subr.bf16.mxu0 0
        %2732 = vmatpush1.bf16.xpose.msra.mxu0 0
        %2733 = vmatprep.subr.bf16.mxu0 0
        %2734 = vmatpush1.bf16.xpose.msra.mxu0 0
        %2735 = vmatprep.subr.bf16.mxu0 0
        %2736 = vmatpush1.bf16.xpose.msra.mxu0 0
        %2737 = vmatprep.subr.bf16.mxu0 0
        %2738 = vmatpush1.bf16.xpose.msra.mxu0 0
        %2739 = vmatprep.subr.bf16.mxu0 0
        %2740 = vmatpush1.bf16.xpose.msra.mxu0 0
        %2741 = vmatprep.subr.bf16.mxu0 0
        %2742 = vmatpush1.bf16.xpose.msra.mxu0 0
        %2743 = vmatprep.mubr.bf16.mxu0 0
        %2744 = vmatmul.mubr.bf16.gmra.mrb[0].mxu0 %v2706
        %v2745 = vpop.f32.mrb[0].mxu0
        %v2746 = vadd.f32 0.0, %v2745
        %v2747 = vpop.f32.mrb[0].mxu0
        %v2748 = vpop.f32.mrb[0].mxu0
        %v2749 = vpop.f32.mrb[0].mxu0
        %2750 = vdwg.mxu0
        %v2751 = vmul.f32 %v2746, %v2700
        %2752 = vrot.lane.b32.xlu0 %v2395, 112
        %v2753 = vpop.permute.xlu0 %2752
        %v2755 = vsel %vm1407, %v2753, 1.0
        %v2756 = vpack.c.bf16 %v2755, %v2755
        %v2757 = vpack.c.bf16 %v2751, %v2751
        %v2759 = vsel %vm1397, %v2757, 0
        %v2762 = vsel %vm1461, %v2756, 0
        %2764 = vmatprep.subr.bf16.mxu0 0
        %2765 = vmatpush1.bf16.msra.mxu0 %v2762
        %2766 = vmatprep.subr.bf16.mxu0 0
        %2767 = vmatpush1.bf16.msra.mxu0 0
        %2768 = vmatprep.subr.bf16.mxu0 0
        %2769 = vmatpush1.bf16.msra.mxu0 0
        %2770 = vmatprep.subr.bf16.mxu0 0
        %2771 = vmatpush1.bf16.msra.mxu0 0
        %2772 = vmatprep.subr.bf16.mxu0 0
        %2773 = vmatpush1.bf16.msra.mxu0 0
        %2774 = vmatprep.subr.bf16.mxu0 0
        %2775 = vmatpush1.bf16.msra.mxu0 0
        %2776 = vmatprep.subr.bf16.mxu0 0
        %2777 = vmatpush1.bf16.msra.mxu0 0
        %2778 = vmatprep.subr.bf16.mxu0 0
        %2779 = vmatpush1.bf16.msra.mxu0 0
        %2780 = vmatprep.subr.bf16.mxu0 0
        %2781 = vmatpush1.bf16.msra.mxu0 0
        %2782 = vmatprep.subr.bf16.mxu0 0
        %2783 = vmatpush1.bf16.msra.mxu0 0
        %2784 = vmatprep.subr.bf16.mxu0 0
        %2785 = vmatpush1.bf16.msra.mxu0 0
        %2786 = vmatprep.subr.bf16.mxu0 0
        %2787 = vmatpush1.bf16.msra.mxu0 0
        %2788 = vmatprep.subr.bf16.mxu0 0
        %2789 = vmatpush1.bf16.msra.mxu0 0
        %2790 = vmatprep.subr.bf16.mxu0 0
        %2791 = vmatpush1.bf16.msra.mxu0 0
        %2792 = vmatprep.subr.bf16.mxu0 0
        %2793 = vmatpush1.bf16.msra.mxu0 0
        %2794 = vmatprep.subr.bf16.mxu0 0
        %2795 = vmatpush1.bf16.msra.mxu0 0
        %2796 = vmatprep.mubr.bf16.mxu0 0
        %2797 = vmatmul.mubr.bf16.gmra.mrb[0].mxu0 %v2759
        %v2798 = vpop.f32.mrb[0].mxu0
        %v2799 = vadd.f32 0.0, %v2798
        %v2800 = vpop.f32.mrb[0].mxu0
        %v2801 = vpop.f32.mrb[0].mxu0
        %v2802 = vpop.f32.mrb[0].mxu0
        %2803 = vdwg.mxu0
        %v2804 = vand.u32 2147483647, %v2799
        %v2805 = vsub.f32 0.0, %v2697
        %v2806 = vmul.f32 %v2805, 1.442695
        %v2807 = vpow.pop %v2806
        %v2808 = vmax.f32 %v2804, %v2807
        %v2809 = vadd.f32 %v2808, 1e-06
        %v2810 = vrcp.pop %v2809
        %2812 = vset.pattern.permute.xlu0 16
        %2813 = vperm.xlu0 %2812, %v2810
        %v2814 = vpop.permute.xlu0 %2813
        %v2816 = vmul.f32 %v2799, %v2814
        %v2817 = vsel %vm1407, %v2816, 0.0
        %2818 = vadd.xlane.f32.xlu0 %v2817
        %v2819 = vpop.xlane.xlu0 %2818
        %v2820 = vmul.f32 %v2819, %v1521
        %v2821 = vsub.f32 %v2816, %v2820
        %v2822 = vmul.f32 %v2821, %v2821
        %v2823 = vsel %vm1407, %v2822, 0.0
        %2824 = vadd.xlane.f32.xlu0 %v2823
        %v2825 = vpop.xlane.xlu0 %2824
        %v2826 = vmul.f32 %v2825, %v1521
        %v2827 = vadd.f32 %v2826, 1e-05
        %v2828 = vrsqrt.pop %v2827
        %v2829 = vmul.f32 %v2821, %v2828
        %2830 = vset.pattern.permute.xlu0 6
        %2831 = vperm.xlu0 %2830, %v2464
        %v2832 = vpop.permute.xlu0 %2831
        %v2834 = vlaneseq
        %v2835 = vshrl.u32 %v2834, 7
        %v2836 = vsub.s32 2, %v2835
        %v2837 = vrot.slane %v2485, %v2836
        %v2838 = vsub.f32 %v2832, %v2837
        %v2839 = vsel %vm926, %v2838, -inf
        %v2840 = vlaneseq
        %v2841 = vshrl.u32 %v2840, 7
        %v2842 = vsub.s32 2, %v2841
        %v2843 = vrot.slane %v2517, %v2842
        %v2844 = vadd.f32 %v2839, %v2843
        %v2845 = vsel %vm1397, %v2844, -inf
        %2846 = vmax.xlane.f32.xlu0 %v2845
        %v2847 = vpop.xlane.xlu0 %2846
        %v2848 = vsub.f32 %v2844, %v2847
        %v2849 = vmul.f32 %v2848, 1.442695
        %v2850 = vpow.pop %v2849
        %2851 = vrot.lane.b32.xlu0 %v2533, 96
        %v2852 = vpop.permute.xlu0 %2851
        %2853 = vrot.lane.b32.xlu0 %v2533, 32
        %v2854 = vpop.permute.xlu0 %2853
        %v2856 = vsel %vm1407, %v2852, 0
        %v2859 = vsel %vm1407, %v2854, 0
        %2861 = vmatprep.subr.bf16.mxu0 0
        %2862 = vmatpush1.bf16.xpose.msra.mxu0 %v2859
        %2863 = vmatprep.subr.bf16.mxu0 0
        %2864 = vmatpush1.bf16.xpose.msra.mxu0 0
        %2865 = vmatprep.subr.bf16.mxu0 0
        %2866 = vmatpush1.bf16.xpose.msra.mxu0 0
        %2867 = vmatprep.subr.bf16.mxu0 0
        %2868 = vmatpush1.bf16.xpose.msra.mxu0 0
        %2869 = vmatprep.subr.bf16.mxu0 0
        %2870 = vmatpush1.bf16.xpose.msra.mxu0 0
        %2871 = vmatprep.subr.bf16.mxu0 0
        %2872 = vmatpush1.bf16.xpose.msra.mxu0 0
        %2873 = vmatprep.subr.bf16.mxu0 0
        %2874 = vmatpush1.bf16.xpose.msra.mxu0 0
        %2875 = vmatprep.subr.bf16.mxu0 0
        %2876 = vmatpush1.bf16.xpose.msra.mxu0 0
        %2877 = vmatprep.subr.bf16.mxu0 0
        %2878 = vmatpush1.bf16.xpose.msra.mxu0 0
        %2879 = vmatprep.subr.bf16.mxu0 0
        %2880 = vmatpush1.bf16.xpose.msra.mxu0 0
        %2881 = vmatprep.subr.bf16.mxu0 0
        %2882 = vmatpush1.bf16.xpose.msra.mxu0 0
        %2883 = vmatprep.subr.bf16.mxu0 0
        %2884 = vmatpush1.bf16.xpose.msra.mxu0 0
        %2885 = vmatprep.subr.bf16.mxu0 0
        %2886 = vmatpush1.bf16.xpose.msra.mxu0 0
        %2887 = vmatprep.subr.bf16.mxu0 0
        %2888 = vmatpush1.bf16.xpose.msra.mxu0 0
        %2889 = vmatprep.subr.bf16.mxu0 0
        %2890 = vmatpush1.bf16.xpose.msra.mxu0 0
        %2891 = vmatprep.subr.bf16.mxu0 0
        %2892 = vmatpush1.bf16.xpose.msra.mxu0 0
        %2893 = vmatprep.mubr.bf16.mxu0 0
        %2894 = vmatmul.mubr.bf16.gmra.mrb[0].mxu0 %v2856
        %v2895 = vpop.f32.mrb[0].mxu0
        %v2896 = vadd.f32 0.0, %v2895
        %v2897 = vpop.f32.mrb[0].mxu0
        %v2898 = vpop.f32.mrb[0].mxu0
        %v2899 = vpop.f32.mrb[0].mxu0
        %2900 = vdwg.mxu0
        %v2901 = vmul.f32 %v2896, %v2850
        %2902 = vrot.lane.b32.xlu0 %v2395, 96
        %v2903 = vpop.permute.xlu0 %2902
        %v2905 = vsel %vm1407, %v2903, 1.0
        %v2906 = vpack.c.bf16 %v2905, %v2905
        %v2907 = vpack.c.bf16 %v2901, %v2901
        %v2909 = vsel %vm1397, %v2907, 0
        %v2912 = vsel %vm1461, %v2906, 0
        %2914 = vmatprep.subr.bf16.mxu0 0
        %2915 = vmatpush1.bf16.msra.mxu0 %v2912
        %2916 = vmatprep.subr.bf16.mxu0 0
        %2917 = vmatpush1.bf16.msra.mxu0 0
        %2918 = vmatprep.subr.bf16.mxu0 0
        %2919 = vmatpush1.bf16.msra.mxu0 0
        %2920 = vmatprep.subr.bf16.mxu0 0
        %2921 = vmatpush1.bf16.msra.mxu0 0
        %2922 = vmatprep.subr.bf16.mxu0 0
        %2923 = vmatpush1.bf16.msra.mxu0 0
        %2924 = vmatprep.subr.bf16.mxu0 0
        %2925 = vmatpush1.bf16.msra.mxu0 0
        %2926 = vmatprep.subr.bf16.mxu0 0
        %2927 = vmatpush1.bf16.msra.mxu0 0
        %2928 = vmatprep.subr.bf16.mxu0 0
        %2929 = vmatpush1.bf16.msra.mxu0 0
        %2930 = vmatprep.subr.bf16.mxu0 0
        %2931 = vmatpush1.bf16.msra.mxu0 0
        %2932 = vmatprep.subr.bf16.mxu0 0
        %2933 = vmatpush1.bf16.msra.mxu0 0
        %2934 = vmatprep.subr.bf16.mxu0 0
        %2935 = vmatpush1.bf16.msra.mxu0 0
        %2936 = vmatprep.subr.bf16.mxu0 0
        %2937 = vmatpush1.bf16.msra.mxu0 0
        %2938 = vmatprep.subr.bf16.mxu0 0
        %2939 = vmatpush1.bf16.msra.mxu0 0
        %2940 = vmatprep.subr.bf16.mxu0 0
        %2941 = vmatpush1.bf16.msra.mxu0 0
        %2942 = vmatprep.subr.bf16.mxu0 0
        %2943 = vmatpush1.bf16.msra.mxu0 0
        %2944 = vmatprep.subr.bf16.mxu0 0
        %2945 = vmatpush1.bf16.msra.mxu0 0
        %2946 = vmatprep.mubr.bf16.mxu0 0
        %2947 = vmatmul.mubr.bf16.gmra.mrb[0].mxu0 %v2909
        %v2948 = vpop.f32.mrb[0].mxu0
        %v2949 = vadd.f32 0.0, %v2948
        %v2950 = vpop.f32.mrb[0].mxu0
        %v2951 = vpop.f32.mrb[0].mxu0
        %v2952 = vpop.f32.mrb[0].mxu0
        %2953 = vdwg.mxu0
        %v2954 = vand.u32 2147483647, %v2949
        %v2955 = vsub.f32 0.0, %v2847
        %v2956 = vmul.f32 %v2955, 1.442695
        %v2957 = vpow.pop %v2956
        %v2958 = vmax.f32 %v2954, %v2957
        %v2959 = vadd.f32 %v2958, 1e-06
        %v2960 = vrcp.pop %v2959
        %2962 = vset.pattern.permute.xlu0 16
        %2963 = vperm.xlu0 %2962, %v2960
        %v2964 = vpop.permute.xlu0 %2963
        %v2966 = vmul.f32 %v2949, %v2964
        %v2967 = vsel %vm1407, %v2966, 0.0
        %2968 = vadd.xlane.f32.xlu0 %v2967
        %v2969 = vpop.xlane.xlu0 %2968
        %v2970 = vmul.f32 %v2969, %v1521
        %v2971 = vsub.f32 %v2966, %v2970
        %v2972 = vmul.f32 %v2971, %v2971
        %v2973 = vsel %vm1407, %v2972, 0.0
        %2974 = vadd.xlane.f32.xlu0 %v2973
        %v2975 = vpop.xlane.xlu0 %2974
        %v2976 = vmul.f32 %v2975, %v1521
        %v2977 = vadd.f32 %v2976, 1e-05
        %v2978 = vrsqrt.pop %v2977
        %v2979 = vmul.f32 %v2971, %v2978
        %2980 = vset.pattern.permute.xlu0 7
        %2981 = vperm.xlu0 %2980, %v2464
        %v2982 = vpop.permute.xlu0 %2981
        %v2984 = vlaneseq
        %v2985 = vshrl.u32 %v2984, 7
        %v2986 = vsub.s32 3, %v2985
        %v2987 = vrot.slane %v2485, %v2986
        %v2988 = vsub.f32 %v2982, %v2987
        %v2989 = vsel %vm926, %v2988, -inf
        %v2990 = vlaneseq
        %v2991 = vshrl.u32 %v2990, 7
        %v2992 = vsub.s32 3, %v2991
        %v2993 = vrot.slane %v2517, %v2992
        %v2994 = vadd.f32 %v2989, %v2993
        %v2995 = vsel %vm1397, %v2994, -inf
        %2996 = vmax.xlane.f32.xlu0 %v2995
        %v2997 = vpop.xlane.xlu0 %2996
        %v2998 = vsub.f32 %v2994, %v2997
        %v2999 = vmul.f32 %v2998, 1.442695
        %v3000 = vpow.pop %v2999
        %3001 = vrot.lane.b32.xlu0 %v2533, 80
        %v3002 = vpop.permute.xlu0 %3001
        %3003 = vrot.lane.b32.xlu0 %v2533, 16
        %v3004 = vpop.permute.xlu0 %3003
        %v3006 = vsel %vm1407, %v3002, 0
        %v3009 = vsel %vm1407, %v3004, 0
        %3011 = vmatprep.subr.bf16.mxu0 0
        %3012 = vmatpush1.bf16.xpose.msra.mxu0 %v3009
        %3013 = vmatprep.subr.bf16.mxu0 0
        %3014 = vmatpush1.bf16.xpose.msra.mxu0 0
        %3015 = vmatprep.subr.bf16.mxu0 0
        %3016 = vmatpush1.bf16.xpose.msra.mxu0 0
        %3017 = vmatprep.subr.bf16.mxu0 0
        %3018 = vmatpush1.bf16.xpose.msra.mxu0 0
        %3019 = vmatprep.subr.bf16.mxu0 0
        %3020 = vmatpush1.bf16.xpose.msra.mxu0 0
        %3021 = vmatprep.subr.bf16.mxu0 0
        %3022 = vmatpush1.bf16.xpose.msra.mxu0 0
        %3023 = vmatprep.subr.bf16.mxu0 0
        %3024 = vmatpush1.bf16.xpose.msra.mxu0 0
        %3025 = vmatprep.subr.bf16.mxu0 0
        %3026 = vmatpush1.bf16.xpose.msra.mxu0 0
        %3027 = vmatprep.subr.bf16.mxu0 0
        %3028 = vmatpush1.bf16.xpose.msra.mxu0 0
        %3029 = vmatprep.subr.bf16.mxu0 0
        %3030 = vmatpush1.bf16.xpose.msra.mxu0 0
        %3031 = vmatprep.subr.bf16.mxu0 0
        %3032 = vmatpush1.bf16.xpose.msra.mxu0 0
        %3033 = vmatprep.subr.bf16.mxu0 0
        %3034 = vmatpush1.bf16.xpose.msra.mxu0 0
        %3035 = vmatprep.subr.bf16.mxu0 0
        %3036 = vmatpush1.bf16.xpose.msra.mxu0 0
        %3037 = vmatprep.subr.bf16.mxu0 0
        %3038 = vmatpush1.bf16.xpose.msra.mxu0 0
        %3039 = vmatprep.subr.bf16.mxu0 0
        %3040 = vmatpush1.bf16.xpose.msra.mxu0 0
        %3041 = vmatprep.subr.bf16.mxu0 0
        %3042 = vmatpush1.bf16.xpose.msra.mxu0 0
        %3043 = vmatprep.mubr.bf16.mxu0 0
        %3044 = vmatmul.mubr.bf16.gmra.mrb[0].mxu0 %v3006
        %v3045 = vpop.f32.mrb[0].mxu0
        %v3046 = vadd.f32 0.0, %v3045
        %v3047 = vpop.f32.mrb[0].mxu0
        %v3048 = vpop.f32.mrb[0].mxu0
        %v3049 = vpop.f32.mrb[0].mxu0
        %3050 = vdwg.mxu0
        %v3051 = vmul.f32 %v3046, %v3000
        %3052 = vrot.lane.b32.xlu0 %v2395, 80
        %v3053 = vpop.permute.xlu0 %3052
        %v3055 = vsel %vm1407, %v3053, 1.0
        %v3056 = vpack.c.bf16 %v3055, %v3055
        %v3057 = vpack.c.bf16 %v3051, %v3051
        %v3059 = vsel %vm1397, %v3057, 0
        %v3062 = vsel %vm1461, %v3056, 0
        %3064 = vmatprep.subr.bf16.mxu0 0
        %3065 = vmatpush1.bf16.msra.mxu0 %v3062
        %3066 = vmatprep.subr.bf16.mxu0 0
        %3067 = vmatpush1.bf16.msra.mxu0 0
        %3068 = vmatprep.subr.bf16.mxu0 0
        %3069 = vmatpush1.bf16.msra.mxu0 0
        %3070 = vmatprep.subr.bf16.mxu0 0
        %3071 = vmatpush1.bf16.msra.mxu0 0
        %3072 = vmatprep.subr.bf16.mxu0 0
        %3073 = vmatpush1.bf16.msra.mxu0 0
        %3074 = vmatprep.subr.bf16.mxu0 0
        %3075 = vmatpush1.bf16.msra.mxu0 0
        %3076 = vmatprep.subr.bf16.mxu0 0
        %3077 = vmatpush1.bf16.msra.mxu0 0
        %3078 = vmatprep.subr.bf16.mxu0 0
        %3079 = vmatpush1.bf16.msra.mxu0 0
        %3080 = vmatprep.subr.bf16.mxu0 0
        %3081 = vmatpush1.bf16.msra.mxu0 0
        %3082 = vmatprep.subr.bf16.mxu0 0
        %3083 = vmatpush1.bf16.msra.mxu0 0
        %3084 = vmatprep.subr.bf16.mxu0 0
        %3085 = vmatpush1.bf16.msra.mxu0 0
        %3086 = vmatprep.subr.bf16.mxu0 0
        %3087 = vmatpush1.bf16.msra.mxu0 0
        %3088 = vmatprep.subr.bf16.mxu0 0
        %3089 = vmatpush1.bf16.msra.mxu0 0
        %3090 = vmatprep.subr.bf16.mxu0 0
        %3091 = vmatpush1.bf16.msra.mxu0 0
        %3092 = vmatprep.subr.bf16.mxu0 0
        %3093 = vmatpush1.bf16.msra.mxu0 0
        %3094 = vmatprep.subr.bf16.mxu0 0
        %3095 = vmatpush1.bf16.msra.mxu0 0
        %3096 = vmatprep.mubr.bf16.mxu0 0
        %3097 = vmatmul.mubr.bf16.gmra.mrb[0].mxu0 %v3059
        %v3098 = vpop.f32.mrb[0].mxu0
        %v3099 = vadd.f32 0.0, %v3098
        %v3100 = vpop.f32.mrb[0].mxu0
        %v3101 = vpop.f32.mrb[0].mxu0
        %v3102 = vpop.f32.mrb[0].mxu0
        %3103 = vdwg.mxu0
        %v3104 = vand.u32 2147483647, %v3099
        %v3105 = vsub.f32 0.0, %v2997
        %v3106 = vmul.f32 %v3105, 1.442695
        %v3107 = vpow.pop %v3106
        %v3108 = vmax.f32 %v3104, %v3107
        %v3109 = vadd.f32 %v3108, 1e-06
        %v3110 = vrcp.pop %v3109
        %3112 = vset.pattern.permute.xlu0 16
        %3113 = vperm.xlu0 %3112, %v3110
        %v3114 = vpop.permute.xlu0 %3113
        %v3116 = vmul.f32 %v3099, %v3114
        %v3117 = vsel %vm1407, %v3116, 0.0
        %3118 = vadd.xlane.f32.xlu0 %v3117
        %v3119 = vpop.xlane.xlu0 %3118
        %v3120 = vmul.f32 %v3119, %v1521
        %v3121 = vsub.f32 %v3116, %v3120
        %v3122 = vmul.f32 %v3121, %v3121
        %v3123 = vsel %vm1407, %v3122, 0.0
        %3124 = vadd.xlane.f32.xlu0 %v3123
        %v3125 = vpop.xlane.xlu0 %3124
        %v3126 = vmul.f32 %v3125, %v1521
        %v3127 = vadd.f32 %v3126, 1e-05
        %v3128 = vrsqrt.pop %v3127
        %v3129 = vmul.f32 %v3121, %v3128
        %3131 = vrot.lane.b32.xlu0 %v2829, 16
        %v3132 = vpop.permute.xlu0 %3131
        %3135 = vrot.lane.b32.xlu0 %v2979, 32
        %v3136 = vpop.permute.xlu0 %3135
        %3139 = vrot.lane.b32.xlu0 %v3129, 48
        %v3140 = vpop.permute.xlu0 %3139
        %v3142 = vsel %vm1407, %v2679, %v3132
        %v3143 = vsel %vm961, %v3142, %v3136
        %v3144 = vsel %vm1996, %v3143, %v3140
        %v3146 = vlaneseq
        %v3147 = vshrl.u32 %v3146, 7
        %v3148 = vsub.s32 0, %v3147
        %v3149 = vrot.slane %v2118, %v3148
        %v3151 = vmul.f32 %v3144, %v3149
        %v3153 = vlaneseq
        %v3154 = vshrl.u32 %v3153, 7
        %v3155 = vsub.s32 0, %v3154
        %v3156 = vrot.slane %v2119, %v3155
        %v3158 = vmul.f32 %v3156, %v2246
        %v3159 = vadd.f32 %v3151, %v3158
        %v3160 = vxor.u32 %v2199, 2147483648
        %v3161 = vmul.f32 %v3160, 1.442695
        %v3162 = vpow.pop %v3161
        %v3163 = vadd.f32 %v3162, 1.0
        %v3164 = vrcp.pop %v3163
        %v3165 = vmul.f32 1.0, %v3164
        %v3166 = vmul.f32 %v2199, %v3165
        %3168 = vrot.lane.b32.xlu0 %v3166, 64
        %v3169 = vpop.permute.xlu0 %3168
        %v3171 = vmul.f32 %v3159, %v3169
        %v3172 = vpack.c.bf16 %v3171, %v3171
        %v3181 = vunpack.c.l.b16 %v2120
        %v3182 = vunpack.c.l.b16 %v2121
        %v3183 = vunpack.c.l.b16 %v2122
        %v3184 = vunpack.c.l.b16 %v2123
        %v3185 = vunpack.c.l.b16 %v2124
        %v3186 = vunpack.c.l.b16 %v2125
        %v3187 = vunpack.c.l.b16 %v2126
        %v3188 = vunpack.c.l.b16 %v2127
        %v3189 = vpack.c.b16 %v3182, %v3181
        %v3190 = vpack.c.b16 %v3184, %v3183
        %v3191 = vpack.c.b16 %v3186, %v3185
        %v3192 = vpack.c.b16 %v3188, %v3187
        %v3198 = vsel %vm1132, %v3172, 0
        %3200 = vmatprep.subr.bf16.mxu0 0
        %3201 = vmatpush1.bf16.msra.mxu0 %v3189
        %3202 = vmatprep.subr.bf16.mxu0 0
        %3203 = vmatpush1.bf16.msra.mxu0 %v3190
        %3204 = vmatprep.subr.bf16.mxu0 0
        %3205 = vmatpush1.bf16.msra.mxu0 %v3191
        %3206 = vmatprep.subr.bf16.mxu0 0
        %3207 = vmatpush1.bf16.msra.mxu0 %v3192
        %3208 = vmatprep.subr.bf16.mxu0 0
        %3209 = vmatpush1.bf16.msra.mxu0 0
        %3210 = vmatprep.subr.bf16.mxu0 0
        %3211 = vmatpush1.bf16.msra.mxu0 0
        %3212 = vmatprep.subr.bf16.mxu0 0
        %3213 = vmatpush1.bf16.msra.mxu0 0
        %3214 = vmatprep.subr.bf16.mxu0 0
        %3215 = vmatpush1.bf16.msra.mxu0 0
        %3216 = vmatprep.subr.bf16.mxu0 0
        %3217 = vmatpush1.bf16.msra.mxu0 0
        %3218 = vmatprep.subr.bf16.mxu0 0
        %3219 = vmatpush1.bf16.msra.mxu0 0
        %3220 = vmatprep.subr.bf16.mxu0 0
        %3221 = vmatpush1.bf16.msra.mxu0 0
        %3222 = vmatprep.subr.bf16.mxu0 0
        %3223 = vmatpush1.bf16.msra.mxu0 0
        %3224 = vmatprep.subr.bf16.mxu0 0
        %3225 = vmatpush1.bf16.msra.mxu0 0
        %3226 = vmatprep.subr.bf16.mxu0 0
        %3227 = vmatpush1.bf16.msra.mxu0 0
        %3228 = vmatprep.subr.bf16.mxu0 0
        %3229 = vmatpush1.bf16.msra.mxu0 0
        %3230 = vmatprep.subr.bf16.mxu0 0
        %3231 = vmatpush1.bf16.msra.mxu0 0
        %3232 = vmatprep.mubr.bf16.mxu0 0
        %3233 = vmatmul.mubr.bf16.gmra.mrb[0].mxu0 %v3198
        %v3234 = vpop.f32.mrb[0].mxu0
        %v3235 = vadd.f32 0.0, %v3234
        %v3236 = vpop.f32.mrb[0].mxu0
        %v3237 = vpop.f32.mrb[0].mxu0
        %v3238 = vpop.f32.mrb[0].mxu0
        %3239 = vdwg.mxu0
        %v3240 = vadd.f32 %v2093, %v3235
        %v3241 = vld [vmem:[%s21] sm:$0x1]
        %v3242 = vsel %vm961, %v3240, 0.0
        %3243 = vadd.xlane.f32.xlu0 %v3242
        %v3244 = vpop.xlane.xlu0 %3243
        %v3245 = vmul.f32 %v3244, %v965
        %v3246 = vsub.f32 %v3240, %v3245
        %v3247 = vmul.f32 %v3246, %v3246
        %v3248 = vsel %vm961, %v3247, 0.0
        %3249 = vadd.xlane.f32.xlu0 %v3248
        %v3250 = vpop.xlane.xlu0 %3249
        %v3251 = vmul.f32 %v3250, %v965
        %v3252 = vadd.f32 %v3251, 1e-05
        %v3253 = vrsqrt.pop %v3252
        %v3254 = vmul.f32 %v3246, %v3253
        %v3256 = vlaneseq
        %v3257 = vshrl.u32 %v3256, 7
        %v3258 = vsub.s32 0, %v3257
        %v3259 = vrot.slane %v3241, %v3258
        %v3261 = vmul.f32 %v3254, %v3259
        %v3262 = vpack.c.bf16 %v3261, %v3261
        %v3263 = vld [vmem:[%s22] sm:$0xf]
        %v3264 = vld [vmem:[%s22 + $0x4] sm:$0xf]
        %v3265 = vld [vmem:[%s22 + $0x8] sm:$0xf]
        %v3266 = vld [vmem:[%s22 + $0xc] sm:$0xf]
        %v3267 = vld [vmem:[%s23] sm:$0x1]
        %v3269 = vlaneseq
        %v3270 = vshrl.u32 %v3269, 7
        %v3271 = vsub.s32 0, %v3270
        %v3272 = vrot.slane %v3267, %v3271
        %v3278 = vunpack.c.l.b16 %v3263
        %v3279 = vunpack.c.l.b16 %v3264
        %v3280 = vunpack.c.l.b16 %v3265
        %v3281 = vunpack.c.l.b16 %v3266
        %v3282 = vpack.c.b16 %v3279, %v3278
        %v3283 = vpack.c.b16 %v3281, %v3280
        %v3287 = vsel %vm961, %v3262, 0
        %3289 = vmatprep.subr.bf16.mxu0 0
        %3290 = vmatpush1.bf16.msra.mxu0 %v3282
        %3291 = vmatprep.subr.bf16.mxu0 0
        %3292 = vmatpush1.bf16.msra.mxu0 %v3283
        %3293 = vmatprep.subr.bf16.mxu0 0
        %3294 = vmatpush1.bf16.msra.mxu0 0
        %3295 = vmatprep.subr.bf16.mxu0 0
        %3296 = vmatpush1.bf16.msra.mxu0 0
        %3297 = vmatprep.subr.bf16.mxu0 0
        %3298 = vmatpush1.bf16.msra.mxu0 0
        %3299 = vmatprep.subr.bf16.mxu0 0
        %3300 = vmatpush1.bf16.msra.mxu0 0
        %3301 = vmatprep.subr.bf16.mxu0 0
        %3302 = vmatpush1.bf16.msra.mxu0 0
        %3303 = vmatprep.subr.bf16.mxu0 0
        %3304 = vmatpush1.bf16.msra.mxu0 0
        %3305 = vmatprep.subr.bf16.mxu0 0
        %3306 = vmatpush1.bf16.msra.mxu0 0
        %3307 = vmatprep.subr.bf16.mxu0 0
        %3308 = vmatpush1.bf16.msra.mxu0 0
        %3309 = vmatprep.subr.bf16.mxu0 0
        %3310 = vmatpush1.bf16.msra.mxu0 0
        %3311 = vmatprep.subr.bf16.mxu0 0
        %3312 = vmatpush1.bf16.msra.mxu0 0
        %3313 = vmatprep.subr.bf16.mxu0 0
        %3314 = vmatpush1.bf16.msra.mxu0 0
        %3315 = vmatprep.subr.bf16.mxu0 0
        %3316 = vmatpush1.bf16.msra.mxu0 0
        %3317 = vmatprep.subr.bf16.mxu0 0
        %3318 = vmatpush1.bf16.msra.mxu0 0
        %3319 = vmatprep.subr.bf16.mxu0 0
        %3320 = vmatpush1.bf16.msra.mxu0 0
        %3321 = vmatprep.mubr.bf16.mxu0 0
        %3322 = vmatmul.mubr.bf16.gmra.mrb[0].mxu0 %v3287
        %v3323 = vpop.f32.mrb[0].mxu0
        %v3324 = vadd.f32 %v3272, %v3323
        %v3325 = vpop.f32.mrb[0].mxu0
        %v3326 = vpop.f32.mrb[0].mxu0
        %v3327 = vpop.f32.mrb[0].mxu0
        %3328 = vdwg.mxu0
        %3329 = vst.msk [vmem:[%s919] sm:$0xff] %vm1407, %v3324
        %s3330 = sand.u32 %s565, 1
        %s3331 = scalar_lea.sflag [#allocation4], %s3330
        %s3332 = sand.u32 %s565, 1
        %s3333 = smul.addr %s3332, 8
        %s3334 = scalar_lea.vmem [#allocation25], %s3333
        // Predicated region
        $region173: #{double_xlstm_down.1} parent=115 // pred_check
          %p3335 = pneg %p575
        $region174: #{double_xlstm_down.1} parent=115 // pred_check_branch
          %3337 = sbr.rel (%p3335) target = $region176
        $region175: #{double_xlstm_down.1} parent=115 // pred_region
          %s3339 = ssub.s32 128, 128
          %3340 = vsyncadd %s3331, %s3339
          %s3341 = smul.addr %s48, 128
          %s3342 = scalar_lea.hbm %s24, %s3341
          %s3344 = sshll.u32 %s3334, 4
          %s3345 = int_to_ptr.vmem [resolvable:$true] %s3344
          %3347 = dma.vmem_to_hbm [thread:$0]  %s3345, 128, %s3342, %s3331
        $region176: #{double_xlstm_down.1} parent=115 // pred_fallthru
          _
      $region116: #{double_xlstm_down.1} parent=5 // pred_fallthru
        _
      %p3348 = scmp.le.s32.totalorder 2, %s43
      // Predicated region
      $region177: #{double_xlstm_down.1} parent=5 // pred_check
        %p3349 = pneg %p3348
      $region178: #{double_xlstm_down.1} parent=5 // pred_check_branch
        %3351 = sbr.rel (%p3349) target = $region180
      $region179: #{double_xlstm_down.1} parent=5 // pred_region
        %s3352 = ssub.s32 %s43, 2
        // Predicated region
        $region181: #{double_xlstm_down.1} parent=179 // pred_check
          %p3353 = pneg %p581
        $region182: #{double_xlstm_down.1} parent=179 // pred_check_branch
          %3355 = sbr.rel (%p3353) target = $region184
        $region183: #{double_xlstm_down.1} parent=179 // pred_region
          %s3356 = sand.u32 %s566, 1
          %s3357 = scalar_lea.sflag [#allocation4], %s3356
          %s3358 = sand.u32 %s566, 1
          %s3359 = smul.addr %s3358, 8
          %s3360 = scalar_lea.vmem [#allocation25], %s3359
          %3361 = dma.done %s3357, 128
        $region184: #{double_xlstm_down.1} parent=179 // pred_fallthru
          _
      $region180: #{double_xlstm_down.1} parent=5 // pred_fallthru
        _
    $region6: #{double_xlstm_down.1} parent=1 // loop_footer
      %s47 = sadd.s32 1, %s43
    $region7: #{double_xlstm_down.1} parent=1 // loop_footer_branch
      %42 = sbr.rel target = $region3
    $region8: #{double_xlstm_down.1} parent=1 // loop_exit
      _
    %3362 = vsyncpa [#allocation3], 1
    %s3363 = scalar_lea.sflag [#allocation3], 1
    %3364 = vsyncpa %s3363, 1
    %3365 = vsyncpa [#allocation6], 1
    %3366 = vsyncpa [#allocation9], 1
    %3367 = vsyncpa [#allocation12], 1
    %3368 = vsyncpa [#allocation15], 1
    %3369 = vsyncpa [#allocation18], 1
    %3370 = vsyncpa [#allocation21], 1
    %3371 = vsyncpa [#allocation24], 1
    %3372 = vsyncpa [#allocation4], 1
    %s3373 = scalar_lea.sflag [#allocation4], 1
    %3374 = vsyncpa %s3373, 1

</llo_original>
